<compile_context>
chip_gen: v7x
topology: tpu7x:2x2x1
jax: 0.10.0
libtpu: 0.0.40
codegen_flags: <defaults>
</compile_context>

<pallas_src>
import jax
import jax.numpy as jnp
from jax.experimental import pallas as pl
from jax.experimental.pallas import tpu as pltpu

CNN_K = 5      # conv kernel size (from the module)
POOL = 2       # max-pool window (from the module)
LANE = 128     # TPU lane width


# ----------------------- one-time weight transforms ------------------------ #

def _make_conv_pool_T(w, wact, wp):
    """Banded conv weights with the 2x2-pool *column* phase folded in.

    w: (Cout, Cin, K, K).  The stage's activation is laid out as
    (H, Cin*wact) with column index ci*wact + m.  Returns T of shape
    (2, K, Cin*wact, Cout*wp) with
        T[pj, dh, ci*wact + m, co*wp + q] = w[co, ci, dh, m - (2*q + pj)]
    (zero outside 0 <= m-(2q+pj) < K), so that
        sum_dh  act[dh:dh+Hc, :] @ T[pj, dh]
    is the valid conv output restricted to pool column phase pj.
    """
    cout, cin, kk, _ = w.shape
    m = jnp.arange(wact)
    q = jnp.arange(wp)
    wt = jnp.transpose(w, (2, 1, 0, 3))                    # (K, Cin, Cout, K)
    phases = []
    for pj in range(POOL):
        dw = m[:, None] - (POOL * q[None, :] + pj)         # (wact, wp)
        valid = (dw >= 0) & (dw < kk)
        dwc = jnp.clip(dw, 0, kk - 1)
        g = wt[:, :, :, dwc]                               # (K, Cin, Cout, wact, wp)
        g = jnp.where(valid[None, None, None], g, 0.0)
        g = jnp.transpose(g, (0, 1, 3, 2, 4))              # (K, Cin, wact, Cout, wp)
        phases.append(g.reshape(kk, cin * wact, cout * wp))
    return jnp.stack(phases, axis=0)


def _make_row_select(hc, hp):
    """(2, hp, hc) selection matrices; R[pi] @ y picks rows 2*r + pi of y."""
    r = jnp.arange(hp)
    c = jnp.arange(hc)
    mats = [(c[None, :] == POOL * r[:, None] + pi).astype(jnp.float32)
            for pi in range(POOL)]
    return jnp.stack(mats, axis=0)


def prepare_params(params, image_height, image_width):
    """One-time transform of the module parameters into kernel operands."""
    c2 = params["conv2_w"].shape[0]
    hc1, wc1 = image_height - CNN_K + 1, image_width - CNN_K + 1
    hp1, wp1 = hc1 // POOL, wc1 // POOL
    hc2, wc2 = hp1 - CNN_K + 1, wp1 - CNN_K + 1
    hp2, wp2 = hc2 // POOL, wc2 // POOL

    f1 = params["fc1_w"].shape[1]
    assert params["fc1_w"].shape[0] == c2 * hp2 * wp2, (
        "fc1 input features do not match the conv output size")

    # conv stages: banded conv weights, pool row-selection matrices, and
    # per-channel bias rows matching the (co*wp + q) column layout.
    t1 = _make_conv_pool_T(params["conv1_w"], image_width, wp1)
    t2 = _make_conv_pool_T(params["conv2_w"], wp1, wp2)
    r1 = _make_row_select(hc1, hp1)
    r2 = _make_row_select(hc2, hp2)
    bc1 = jnp.repeat(params["conv1_b"], wp1)[None, :]
    bc2 = jnp.repeat(params["conv2_b"], wp2)[None, :]

    # fc1: permute rows from the NCHW flatten order (c,h,w) into the kernel's
    # (h, c, w) activation layout, grouped per activation row h.
    w1p = (params["fc1_w"].reshape(c2, hp2, wp2, f1)
           .transpose(1, 0, 2, 3).reshape(hp2, c2 * wp2, f1))
    b1 = params["fc1_b"].reshape(1, f1)

    # fc2: pad the class dim to a lane-dense multiple of 128 for the store.
    nc = params["fc2_w"].shape[1]
    outp = ((nc + LANE - 1) // LANE) * LANE
    w2p = jnp.pad(params["fc2_w"], ((0, 0), (0, outp - nc)))
    b2p = jnp.pad(params["fc2_b"].reshape(1, nc), ((0, 0), (0, outp - nc)))

    return dict(t1=t1, r1=r1, bc1=bc1, t2=t2, r2=r2, bc2=bc2,
                w1p=w1p, b1=b1, w2p=w2p, b2p=b2p)


# --------------------------- fused forward kernel --------------------------- #

def lenet_forward(ops, x):
    """x: (B, 1, H, W) f32 -> (B, 128) lane-padded logits (slice to classes)."""
    x = x.astype(jnp.float32)
    bsz, _, h, w = x.shape
    t1, r1, bc1 = ops["t1"], ops["r1"], ops["bc1"]
    t2, r2, bc2 = ops["t2"], ops["r2"], ops["bc2"]
    w1p, b1, w2p, b2p = ops["w1p"], ops["b1"], ops["w2p"], ops["b2p"]
    kk = t1.shape[1]
    hc1 = r1.shape[2]
    hp2, hc2 = r2.shape[1], r2.shape[2]
    outp = w2p.shape[1]

    def kernel(x_ref, t1_ref, r1_ref, bc1_ref, t2_ref, r2_ref, bc2_ref,
               w1_ref, b1_ref, w2_ref, b2_ref, o_ref):

        def conv_relu_pool(act, t_ref, r_ref, b_ref, hc):
            # valid KxK conv = K shifted row-slices x banded weights, one
            # matmul chain per 2x2-pool column phase; the row phase is a tiny
            # selection-matrix matmul.  bias + ReLU after the max (monotone:
            # pool(relu(y+b)) == relu(pool(y)+b)).
            phases = []
            for pj in range(POOL):
                acc = jnp.dot(act[0:hc, :], t_ref[pj, 0],
                              preferred_element_type=jnp.float32)
                for dh in range(1, kk):
                    acc = acc + jnp.dot(act[dh:dh + hc, :], t_ref[pj, dh],
                                        preferred_element_type=jnp.float32)
                phases.append(acc)
            ymax = jnp.maximum(phases[0], phases[1])          # (hc, Cout*wp)
            pooled = jnp.maximum(
                jnp.dot(r_ref[0], ymax, preferred_element_type=jnp.float32),
                jnp.dot(r_ref[1], ymax, preferred_element_type=jnp.float32))
            return jnp.maximum(pooled + b_ref[...], 0.0)      # (hp, Cout*wp)

        z1 = conv_relu_pool(x_ref[...], t1_ref, r1_ref, bc1_ref, hc1)
        z2 = conv_relu_pool(z1, t2_ref, r2_ref, bc2_ref, hc2)

        # fc1 over the (hp2, c2*wp2) activation: sum of per-row matmuls (the
        # fc1 weight was pre-permuted into this layout), ReLU, then fc2.
        hacc = jnp.dot(z2[0:1, :], w1_ref[0],
                       preferred_element_type=jnp.float32)
        for r in range(1, hp2):
            hacc = hacc + jnp.dot(z2[r:r + 1, :], w1_ref[r],
                                  preferred_element_type=jnp.float32)
        hid = jnp.maximum(hacc + b1_ref[...], 0.0)            # (1, 128)
        o_ref[...] = (jnp.dot(hid, w2_ref[...],
                              preferred_element_type=jnp.float32)
                      + b2_ref[...])

    out = pl.pallas_call(
        kernel,
        out_shape=jax.ShapeDtypeStruct((bsz, 1, outp), jnp.float32),
        grid=(bsz,),
        in_specs=[
            pl.BlockSpec((None, None, h, w), lambda b: (b, 0, 0, 0)),
            pl.BlockSpec(t1.shape, lambda b: (0, 0, 0, 0)),
            pl.BlockSpec(r1.shape, lambda b: (0, 0, 0)),
            pl.BlockSpec(bc1.shape, lambda b: (0, 0)),
            pl.BlockSpec(t2.shape, lambda b: (0, 0, 0, 0)),
            pl.BlockSpec(r2.shape, lambda b: (0, 0, 0)),
            pl.BlockSpec(bc2.shape, lambda b: (0, 0)),
            pl.BlockSpec(w1p.shape, lambda b: (0, 0, 0)),
            pl.BlockSpec(b1.shape, lambda b: (0, 0)),
            pl.BlockSpec(w2p.shape, lambda b: (0, 0)),
            pl.BlockSpec(b2p.shape, lambda b: (0, 0)),
        ],
        out_specs=pl.BlockSpec((None, 1, outp), lambda b: (b, 0, 0)),
        compiler_params=pltpu.CompilerParams(
            dimension_semantics=("parallel",)),
    )(x, t1, r1, bc1, t2, r2, bc2, w1p, b1, w2p, b2p)
    return out[:, 0, :]


# ------------------------------ parameters ---------------------------------- #

def init_params(key, image_width, image_height, num_classes):
    """Deterministic synthetic parameters with the module's shapes."""
    c1, c2, f1 = 6, 16, 128
    # replicate the module's size_after_cnn computation exactly
    hh = (image_height + 1 - CNN_K) / POOL
    hh = int((hh + 1 - CNN_K) / POOL)
    ww = (image_width + 1 - CNN_K) / POOL
    ww = int((ww + 1 - CNN_K) / POOL)
    size_after_cnn = c2 * hh * ww

    ks = jax.random.split(key, 8)

    def u(k, shape, fan_in):
        bound = 1.0 / jnp.sqrt(jnp.float32(fan_in))
        return jax.random.uniform(k, shape, jnp.float32, -bound, bound)

    params = dict(
        conv1_w=u(ks[0], (c1, 1, CNN_K, CNN_K), 1 * CNN_K * CNN_K),
        conv1_b=u(ks[1], (c1,), 1 * CNN_K * CNN_K),
        conv2_w=u(ks[2], (c2, c1, CNN_K, CNN_K), c1 * CNN_K * CNN_K),
        conv2_b=u(ks[3], (c2,), c1 * CNN_K * CNN_K),
        fc1_w=u(ks[4], (size_after_cnn, f1), size_after_cnn),
        fc1_b=u(ks[5], (f1,), size_after_cnn),
        fc2_w=u(ks[6], (f1, num_classes), f1),
        fc2_b=u(ks[7], (num_classes,), f1),
    )
    return params, size_after_cnn


# --------------------------- pure-JAX reference ----------------------------- #

def _reference_forward(params, x):
    hi = jax.lax.Precision.HIGHEST

    def conv(y, wgt, b):
        y = jax.lax.conv_general_dilated(
            y, wgt, window_strides=(1, 1), padding="VALID",
            dimension_numbers=("NCHW", "OIHW", "NCHW"), precision=hi)
        return y + b.reshape(1, -1, 1, 1)

    def pool(y):
        b, c, hh, ww = y.shape
        y = y[:, :, :hh // POOL * POOL, :ww // POOL * POOL]
        return y.reshape(b, c, hh // POOL, POOL, ww // POOL, POOL).max(axis=(3, 5))

    y = pool(jax.nn.relu(conv(x, params["conv1_w"], params["conv1_b"])))
    y = pool(jax.nn.relu(conv(y, params["conv2_w"], params["conv2_b"])))
    y = y.reshape(y.shape[0], -1)
    y = jax.nn.relu(jnp.dot(y, params["fc1_w"], precision=hi)
                    + params["fc1_b"][None, :])
    return jnp.dot(y, params["fc2_w"], precision=hi) + params["fc2_b"][None, :]


if __name__ == "__main__":
    key = jax.random.PRNGKey(0)
    kx, kp = jax.random.split(key)
    B, H, W, NUM_CLASSES = 2, 32, 32, 10          # LeNet-consistent sizes
    x = jax.random.normal(kx, (B, 1, H, W), jnp.float32)

    params, _ = init_params(kp, W, H, NUM_CLASSES)
    ops = prepare_params(params, H, W)            # one-time weight transforms

    fwd = jax.jit(lenet_forward)
    out = fwd(ops, x)[:, :NUM_CLASSES]
    out = jax.block_until_ready(out)
    assert out.shape == (B, NUM_CLASSES), out.shape

    ref = jax.block_until_ready(_reference_forward(params, x))
    assert jnp.allclose(out, ref, atol=1e-3, rtol=1e-3), \
        float(jnp.max(jnp.abs(out - ref)))
    print("KERNEL_OK")
</pallas_src>

<mosaic_0001>
module attributes {stable_mosaic.version = 11 : i64} {
  func.func @kernel(%arg0: i32, %arg1: memref<1x1x32x32xf32, #tpu.memory_space<vmem>>, %arg2: memref<2x5x32x84xf32, #tpu.memory_space<vmem>>, %arg3: memref<2x14x28xf32, #tpu.memory_space<vmem>>, %arg4: memref<1x84xf32, #tpu.memory_space<vmem>>, %arg5: memref<2x5x84x80xf32, #tpu.memory_space<vmem>>, %arg6: memref<2x5x10xf32, #tpu.memory_space<vmem>>, %arg7: memref<1x80xf32, #tpu.memory_space<vmem>>, %arg8: memref<5x80x128xf32, #tpu.memory_space<vmem>>, %arg9: memref<1x128xf32, #tpu.memory_space<vmem>>, %arg10: memref<128x128xf32, #tpu.memory_space<vmem>>, %arg11: memref<1x128xf32, #tpu.memory_space<vmem>>, %arg12: memref<1x1x128xf32, #tpu.memory_space<vmem>>) attributes {dimension_semantics = [#tpu.dimension_semantics<parallel>], iteration_bounds = array<i64: 2>, scalar_prefetch = 0 : i64, scratch_operands = 0 : i64, tpu.core_type = #tpu.core_type<tc>, window_params = [{transform_indices = @transform_0, window_bounds = array<i64: 1, 1, 32, 32>}, {pipeline_mode = #tpu.pipeline_mode<synchronous>, transform_indices = @transform_1, window_bounds = array<i64: 2, 5, 32, 84>}, {pipeline_mode = #tpu.pipeline_mode<synchronous>, transform_indices = @transform_2, window_bounds = array<i64: 2, 14, 28>}, {pipeline_mode = #tpu.pipeline_mode<synchronous>, transform_indices = @transform_3, window_bounds = array<i64: 1, 84>}, {pipeline_mode = #tpu.pipeline_mode<synchronous>, transform_indices = @transform_4, window_bounds = array<i64: 2, 5, 84, 80>}, {pipeline_mode = #tpu.pipeline_mode<synchronous>, transform_indices = @transform_5, window_bounds = array<i64: 2, 5, 10>}, {pipeline_mode = #tpu.pipeline_mode<synchronous>, transform_indices = @transform_6, window_bounds = array<i64: 1, 80>}, {pipeline_mode = #tpu.pipeline_mode<synchronous>, transform_indices = @transform_7, window_bounds = array<i64: 5, 80, 128>}, {pipeline_mode = #tpu.pipeline_mode<synchronous>, transform_indices = @transform_8, window_bounds = array<i64: 1, 128>}, {pipeline_mode = #tpu.pipeline_mode<synchronous>, transform_indices = @transform_9, window_bounds = array<i64: 128, 128>}, {pipeline_mode = #tpu.pipeline_mode<synchronous>, transform_indices = @transform_10, window_bounds = array<i64: 1, 128>}, {transform_indices = @transform_11, window_bounds = array<i64: 1, 1, 128>}]} {
    %c0 = arith.constant 0 : index
    %c0_0 = arith.constant 0 : index
    %c0_1 = arith.constant 0 : index
    %c0_2 = arith.constant 0 : index
    %0 = vector.load %arg1[%c0, %c0_0, %c0_1, %c0_2] : memref<1x1x32x32xf32, #tpu.memory_space<vmem>>, vector<1x1x32x32xf32>
    %1 = vector.shape_cast %0 : vector<1x1x32x32xf32> to vector<32x32xf32>
    %2 = vector.extract_strided_slice %1 {offsets = [0, 0], sizes = [28, 32], strides = [1, 1]} : vector<32x32xf32> to vector<28x32xf32>
    %c0_3 = arith.constant 0 : index
    %c0_4 = arith.constant 0 : index
    %c0_5 = arith.constant 0 : index
    %c0_6 = arith.constant 0 : index
    %3 = vector.load %arg2[%c0_3, %c0_4, %c0_5, %c0_6] : memref<2x5x32x84xf32, #tpu.memory_space<vmem>>, vector<1x1x32x84xf32>
    %4 = vector.shape_cast %3 : vector<1x1x32x84xf32> to vector<32x84xf32>
    %cst = arith.constant dense<0.000000e+00> : vector<28x84xf32>
    %5 = tpu.matmul %2, %4, %cst {dimension_numbers = #tpu.dot_dimension_numbers<[1], [0], [0], [1], [0, 0, 1, 1], [], []>} : vector<28x32xf32>, vector<32x84xf32>, vector<28x84xf32> -> vector<28x84xf32>
    %6 = vector.extract_strided_slice %1 {offsets = [1, 0], sizes = [28, 32], strides = [1, 1]} : vector<32x32xf32> to vector<28x32xf32>
    %c0_7 = arith.constant 0 : index
    %c1 = arith.constant 1 : index
    %c0_8 = arith.constant 0 : index
    %c0_9 = arith.constant 0 : index
    %7 = vector.load %arg2[%c0_7, %c1, %c0_8, %c0_9] : memref<2x5x32x84xf32, #tpu.memory_space<vmem>>, vector<1x1x32x84xf32>
    %8 = vector.shape_cast %7 : vector<1x1x32x84xf32> to vector<32x84xf32>
    %cst_10 = arith.constant dense<0.000000e+00> : vector<28x84xf32>
    %9 = tpu.matmul %6, %8, %cst_10 {dimension_numbers = #tpu.dot_dimension_numbers<[1], [0], [0], [1], [0, 0, 1, 1], [], []>} : vector<28x32xf32>, vector<32x84xf32>, vector<28x84xf32> -> vector<28x84xf32>
    %10 = arith.addf %5, %9 : vector<28x84xf32>
    %11 = vector.extract_strided_slice %1 {offsets = [2, 0], sizes = [28, 32], strides = [1, 1]} : vector<32x32xf32> to vector<28x32xf32>
    %c0_11 = arith.constant 0 : index
    %c2 = arith.constant 2 : index
    %c0_12 = arith.constant 0 : index
    %c0_13 = arith.constant 0 : index
    %12 = vector.load %arg2[%c0_11, %c2, %c0_12, %c0_13] : memref<2x5x32x84xf32, #tpu.memory_space<vmem>>, vector<1x1x32x84xf32>
    %13 = vector.shape_cast %12 : vector<1x1x32x84xf32> to vector<32x84xf32>
    %cst_14 = arith.constant dense<0.000000e+00> : vector<28x84xf32>
    %14 = tpu.matmul %11, %13, %cst_14 {dimension_numbers = #tpu.dot_dimension_numbers<[1], [0], [0], [1], [0, 0, 1, 1], [], []>} : vector<28x32xf32>, vector<32x84xf32>, vector<28x84xf32> -> vector<28x84xf32>
    %15 = arith.addf %10, %14 : vector<28x84xf32>
    %16 = vector.extract_strided_slice %1 {offsets = [3, 0], sizes = [28, 32], strides = [1, 1]} : vector<32x32xf32> to vector<28x32xf32>
    %c0_15 = arith.constant 0 : index
    %c3 = arith.constant 3 : index
    %c0_16 = arith.constant 0 : index
    %c0_17 = arith.constant 0 : index
    %17 = vector.load %arg2[%c0_15, %c3, %c0_16, %c0_17] : memref<2x5x32x84xf32, #tpu.memory_space<vmem>>, vector<1x1x32x84xf32>
    %18 = vector.shape_cast %17 : vector<1x1x32x84xf32> to vector<32x84xf32>
    %cst_18 = arith.constant dense<0.000000e+00> : vector<28x84xf32>
    %19 = tpu.matmul %16, %18, %cst_18 {dimension_numbers = #tpu.dot_dimension_numbers<[1], [0], [0], [1], [0, 0, 1, 1], [], []>} : vector<28x32xf32>, vector<32x84xf32>, vector<28x84xf32> -> vector<28x84xf32>
    %20 = arith.addf %15, %19 : vector<28x84xf32>
    %21 = vector.extract_strided_slice %1 {offsets = [4, 0], sizes = [28, 32], strides = [1, 1]} : vector<32x32xf32> to vector<28x32xf32>
    %c0_19 = arith.constant 0 : index
    %c4 = arith.constant 4 : index
    %c0_20 = arith.constant 0 : index
    %c0_21 = arith.constant 0 : index
    %22 = vector.load %arg2[%c0_19, %c4, %c0_20, %c0_21] : memref<2x5x32x84xf32, #tpu.memory_space<vmem>>, vector<1x1x32x84xf32>
    %23 = vector.shape_cast %22 : vector<1x1x32x84xf32> to vector<32x84xf32>
    %cst_22 = arith.constant dense<0.000000e+00> : vector<28x84xf32>
    %24 = tpu.matmul %21, %23, %cst_22 {dimension_numbers = #tpu.dot_dimension_numbers<[1], [0], [0], [1], [0, 0, 1, 1], [], []>} : vector<28x32xf32>, vector<32x84xf32>, vector<28x84xf32> -> vector<28x84xf32>
    %25 = arith.addf %20, %24 : vector<28x84xf32>
    %26 = vector.extract_strided_slice %1 {offsets = [0, 0], sizes = [28, 32], strides = [1, 1]} : vector<32x32xf32> to vector<28x32xf32>
    %c1_23 = arith.constant 1 : index
    %c0_24 = arith.constant 0 : index
    %c0_25 = arith.constant 0 : index
    %c0_26 = arith.constant 0 : index
    %27 = vector.load %arg2[%c1_23, %c0_24, %c0_25, %c0_26] : memref<2x5x32x84xf32, #tpu.memory_space<vmem>>, vector<1x1x32x84xf32>
    %28 = vector.shape_cast %27 : vector<1x1x32x84xf32> to vector<32x84xf32>
    %cst_27 = arith.constant dense<0.000000e+00> : vector<28x84xf32>
    %29 = tpu.matmul %26, %28, %cst_27 {dimension_numbers = #tpu.dot_dimension_numbers<[1], [0], [0], [1], [0, 0, 1, 1], [], []>} : vector<28x32xf32>, vector<32x84xf32>, vector<28x84xf32> -> vector<28x84xf32>
    %30 = vector.extract_strided_slice %1 {offsets = [1, 0], sizes = [28, 32], strides = [1, 1]} : vector<32x32xf32> to vector<28x32xf32>
    %c1_28 = arith.constant 1 : index
    %c1_29 = arith.constant 1 : index
    %c0_30 = arith.constant 0 : index
    %c0_31 = arith.constant 0 : index
    %31 = vector.load %arg2[%c1_28, %c1_29, %c0_30, %c0_31] : memref<2x5x32x84xf32, #tpu.memory_space<vmem>>, vector<1x1x32x84xf32>
    %32 = vector.shape_cast %31 : vector<1x1x32x84xf32> to vector<32x84xf32>
    %cst_32 = arith.constant dense<0.000000e+00> : vector<28x84xf32>
    %33 = tpu.matmul %30, %32, %cst_32 {dimension_numbers = #tpu.dot_dimension_numbers<[1], [0], [0], [1], [0, 0, 1, 1], [], []>} : vector<28x32xf32>, vector<32x84xf32>, vector<28x84xf32> -> vector<28x84xf32>
    %34 = arith.addf %29, %33 : vector<28x84xf32>
    %35 = vector.extract_strided_slice %1 {offsets = [2, 0], sizes = [28, 32], strides = [1, 1]} : vector<32x32xf32> to vector<28x32xf32>
    %c1_33 = arith.constant 1 : index
    %c2_34 = arith.constant 2 : index
    %c0_35 = arith.constant 0 : index
    %c0_36 = arith.constant 0 : index
    %36 = vector.load %arg2[%c1_33, %c2_34, %c0_35, %c0_36] : memref<2x5x32x84xf32, #tpu.memory_space<vmem>>, vector<1x1x32x84xf32>
    %37 = vector.shape_cast %36 : vector<1x1x32x84xf32> to vector<32x84xf32>
    %cst_37 = arith.constant dense<0.000000e+00> : vector<28x84xf32>
    %38 = tpu.matmul %35, %37, %cst_37 {dimension_numbers = #tpu.dot_dimension_numbers<[1], [0], [0], [1], [0, 0, 1, 1], [], []>} : vector<28x32xf32>, vector<32x84xf32>, vector<28x84xf32> -> vector<28x84xf32>
    %39 = arith.addf %34, %38 : vector<28x84xf32>
    %40 = vector.extract_strided_slice %1 {offsets = [3, 0], sizes = [28, 32], strides = [1, 1]} : vector<32x32xf32> to vector<28x32xf32>
    %c1_38 = arith.constant 1 : index
    %c3_39 = arith.constant 3 : index
    %c0_40 = arith.constant 0 : index
    %c0_41 = arith.constant 0 : index
    %41 = vector.load %arg2[%c1_38, %c3_39, %c0_40, %c0_41] : memref<2x5x32x84xf32, #tpu.memory_space<vmem>>, vector<1x1x32x84xf32>
    %42 = vector.shape_cast %41 : vector<1x1x32x84xf32> to vector<32x84xf32>
    %cst_42 = arith.constant dense<0.000000e+00> : vector<28x84xf32>
    %43 = tpu.matmul %40, %42, %cst_42 {dimension_numbers = #tpu.dot_dimension_numbers<[1], [0], [0], [1], [0, 0, 1, 1], [], []>} : vector<28x32xf32>, vector<32x84xf32>, vector<28x84xf32> -> vector<28x84xf32>
    %44 = arith.addf %39, %43 : vector<28x84xf32>
    %45 = vector.extract_strided_slice %1 {offsets = [4, 0], sizes = [28, 32], strides = [1, 1]} : vector<32x32xf32> to vector<28x32xf32>
    %c1_43 = arith.constant 1 : index
    %c4_44 = arith.constant 4 : index
    %c0_45 = arith.constant 0 : index
    %c0_46 = arith.constant 0 : index
    %46 = vector.load %arg2[%c1_43, %c4_44, %c0_45, %c0_46] : memref<2x5x32x84xf32, #tpu.memory_space<vmem>>, vector<1x1x32x84xf32>
    %47 = vector.shape_cast %46 : vector<1x1x32x84xf32> to vector<32x84xf32>
    %cst_47 = arith.constant dense<0.000000e+00> : vector<28x84xf32>
    %48 = tpu.matmul %45, %47, %cst_47 {dimension_numbers = #tpu.dot_dimension_numbers<[1], [0], [0], [1], [0, 0, 1, 1], [], []>} : vector<28x32xf32>, vector<32x84xf32>, vector<28x84xf32> -> vector<28x84xf32>
    %49 = arith.addf %44, %48 : vector<28x84xf32>
    %50 = arith.maximumf %25, %49 : vector<28x84xf32>
    %c0_48 = arith.constant 0 : index
    %c0_49 = arith.constant 0 : index
    %c0_50 = arith.constant 0 : index
    %51 = vector.load %arg3[%c0_48, %c0_49, %c0_50] : memref<2x14x28xf32, #tpu.memory_space<vmem>>, vector<1x14x28xf32>
    %52 = vector.shape_cast %51 : vector<1x14x28xf32> to vector<14x28xf32>
    %cst_51 = arith.constant dense<0.000000e+00> : vector<14x84xf32>
    %53 = tpu.matmul %52, %50, %cst_51 {dimension_numbers = #tpu.dot_dimension_numbers<[1], [0], [0], [1], [0, 0, 1, 1], [], []>} : vector<14x28xf32>, vector<28x84xf32>, vector<14x84xf32> -> vector<14x84xf32>
    %c1_52 = arith.constant 1 : index
    %c0_53 = arith.constant 0 : index
    %c0_54 = arith.constant 0 : index
    %54 = vector.load %arg3[%c1_52, %c0_53, %c0_54] : memref<2x14x28xf32, #tpu.memory_space<vmem>>, vector<1x14x28xf32>
    %55 = vector.shape_cast %54 : vector<1x14x28xf32> to vector<14x28xf32>
    %cst_55 = arith.constant dense<0.000000e+00> : vector<14x84xf32>
    %56 = tpu.matmul %55, %50, %cst_55 {dimension_numbers = #tpu.dot_dimension_numbers<[1], [0], [0], [1], [0, 0, 1, 1], [], []>} : vector<14x28xf32>, vector<28x84xf32>, vector<14x84xf32> -> vector<14x84xf32>
    %57 = arith.maximumf %53, %56 : vector<14x84xf32>
    %c0_56 = arith.constant 0 : index
    %c0_57 = arith.constant 0 : index
    %58 = vector.load %arg4[%c0_56, %c0_57] : memref<1x84xf32, #tpu.memory_space<vmem>>, vector<1x84xf32>
    %59 = vector.broadcast %58 : vector<1x84xf32> to vector<14x84xf32>
    %60 = arith.addf %57, %59 : vector<14x84xf32>
    %cst_58 = arith.constant 0.000000e+00 : f32
    %61 = vector.broadcast %cst_58 : f32 to vector<14x84xf32>
    %62 = arith.maximumf %60, %61 : vector<14x84xf32>
    %63 = vector.extract_strided_slice %62 {offsets = [0, 0], sizes = [10, 84], strides = [1, 1]} : vector<14x84xf32> to vector<10x84xf32>
    %c0_59 = arith.constant 0 : index
    %c0_60 = arith.constant 0 : index
    %c0_61 = arith.constant 0 : index
    %c0_62 = arith.constant 0 : index
    %64 = vector.load %arg5[%c0_59, %c0_60, %c0_61, %c0_62] : memref<2x5x84x80xf32, #tpu.memory_space<vmem>>, vector<1x1x84x80xf32>
    %65 = vector.shape_cast %64 : vector<1x1x84x80xf32> to vector<84x80xf32>
    %cst_63 = arith.constant dense<0.000000e+00> : vector<10x80xf32>
    %66 = tpu.matmul %63, %65, %cst_63 {dimension_numbers = #tpu.dot_dimension_numbers<[1], [0], [0], [1], [0, 0, 1, 1], [], []>} : vector<10x84xf32>, vector<84x80xf32>, vector<10x80xf32> -> vector<10x80xf32>
    %67 = vector.extract_strided_slice %62 {offsets = [1, 0], sizes = [10, 84], strides = [1, 1]} : vector<14x84xf32> to vector<10x84xf32>
    %c0_64 = arith.constant 0 : index
    %c1_65 = arith.constant 1 : index
    %c0_66 = arith.constant 0 : index
    %c0_67 = arith.constant 0 : index
    %68 = vector.load %arg5[%c0_64, %c1_65, %c0_66, %c0_67] : memref<2x5x84x80xf32, #tpu.memory_space<vmem>>, vector<1x1x84x80xf32>
    %69 = vector.shape_cast %68 : vector<1x1x84x80xf32> to vector<84x80xf32>
    %cst_68 = arith.constant dense<0.000000e+00> : vector<10x80xf32>
    %70 = tpu.matmul %67, %69, %cst_68 {dimension_numbers = #tpu.dot_dimension_numbers<[1], [0], [0], [1], [0, 0, 1, 1], [], []>} : vector<10x84xf32>, vector<84x80xf32>, vector<10x80xf32> -> vector<10x80xf32>
    %71 = arith.addf %66, %70 : vector<10x80xf32>
    %72 = vector.extract_strided_slice %62 {offsets = [2, 0], sizes = [10, 84], strides = [1, 1]} : vector<14x84xf32> to vector<10x84xf32>
    %c0_69 = arith.constant 0 : index
    %c2_70 = arith.constant 2 : index
    %c0_71 = arith.constant 0 : index
    %c0_72 = arith.constant 0 : index
    %73 = vector.load %arg5[%c0_69, %c2_70, %c0_71, %c0_72] : memref<2x5x84x80xf32, #tpu.memory_space<vmem>>, vector<1x1x84x80xf32>
    %74 = vector.shape_cast %73 : vector<1x1x84x80xf32> to vector<84x80xf32>
    %cst_73 = arith.constant dense<0.000000e+00> : vector<10x80xf32>
    %75 = tpu.matmul %72, %74, %cst_73 {dimension_numbers = #tpu.dot_dimension_numbers<[1], [0], [0], [1], [0, 0, 1, 1], [], []>} : vector<10x84xf32>, vector<84x80xf32>, vector<10x80xf32> -> vector<10x80xf32>
    %76 = arith.addf %71, %75 : vector<10x80xf32>
    %77 = vector.extract_strided_slice %62 {offsets = [3, 0], sizes = [10, 84], strides = [1, 1]} : vector<14x84xf32> to vector<10x84xf32>
    %c0_74 = arith.constant 0 : index
    %c3_75 = arith.constant 3 : index
    %c0_76 = arith.constant 0 : index
    %c0_77 = arith.constant 0 : index
    %78 = vector.load %arg5[%c0_74, %c3_75, %c0_76, %c0_77] : memref<2x5x84x80xf32, #tpu.memory_space<vmem>>, vector<1x1x84x80xf32>
    %79 = vector.shape_cast %78 : vector<1x1x84x80xf32> to vector<84x80xf32>
    %cst_78 = arith.constant dense<0.000000e+00> : vector<10x80xf32>
    %80 = tpu.matmul %77, %79, %cst_78 {dimension_numbers = #tpu.dot_dimension_numbers<[1], [0], [0], [1], [0, 0, 1, 1], [], []>} : vector<10x84xf32>, vector<84x80xf32>, vector<10x80xf32> -> vector<10x80xf32>
    %81 = arith.addf %76, %80 : vector<10x80xf32>
    %82 = vector.extract_strided_slice %62 {offsets = [4, 0], sizes = [10, 84], strides = [1, 1]} : vector<14x84xf32> to vector<10x84xf32>
    %c0_79 = arith.constant 0 : index
    %c4_80 = arith.constant 4 : index
    %c0_81 = arith.constant 0 : index
    %c0_82 = arith.constant 0 : index
    %83 = vector.load %arg5[%c0_79, %c4_80, %c0_81, %c0_82] : memref<2x5x84x80xf32, #tpu.memory_space<vmem>>, vector<1x1x84x80xf32>
    %84 = vector.shape_cast %83 : vector<1x1x84x80xf32> to vector<84x80xf32>
    %cst_83 = arith.constant dense<0.000000e+00> : vector<10x80xf32>
    %85 = tpu.matmul %82, %84, %cst_83 {dimension_numbers = #tpu.dot_dimension_numbers<[1], [0], [0], [1], [0, 0, 1, 1], [], []>} : vector<10x84xf32>, vector<84x80xf32>, vector<10x80xf32> -> vector<10x80xf32>
    %86 = arith.addf %81, %85 : vector<10x80xf32>
    %87 = vector.extract_strided_slice %62 {offsets = [0, 0], sizes = [10, 84], strides = [1, 1]} : vector<14x84xf32> to vector<10x84xf32>
    %c1_84 = arith.constant 1 : index
    %c0_85 = arith.constant 0 : index
    %c0_86 = arith.constant 0 : index
    %c0_87 = arith.constant 0 : index
    %88 = vector.load %arg5[%c1_84, %c0_85, %c0_86, %c0_87] : memref<2x5x84x80xf32, #tpu.memory_space<vmem>>, vector<1x1x84x80xf32>
    %89 = vector.shape_cast %88 : vector<1x1x84x80xf32> to vector<84x80xf32>
    %cst_88 = arith.constant dense<0.000000e+00> : vector<10x80xf32>
    %90 = tpu.matmul %87, %89, %cst_88 {dimension_numbers = #tpu.dot_dimension_numbers<[1], [0], [0], [1], [0, 0, 1, 1], [], []>} : vector<10x84xf32>, vector<84x80xf32>, vector<10x80xf32> -> vector<10x80xf32>
    %91 = vector.extract_strided_slice %62 {offsets = [1, 0], sizes = [10, 84], strides = [1, 1]} : vector<14x84xf32> to vector<10x84xf32>
    %c1_89 = arith.constant 1 : index
    %c1_90 = arith.constant 1 : index
    %c0_91 = arith.constant 0 : index
    %c0_92 = arith.constant 0 : index
    %92 = vector.load %arg5[%c1_89, %c1_90, %c0_91, %c0_92] : memref<2x5x84x80xf32, #tpu.memory_space<vmem>>, vector<1x1x84x80xf32>
    %93 = vector.shape_cast %92 : vector<1x1x84x80xf32> to vector<84x80xf32>
    %cst_93 = arith.constant dense<0.000000e+00> : vector<10x80xf32>
    %94 = tpu.matmul %91, %93, %cst_93 {dimension_numbers = #tpu.dot_dimension_numbers<[1], [0], [0], [1], [0, 0, 1, 1], [], []>} : vector<10x84xf32>, vector<84x80xf32>, vector<10x80xf32> -> vector<10x80xf32>
    %95 = arith.addf %90, %94 : vector<10x80xf32>
    %96 = vector.extract_strided_slice %62 {offsets = [2, 0], sizes = [10, 84], strides = [1, 1]} : vector<14x84xf32> to vector<10x84xf32>
    %c1_94 = arith.constant 1 : index
    %c2_95 = arith.constant 2 : index
    %c0_96 = arith.constant 0 : index
    %c0_97 = arith.constant 0 : index
    %97 = vector.load %arg5[%c1_94, %c2_95, %c0_96, %c0_97] : memref<2x5x84x80xf32, #tpu.memory_space<vmem>>, vector<1x1x84x80xf32>
    %98 = vector.shape_cast %97 : vector<1x1x84x80xf32> to vector<84x80xf32>
    %cst_98 = arith.constant dense<0.000000e+00> : vector<10x80xf32>
    %99 = tpu.matmul %96, %98, %cst_98 {dimension_numbers = #tpu.dot_dimension_numbers<[1], [0], [0], [1], [0, 0, 1, 1], [], []>} : vector<10x84xf32>, vector<84x80xf32>, vector<10x80xf32> -> vector<10x80xf32>
    %100 = arith.addf %95, %99 : vector<10x80xf32>
    %101 = vector.extract_strided_slice %62 {offsets = [3, 0], sizes = [10, 84], strides = [1, 1]} : vector<14x84xf32> to vector<10x84xf32>
    %c1_99 = arith.constant 1 : index
    %c3_100 = arith.constant 3 : index
    %c0_101 = arith.constant 0 : index
    %c0_102 = arith.constant 0 : index
    %102 = vector.load %arg5[%c1_99, %c3_100, %c0_101, %c0_102] : memref<2x5x84x80xf32, #tpu.memory_space<vmem>>, vector<1x1x84x80xf32>
    %103 = vector.shape_cast %102 : vector<1x1x84x80xf32> to vector<84x80xf32>
    %cst_103 = arith.constant dense<0.000000e+00> : vector<10x80xf32>
    %104 = tpu.matmul %101, %103, %cst_103 {dimension_numbers = #tpu.dot_dimension_numbers<[1], [0], [0], [1], [0, 0, 1, 1], [], []>} : vector<10x84xf32>, vector<84x80xf32>, vector<10x80xf32> -> vector<10x80xf32>
    %105 = arith.addf %100, %104 : vector<10x80xf32>
    %106 = vector.extract_strided_slice %62 {offsets = [4, 0], sizes = [10, 84], strides = [1, 1]} : vector<14x84xf32> to vector<10x84xf32>
    %c1_104 = arith.constant 1 : index
    %c4_105 = arith.constant 4 : index
    %c0_106 = arith.constant 0 : index
    %c0_107 = arith.constant 0 : index
    %107 = vector.load %arg5[%c1_104, %c4_105, %c0_106, %c0_107] : memref<2x5x84x80xf32, #tpu.memory_space<vmem>>, vector<1x1x84x80xf32>
    %108 = vector.shape_cast %107 : vector<1x1x84x80xf32> to vector<84x80xf32>
    %cst_108 = arith.constant dense<0.000000e+00> : vector<10x80xf32>
    %109 = tpu.matmul %106, %108, %cst_108 {dimension_numbers = #tpu.dot_dimension_numbers<[1], [0], [0], [1], [0, 0, 1, 1], [], []>} : vector<10x84xf32>, vector<84x80xf32>, vector<10x80xf32> -> vector<10x80xf32>
    %110 = arith.addf %105, %109 : vector<10x80xf32>
    %111 = arith.maximumf %86, %110 : vector<10x80xf32>
    %c0_109 = arith.constant 0 : index
    %c0_110 = arith.constant 0 : index
    %c0_111 = arith.constant 0 : index
    %112 = vector.load %arg6[%c0_109, %c0_110, %c0_111] : memref<2x5x10xf32, #tpu.memory_space<vmem>>, vector<1x5x10xf32>
    %113 = vector.shape_cast %112 : vector<1x5x10xf32> to vector<5x10xf32>
    %cst_112 = arith.constant dense<0.000000e+00> : vector<5x80xf32>
    %114 = tpu.matmul %113, %111, %cst_112 {dimension_numbers = #tpu.dot_dimension_numbers<[1], [0], [0], [1], [0, 0, 1, 1], [], []>} : vector<5x10xf32>, vector<10x80xf32>, vector<5x80xf32> -> vector<5x80xf32>
    %c1_113 = arith.constant 1 : index
    %c0_114 = arith.constant 0 : index
    %c0_115 = arith.constant 0 : index
    %115 = vector.load %arg6[%c1_113, %c0_114, %c0_115] : memref<2x5x10xf32, #tpu.memory_space<vmem>>, vector<1x5x10xf32>
    %116 = vector.shape_cast %115 : vector<1x5x10xf32> to vector<5x10xf32>
    %cst_116 = arith.constant dense<0.000000e+00> : vector<5x80xf32>
    %117 = tpu.matmul %116, %111, %cst_116 {dimension_numbers = #tpu.dot_dimension_numbers<[1], [0], [0], [1], [0, 0, 1, 1], [], []>} : vector<5x10xf32>, vector<10x80xf32>, vector<5x80xf32> -> vector<5x80xf32>
    %118 = arith.maximumf %114, %117 : vector<5x80xf32>
    %c0_117 = arith.constant 0 : index
    %c0_118 = arith.constant 0 : index
    %119 = vector.load %arg7[%c0_117, %c0_118] : memref<1x80xf32, #tpu.memory_space<vmem>>, vector<1x80xf32>
    %120 = vector.broadcast %119 : vector<1x80xf32> to vector<5x80xf32>
    %121 = arith.addf %118, %120 : vector<5x80xf32>
    %cst_119 = arith.constant 0.000000e+00 : f32
    %122 = vector.broadcast %cst_119 : f32 to vector<5x80xf32>
    %123 = arith.maximumf %121, %122 : vector<5x80xf32>
    %124 = vector.extract_strided_slice %123 {offsets = [0, 0], sizes = [1, 80], strides = [1, 1]} : vector<5x80xf32> to vector<1x80xf32>
    %c0_120 = arith.constant 0 : index
    %c0_121 = arith.constant 0 : index
    %c0_122 = arith.constant 0 : index
    %125 = vector.load %arg8[%c0_120, %c0_121, %c0_122] : memref<5x80x128xf32, #tpu.memory_space<vmem>>, vector<1x80x128xf32>
    %126 = vector.shape_cast %125 : vector<1x80x128xf32> to vector<80x128xf32>
    %cst_123 = arith.constant dense<0.000000e+00> : vector<1x128xf32>
    %127 = tpu.matmul %124, %126, %cst_123 {dimension_numbers = #tpu.dot_dimension_numbers<[1], [0], [0], [1], [0, 0, 1, 1], [], []>} : vector<1x80xf32>, vector<80x128xf32>, vector<1x128xf32> -> vector<1x128xf32>
    %128 = vector.extract_strided_slice %123 {offsets = [1, 0], sizes = [1, 80], strides = [1, 1]} : vector<5x80xf32> to vector<1x80xf32>
    %c1_124 = arith.constant 1 : index
    %c0_125 = arith.constant 0 : index
    %c0_126 = arith.constant 0 : index
    %129 = vector.load %arg8[%c1_124, %c0_125, %c0_126] : memref<5x80x128xf32, #tpu.memory_space<vmem>>, vector<1x80x128xf32>
    %130 = vector.shape_cast %129 : vector<1x80x128xf32> to vector<80x128xf32>
    %cst_127 = arith.constant dense<0.000000e+00> : vector<1x128xf32>
    %131 = tpu.matmul %128, %130, %cst_127 {dimension_numbers = #tpu.dot_dimension_numbers<[1], [0], [0], [1], [0, 0, 1, 1], [], []>} : vector<1x80xf32>, vector<80x128xf32>, vector<1x128xf32> -> vector<1x128xf32>
    %132 = arith.addf %127, %131 : vector<1x128xf32>
    %133 = vector.extract_strided_slice %123 {offsets = [2, 0], sizes = [1, 80], strides = [1, 1]} : vector<5x80xf32> to vector<1x80xf32>
    %c2_128 = arith.constant 2 : index
    %c0_129 = arith.constant 0 : index
    %c0_130 = arith.constant 0 : index
    %134 = vector.load %arg8[%c2_128, %c0_129, %c0_130] : memref<5x80x128xf32, #tpu.memory_space<vmem>>, vector<1x80x128xf32>
    %135 = vector.shape_cast %134 : vector<1x80x128xf32> to vector<80x128xf32>
    %cst_131 = arith.constant dense<0.000000e+00> : vector<1x128xf32>
    %136 = tpu.matmul %133, %135, %cst_131 {dimension_numbers = #tpu.dot_dimension_numbers<[1], [0], [0], [1], [0, 0, 1, 1], [], []>} : vector<1x80xf32>, vector<80x128xf32>, vector<1x128xf32> -> vector<1x128xf32>
    %137 = arith.addf %132, %136 : vector<1x128xf32>
    %138 = vector.extract_strided_slice %123 {offsets = [3, 0], sizes = [1, 80], strides = [1, 1]} : vector<5x80xf32> to vector<1x80xf32>
    %c3_132 = arith.constant 3 : index
    %c0_133 = arith.constant 0 : index
    %c0_134 = arith.constant 0 : index
    %139 = vector.load %arg8[%c3_132, %c0_133, %c0_134] : memref<5x80x128xf32, #tpu.memory_space<vmem>>, vector<1x80x128xf32>
    %140 = vector.shape_cast %139 : vector<1x80x128xf32> to vector<80x128xf32>
    %cst_135 = arith.constant dense<0.000000e+00> : vector<1x128xf32>
    %141 = tpu.matmul %138, %140, %cst_135 {dimension_numbers = #tpu.dot_dimension_numbers<[1], [0], [0], [1], [0, 0, 1, 1], [], []>} : vector<1x80xf32>, vector<80x128xf32>, vector<1x128xf32> -> vector<1x128xf32>
    %142 = arith.addf %137, %141 : vector<1x128xf32>
    %143 = vector.extract_strided_slice %123 {offsets = [4, 0], sizes = [1, 80], strides = [1, 1]} : vector<5x80xf32> to vector<1x80xf32>
    %c4_136 = arith.constant 4 : index
    %c0_137 = arith.constant 0 : index
    %c0_138 = arith.constant 0 : index
    %144 = vector.load %arg8[%c4_136, %c0_137, %c0_138] : memref<5x80x128xf32, #tpu.memory_space<vmem>>, vector<1x80x128xf32>
    %145 = vector.shape_cast %144 : vector<1x80x128xf32> to vector<80x128xf32>
    %cst_139 = arith.constant dense<0.000000e+00> : vector<1x128xf32>
    %146 = tpu.matmul %143, %145, %cst_139 {dimension_numbers = #tpu.dot_dimension_numbers<[1], [0], [0], [1], [0, 0, 1, 1], [], []>} : vector<1x80xf32>, vector<80x128xf32>, vector<1x128xf32> -> vector<1x128xf32>
    %147 = arith.addf %142, %146 : vector<1x128xf32>
    %c0_140 = arith.constant 0 : index
    %c0_141 = arith.constant 0 : index
    %148 = vector.load %arg9[%c0_140, %c0_141] : memref<1x128xf32, #tpu.memory_space<vmem>>, vector<1x128xf32>
    %149 = arith.addf %147, %148 : vector<1x128xf32>
    %cst_142 = arith.constant 0.000000e+00 : f32
    %150 = vector.broadcast %cst_142 : f32 to vector<1x128xf32>
    %151 = arith.maximumf %149, %150 : vector<1x128xf32>
    %c0_143 = arith.constant 0 : index
    %c0_144 = arith.constant 0 : index
    %152 = vector.load %arg10[%c0_143, %c0_144] : memref<128x128xf32, #tpu.memory_space<vmem>>, vector<128x128xf32>
    %cst_145 = arith.constant dense<0.000000e+00> : vector<1x128xf32>
    %153 = tpu.matmul %151, %152, %cst_145 {dimension_numbers = #tpu.dot_dimension_numbers<[1], [0], [0], [1], [0, 0, 1, 1], [], []>} : vector<1x128xf32>, vector<128x128xf32>, vector<1x128xf32> -> vector<1x128xf32>
    %c0_146 = arith.constant 0 : index
    %c0_147 = arith.constant 0 : index
    %154 = vector.load %arg11[%c0_146, %c0_147] : memref<1x128xf32, #tpu.memory_space<vmem>>, vector<1x128xf32>
    %155 = arith.addf %153, %154 : vector<1x128xf32>
    %c0_148 = arith.constant 0 : index
    %c0_149 = arith.constant 0 : index
    %c0_150 = arith.constant 0 : index
    %156 = vector.load %arg12[%c0_148, %c0_149, %c0_150] : memref<1x1x128xf32, #tpu.memory_space<vmem>>, vector<1x1x128xf32>
    %157 = vector.shape_cast %156 : vector<1x1x128xf32> to vector<1x128xf32>
    %158 = vector.shape_cast %155 : vector<1x128xf32> to vector<1x1x128xf32>
    tpu.vector_store %arg12[%c0_148, %c0_149, %c0_150], %158 {strides = array<i32>} : memref<1x1x128xf32, #tpu.memory_space<vmem>>, vector<1x1x128xf32>,
    return
  }
  func.func @transform_0(%arg0: i32) -> (i32, i32, i32, i32) {
    %c0_i32 = arith.constant 0 : i32
    %c0_i32_0 = arith.constant 0 : i32
    %c0_i32_1 = arith.constant 0 : i32
    %c0_i32_2 = arith.constant 0 : i32
    return %arg0, %c0_i32, %c0_i32_0, %c0_i32_1 : i32, i32, i32, i32
  }
  func.func @transform_1(%arg0: i32) -> (i32, i32, i32, i32) {
    %c0_i32 = arith.constant 0 : i32
    %c0_i32_0 = arith.constant 0 : i32
    %c0_i32_1 = arith.constant 0 : i32
    %c0_i32_2 = arith.constant 0 : i32
    %c0_i32_3 = arith.constant 0 : i32
    return %c0_i32, %c0_i32_0, %c0_i32_1, %c0_i32_2 : i32, i32, i32, i32
  }
  func.func @transform_2(%arg0: i32) -> (i32, i32, i32) {
    %c0_i32 = arith.constant 0 : i32
    %c0_i32_0 = arith.constant 0 : i32
    %c0_i32_1 = arith.constant 0 : i32
    %c0_i32_2 = arith.constant 0 : i32
    return %c0_i32, %c0_i32_0, %c0_i32_1 : i32, i32, i32
  }
  func.func @transform_3(%arg0: i32) -> (i32, i32) {
    %c0_i32 = arith.constant 0 : i32
    %c0_i32_0 = arith.constant 0 : i32
    %c0_i32_1 = arith.constant 0 : i32
    return %c0_i32, %c0_i32_0 : i32, i32
  }
  func.func @transform_4(%arg0: i32) -> (i32, i32, i32, i32) {
    %c0_i32 = arith.constant 0 : i32
    %c0_i32_0 = arith.constant 0 : i32
    %c0_i32_1 = arith.constant 0 : i32
    %c0_i32_2 = arith.constant 0 : i32
    %c0_i32_3 = arith.constant 0 : i32
    return %c0_i32, %c0_i32_0, %c0_i32_1, %c0_i32_2 : i32, i32, i32, i32
  }
  func.func @transform_5(%arg0: i32) -> (i32, i32, i32) {
    %c0_i32 = arith.constant 0 : i32
    %c0_i32_0 = arith.constant 0 : i32
    %c0_i32_1 = arith.constant 0 : i32
    %c0_i32_2 = arith.constant 0 : i32
    return %c0_i32, %c0_i32_0, %c0_i32_1 : i32, i32, i32
  }
  func.func @transform_6(%arg0: i32) -> (i32, i32) {
    %c0_i32 = arith.constant 0 : i32
    %c0_i32_0 = arith.constant 0 : i32
    %c0_i32_1 = arith.constant 0 : i32
    return %c0_i32, %c0_i32_0 : i32, i32
  }
  func.func @transform_7(%arg0: i32) -> (i32, i32, i32) {
    %c0_i32 = arith.constant 0 : i32
    %c0_i32_0 = arith.constant 0 : i32
    %c0_i32_1 = arith.constant 0 : i32
    %c0_i32_2 = arith.constant 0 : i32
    return %c0_i32, %c0_i32_0, %c0_i32_1 : i32, i32, i32
  }
  func.func @transform_8(%arg0: i32) -> (i32, i32) {
    %c0_i32 = arith.constant 0 : i32
    %c0_i32_0 = arith.constant 0 : i32
    %c0_i32_1 = arith.constant 0 : i32
    return %c0_i32, %c0_i32_0 : i32, i32
  }
  func.func @transform_9(%arg0: i32) -> (i32, i32) {
    %c0_i32 = arith.constant 0 : i32
    %c0_i32_0 = arith.constant 0 : i32
    %c0_i32_1 = arith.constant 0 : i32
    return %c0_i32, %c0_i32_0 : i32, i32
  }
  func.func @transform_10(%arg0: i32) -> (i32, i32) {
    %c0_i32 = arith.constant 0 : i32
    %c0_i32_0 = arith.constant 0 : i32
    %c0_i32_1 = arith.constant 0 : i32
    return %c0_i32, %c0_i32_0 : i32, i32
  }
  func.func @transform_11(%arg0: i32) -> (i32, i32, i32) {
    %c0_i32 = arith.constant 0 : i32
    %c0_i32_0 = arith.constant 0 : i32
    %c0_i32_1 = arith.constant 0 : i32
    return %arg0, %c0_i32, %c0_i32_0 : i32, i32, i32
  }
}

</mosaic_0001>

<llo_original>
// kernel: lenet_forward.1
$region0: #{lenet_forward.1}
  #allocation0 [shape = 'u32[]', space=smem, size = 0x4, offset = 0x4, fixed_abs, tag = 'smem constant byte address 0x4 - core index']
  #allocation1 [shape = 'u32[144,128]{1,0:T(1,128)}', space=vmem, size = 0x12000, scoped, tag = 'internal scratch']
  %s0 = inlined_call_operand.vmem [shape: f32[2,1,32,32], index: 0, kind: input, shape index: {}]
  %s1 = inlined_call_operand.vmem [shape: f32[2,5,32,84], index: 1, kind: input, shape index: {}]
  %s2 = inlined_call_operand.vmem [shape: f32[2,14,28], index: 2, kind: input, shape index: {}]
  %s3 = inlined_call_operand.vmem [shape: f32[1,84], index: 3, kind: input, shape index: {}]
  %s4 = inlined_call_operand.vmem [shape: f32[2,5,84,80], index: 4, kind: input, shape index: {}]
  %s5 = inlined_call_operand.vmem [shape: f32[2,5,10], index: 5, kind: input, shape index: {}]
  %s6 = inlined_call_operand.vmem [shape: f32[1,80], index: 6, kind: input, shape index: {}]
  %s7 = inlined_call_operand.vmem [shape: f32[5,80,128], index: 7, kind: input, shape index: {}]
  %s8 = inlined_call_operand.vmem [shape: f32[1,128], index: 8, kind: input, shape index: {}]
  %s9 = inlined_call_operand.vmem [shape: f32[128,128], index: 9, kind: input, shape index: {}]
  %s10 = inlined_call_operand.vmem [shape: f32[1,128], index: 10, kind: input, shape index: {}]
  %s11 = inlined_call_operand.hbm [shape: f32[2,1,128], index: 11, kind: output, shape index: {}]
  %s12 = sld [smem:[#allocation0]]
  $region77: #{lenet_forward.1} parent=0
    _
  %s14 = ssub.s32 1, %s12
  %s15 = scalar_select 0, %s14, %s12
  $region1: #{lenet_forward.1} parent=0
    #allocation2 [shape = 'u8[1024]{0}', space=vmem, size = 0x400, scoped, tag = 'output window, operand 0']
    #allocation3 [shape = 's32[2]{0}', space=sflag, size = 0x8, scoped, tag = 'scoped memory for lenet_forward.1']
    %16 = vsyncpa [#allocation3], 0
    %s17 = scalar_lea.sflag [#allocation3], 1
    %18 = vsyncpa %s17, 0
    loop: start=0, step=1, limit=4
    $region2: #{lenet_forward.1} parent=1 // loop_pre_header
      _
    $region3: #{lenet_forward.1} parent=1 // loop_header
      %s20 = sphi 0, %s24
      %p21 = scmp.ge.s32.totalorder %s20, 4
      %s30 = sphi 0, %s32
      %s33 = sphi 0, %s30
      %s34 = sphi 0, %s33
      %s50 = sphi 0, %s34
      %s54 = sphi 0, %s54
      %s56 = sphi 0, %s54
      %s57 = sphi 0, %s56
      %s71 = sphi 0, %s57
      %s75 = sphi 0, %s75
      %s77 = sphi 0, %s75
      %s78 = sphi 0, %s77
      %s92 = sphi 0, %s78
      %s96 = sphi 0, %s96
      %s98 = sphi 0, %s96
      %s99 = sphi 0, %s98
      %s113 = sphi 0, %s99
      %s117 = sphi 0, %s117
      %s119 = sphi 0, %s117
      %s120 = sphi 0, %s119
      %s134 = sphi 0, %s120
      %s138 = sphi 0, %s138
      %s140 = sphi 0, %s138
      %s141 = sphi 0, %s140
      %s155 = sphi 0, %s141
      %s159 = sphi 0, %s159
      %s161 = sphi 0, %s159
      %s162 = sphi 0, %s161
      %s176 = sphi 0, %s162
      %s180 = sphi 0, %s180
      %s182 = sphi 0, %s180
      %s183 = sphi 0, %s182
      %s197 = sphi 0, %s183
      %s201 = sphi 0, %s201
      %s203 = sphi 0, %s201
      %s204 = sphi 0, %s203
      %s218 = sphi 0, %s204
      %s222 = sphi 0, %s222
      %s224 = sphi 0, %s222
      %s225 = sphi 0, %s224
      %s239 = sphi 0, %s225
      %s243 = sphi 0, %s243
      %s245 = sphi 0, %s243
      %s246 = sphi 0, %s245
      %s260 = sphi 0, %s246
      %s266 = sphi 0, %s268
      %s269 = sphi 0, %s266
      %s270 = sphi 0, %s269
      %s286 = sphi 0, %s270
    $region4: #{lenet_forward.1} parent=1 // loop_header_branch
      %23 = sbr.rel (%p21) target = $region8
    $region5: #{lenet_forward.1} parent=1 // loop_body
      %s25 = ssub.s32 %s20, 1
      %s26 = ssub.s32 %s20, 2
      %s27 = sadd.s32 %s20, 1
      %s28 = ssub.s32 %s20, %s27
      %p29 = scmp.eq.s32.totalorder %s28, 0
      %s31 = sadd.s32 %s30, 1
      %s32 = scalar_select %p29, %s30, %s31
      %p35 = pneg %p29
      %p36 = scmp.eq.s32.totalorder %s20, 1
      %p37 = por %p35, %p36
      %p38 = scmp.ne.s32.totalorder %s30, %s33
      %p39 = scmp.eq.s32.totalorder %s20, 0
      %p40 = por %p38, %p39
      %p41 = scmp.ne.s32.totalorder %s30, %s33
      %p42 = scmp.eq.s32.totalorder %s25, 1
      %p43 = por %p41, %p42
      %p44 = scmp.ne.s32.totalorder %s33, %s34
      %p45 = scmp.eq.s32.totalorder %s25, 0
      %p46 = por %p44, %p45
      %p47 = scmp.ne.s32.totalorder %s33, %s34
      %p48 = scmp.eq.s32.totalorder %s26, 1
      %p49 = por %p47, %p48
      %p51 = scmp.ne.s32.totalorder %s34, %s50
      %p52 = scmp.eq.s32.totalorder %s26, 0
      %p53 = por %p51, %p52
      %s55 = sadd.s32 %s54, 1
      %p58 = scmp.eq.s32.totalorder %s20, 1
      %p59 = scmp.ne.s32.totalorder %s54, %s56
      %p60 = scmp.eq.s32.totalorder %s20, 0
      %p61 = por %p59, %p60
      %p62 = scmp.ne.s32.totalorder %s54, %s56
      %p63 = scmp.eq.s32.totalorder %s25, 1
      %p64 = por %p62, %p63
      %p65 = scmp.ne.s32.totalorder %s56, %s57
      %p66 = scmp.eq.s32.totalorder %s25, 0
      %p67 = por %p65, %p66
      %p68 = scmp.ne.s32.totalorder %s56, %s57
      %p69 = scmp.eq.s32.totalorder %s26, 1
      %p70 = por %p68, %p69
      %p72 = scmp.ne.s32.totalorder %s57, %s71
      %p73 = scmp.eq.s32.totalorder %s26, 0
      %p74 = por %p72, %p73
      %s76 = sadd.s32 %s75, 1
      %p79 = scmp.eq.s32.totalorder %s20, 1
      %p80 = scmp.ne.s32.totalorder %s75, %s77
      %p81 = scmp.eq.s32.totalorder %s20, 0
      %p82 = por %p80, %p81
      %p83 = scmp.ne.s32.totalorder %s75, %s77
      %p84 = scmp.eq.s32.totalorder %s25, 1
      %p85 = por %p83, %p84
      %p86 = scmp.ne.s32.totalorder %s77, %s78
      %p87 = scmp.eq.s32.totalorder %s25, 0
      %p88 = por %p86, %p87
      %p89 = scmp.ne.s32.totalorder %s77, %s78
      %p90 = scmp.eq.s32.totalorder %s26, 1
      %p91 = por %p89, %p90
      %p93 = scmp.ne.s32.totalorder %s78, %s92
      %p94 = scmp.eq.s32.totalorder %s26, 0
      %p95 = por %p93, %p94
      %s97 = sadd.s32 %s96, 1
      %p100 = scmp.eq.s32.totalorder %s20, 1
      %p101 = scmp.ne.s32.totalorder %s96, %s98
      %p102 = scmp.eq.s32.totalorder %s20, 0
      %p103 = por %p101, %p102
      %p104 = scmp.ne.s32.totalorder %s96, %s98
      %p105 = scmp.eq.s32.totalorder %s25, 1
      %p106 = por %p104, %p105
      %p107 = scmp.ne.s32.totalorder %s98, %s99
      %p108 = scmp.eq.s32.totalorder %s25, 0
      %p109 = por %p107, %p108
      %p110 = scmp.ne.s32.totalorder %s98, %s99
      %p111 = scmp.eq.s32.totalorder %s26, 1
      %p112 = por %p110, %p111
      %p114 = scmp.ne.s32.totalorder %s99, %s113
      %p115 = scmp.eq.s32.totalorder %s26, 0
      %p116 = por %p114, %p115
      %s118 = sadd.s32 %s117, 1
      %p121 = scmp.eq.s32.totalorder %s20, 1
      %p122 = scmp.ne.s32.totalorder %s117, %s119
      %p123 = scmp.eq.s32.totalorder %s20, 0
      %p124 = por %p122, %p123
      %p125 = scmp.ne.s32.totalorder %s117, %s119
      %p126 = scmp.eq.s32.totalorder %s25, 1
      %p127 = por %p125, %p126
      %p128 = scmp.ne.s32.totalorder %s119, %s120
      %p129 = scmp.eq.s32.totalorder %s25, 0
      %p130 = por %p128, %p129
      %p131 = scmp.ne.s32.totalorder %s119, %s120
      %p132 = scmp.eq.s32.totalorder %s26, 1
      %p133 = por %p131, %p132
      %p135 = scmp.ne.s32.totalorder %s120, %s134
      %p136 = scmp.eq.s32.totalorder %s26, 0
      %p137 = por %p135, %p136
      %s139 = sadd.s32 %s138, 1
      %p142 = scmp.eq.s32.totalorder %s20, 1
      %p143 = scmp.ne.s32.totalorder %s138, %s140
      %p144 = scmp.eq.s32.totalorder %s20, 0
      %p145 = por %p143, %p144
      %p146 = scmp.ne.s32.totalorder %s138, %s140
      %p147 = scmp.eq.s32.totalorder %s25, 1
      %p148 = por %p146, %p147
      %p149 = scmp.ne.s32.totalorder %s140, %s141
      %p150 = scmp.eq.s32.totalorder %s25, 0
      %p151 = por %p149, %p150
      %p152 = scmp.ne.s32.totalorder %s140, %s141
      %p153 = scmp.eq.s32.totalorder %s26, 1
      %p154 = por %p152, %p153
      %p156 = scmp.ne.s32.totalorder %s141, %s155
      %p157 = scmp.eq.s32.totalorder %s26, 0
      %p158 = por %p156, %p157
      %s160 = sadd.s32 %s159, 1
      %p163 = scmp.eq.s32.totalorder %s20, 1
      %p164 = scmp.ne.s32.totalorder %s159, %s161
      %p165 = scmp.eq.s32.totalorder %s20, 0
      %p166 = por %p164, %p165
      %p167 = scmp.ne.s32.totalorder %s159, %s161
      %p168 = scmp.eq.s32.totalorder %s25, 1
      %p169 = por %p167, %p168
      %p170 = scmp.ne.s32.totalorder %s161, %s162
      %p171 = scmp.eq.s32.totalorder %s25, 0
      %p172 = por %p170, %p171
      %p173 = scmp.ne.s32.totalorder %s161, %s162
      %p174 = scmp.eq.s32.totalorder %s26, 1
      %p175 = por %p173, %p174
      %p177 = scmp.ne.s32.totalorder %s162, %s176
      %p178 = scmp.eq.s32.totalorder %s26, 0
      %p179 = por %p177, %p178
      %s181 = sadd.s32 %s180, 1
      %p184 = scmp.eq.s32.totalorder %s20, 1
      %p185 = scmp.ne.s32.totalorder %s180, %s182
      %p186 = scmp.eq.s32.totalorder %s20, 0
      %p187 = por %p185, %p186
      %p188 = scmp.ne.s32.totalorder %s180, %s182
      %p189 = scmp.eq.s32.totalorder %s25, 1
      %p190 = por %p188, %p189
      %p191 = scmp.ne.s32.totalorder %s182, %s183
      %p192 = scmp.eq.s32.totalorder %s25, 0
      %p193 = por %p191, %p192
      %p194 = scmp.ne.s32.totalorder %s182, %s183
      %p195 = scmp.eq.s32.totalorder %s26, 1
      %p196 = por %p194, %p195
      %p198 = scmp.ne.s32.totalorder %s183, %s197
      %p199 = scmp.eq.s32.totalorder %s26, 0
      %p200 = por %p198, %p199
      %s202 = sadd.s32 %s201, 1
      %p205 = scmp.eq.s32.totalorder %s20, 1
      %p206 = scmp.ne.s32.totalorder %s201, %s203
      %p207 = scmp.eq.s32.totalorder %s20, 0
      %p208 = por %p206, %p207
      %p209 = scmp.ne.s32.totalorder %s201, %s203
      %p210 = scmp.eq.s32.totalorder %s25, 1
      %p211 = por %p209, %p210
      %p212 = scmp.ne.s32.totalorder %s203, %s204
      %p213 = scmp.eq.s32.totalorder %s25, 0
      %p214 = por %p212, %p213
      %p215 = scmp.ne.s32.totalorder %s203, %s204
      %p216 = scmp.eq.s32.totalorder %s26, 1
      %p217 = por %p215, %p216
      %p219 = scmp.ne.s32.totalorder %s204, %s218
      %p220 = scmp.eq.s32.totalorder %s26, 0
      %p221 = por %p219, %p220
      %s223 = sadd.s32 %s222, 1
      %p226 = scmp.eq.s32.totalorder %s20, 1
      %p227 = scmp.ne.s32.totalorder %s222, %s224
      %p228 = scmp.eq.s32.totalorder %s20, 0
      %p229 = por %p227, %p228
      %p230 = scmp.ne.s32.totalorder %s222, %s224
      %p231 = scmp.eq.s32.totalorder %s25, 1
      %p232 = por %p230, %p231
      %p233 = scmp.ne.s32.totalorder %s224, %s225
      %p234 = scmp.eq.s32.totalorder %s25, 0
      %p235 = por %p233, %p234
      %p236 = scmp.ne.s32.totalorder %s224, %s225
      %p237 = scmp.eq.s32.totalorder %s26, 1
      %p238 = por %p236, %p237
      %p240 = scmp.ne.s32.totalorder %s225, %s239
      %p241 = scmp.eq.s32.totalorder %s26, 0
      %p242 = por %p240, %p241
      %s244 = sadd.s32 %s243, 1
      %p247 = scmp.eq.s32.totalorder %s20, 1
      %p248 = scmp.ne.s32.totalorder %s243, %s245
      %p249 = scmp.eq.s32.totalorder %s20, 0
      %p250 = por %p248, %p249
      %p251 = scmp.ne.s32.totalorder %s243, %s245
      %p252 = scmp.eq.s32.totalorder %s25, 1
      %p253 = por %p251, %p252
      %p254 = scmp.ne.s32.totalorder %s245, %s246
      %p255 = scmp.eq.s32.totalorder %s25, 0
      %p256 = por %p254, %p255
      %p257 = scmp.ne.s32.totalorder %s245, %s246
      %p258 = scmp.eq.s32.totalorder %s26, 1
      %p259 = por %p257, %p258
      %p261 = scmp.ne.s32.totalorder %s246, %s260
      %p262 = scmp.eq.s32.totalorder %s26, 0
      %p263 = por %p261, %p262
      %s264 = ssub.s32 %s20, %s27
      %p265 = scmp.eq.s32.totalorder %s264, 0
      %s267 = sadd.s32 %s266, 1
      %s268 = scalar_select %p265, %s266, %s267
      %p271 = pneg %p265
      %p272 = scmp.eq.s32.totalorder %s20, 1
      %p273 = por %p271, %p272
      %p274 = scmp.ne.s32.totalorder %s266, %s269
      %p275 = scmp.eq.s32.totalorder %s20, 0
      %p276 = por %p274, %p275
      %p277 = scmp.ne.s32.totalorder %s266, %s269
      %p278 = scmp.eq.s32.totalorder %s25, 1
      %p279 = por %p277, %p278
      %p280 = scmp.ne.s32.totalorder %s269, %s270
      %p281 = scmp.eq.s32.totalorder %s25, 0
      %p282 = por %p280, %p281
      %p283 = scmp.ne.s32.totalorder %s269, %s270
      %p284 = scmp.eq.s32.totalorder %s26, 1
      %p285 = por %p283, %p284
      %p287 = scmp.ne.s32.totalorder %s270, %s286
      %p288 = scmp.eq.s32.totalorder %s26, 0
      %p289 = por %p287, %p288
      %p290 = scmp.le.s32.totalorder 1, %s20
      %p291 = scmp.lt.s32.totalorder %s20, 3
      %p292 = pnand %p290, %p291
      %p293 = pneg %p292
      // Predicated region
      $region9: #{lenet_forward.1} parent=5 // pred_check
        _
      $region10: #{lenet_forward.1} parent=5 // pred_check_branch
        %295 = sbr.rel (%p292) target = $region12
      $region11: #{lenet_forward.1} parent=5 // pred_region
        %s296 = ssub.s32 %s20, 1
        // Predicated region
        $region13: #{lenet_forward.1} parent=11 // pred_check
          %p297 = pneg %p67
        $region14: #{lenet_forward.1} parent=11 // pred_check_branch
          %299 = sbr.rel (%p297) target = $region16
        $region15: #{lenet_forward.1} parent=11 // pred_region
          _
        $region16: #{lenet_forward.1} parent=11 // pred_fallthru
          _
        // Predicated region
        $region17: #{lenet_forward.1} parent=11 // pred_check
          %p300 = pneg %p88
        $region18: #{lenet_forward.1} parent=11 // pred_check_branch
          %302 = sbr.rel (%p300) target = $region20
        $region19: #{lenet_forward.1} parent=11 // pred_region
          _
        $region20: #{lenet_forward.1} parent=11 // pred_fallthru
          _
        // Predicated region
        $region21: #{lenet_forward.1} parent=11 // pred_check
          %p303 = pneg %p109
        $region22: #{lenet_forward.1} parent=11 // pred_check_branch
          %305 = sbr.rel (%p303) target = $region24
        $region23: #{lenet_forward.1} parent=11 // pred_region
          _
        $region24: #{lenet_forward.1} parent=11 // pred_fallthru
          _
        // Predicated region
        $region25: #{lenet_forward.1} parent=11 // pred_check
          %p306 = pneg %p130
        $region26: #{lenet_forward.1} parent=11 // pred_check_branch
          %308 = sbr.rel (%p306) target = $region28
        $region27: #{lenet_forward.1} parent=11 // pred_region
          _
        $region28: #{lenet_forward.1} parent=11 // pred_fallthru
          _
        // Predicated region
        $region29: #{lenet_forward.1} parent=11 // pred_check
          %p309 = pneg %p151
        $region30: #{lenet_forward.1} parent=11 // pred_check_branch
          %311 = sbr.rel (%p309) target = $region32
        $region31: #{lenet_forward.1} parent=11 // pred_region
          _
        $region32: #{lenet_forward.1} parent=11 // pred_fallthru
          _
        // Predicated region
        $region33: #{lenet_forward.1} parent=11 // pred_check
          %p312 = pneg %p172
        $region34: #{lenet_forward.1} parent=11 // pred_check_branch
          %314 = sbr.rel (%p312) target = $region36
        $region35: #{lenet_forward.1} parent=11 // pred_region
          _
        $region36: #{lenet_forward.1} parent=11 // pred_fallthru
          _
        // Predicated region
        $region37: #{lenet_forward.1} parent=11 // pred_check
          %p315 = pneg %p193
        $region38: #{lenet_forward.1} parent=11 // pred_check_branch
          %317 = sbr.rel (%p315) target = $region40
        $region39: #{lenet_forward.1} parent=11 // pred_region
          _
        $region40: #{lenet_forward.1} parent=11 // pred_fallthru
          _
        // Predicated region
        $region41: #{lenet_forward.1} parent=11 // pred_check
          %p318 = pneg %p214
        $region42: #{lenet_forward.1} parent=11 // pred_check_branch
          %320 = sbr.rel (%p318) target = $region44
        $region43: #{lenet_forward.1} parent=11 // pred_region
          _
        $region44: #{lenet_forward.1} parent=11 // pred_fallthru
          _
        // Predicated region
        $region45: #{lenet_forward.1} parent=11 // pred_check
          %p321 = pneg %p235
        $region46: #{lenet_forward.1} parent=11 // pred_check_branch
          %323 = sbr.rel (%p321) target = $region48
        $region47: #{lenet_forward.1} parent=11 // pred_region
          _
        $region48: #{lenet_forward.1} parent=11 // pred_fallthru
          _
        // Predicated region
        $region49: #{lenet_forward.1} parent=11 // pred_check
          %p324 = pneg %p256
        $region50: #{lenet_forward.1} parent=11 // pred_check_branch
          %326 = sbr.rel (%p324) target = $region52
        $region51: #{lenet_forward.1} parent=11 // pred_region
          _
        $region52: #{lenet_forward.1} parent=11 // pred_fallthru
          _
      $region12: #{lenet_forward.1} parent=5 // pred_fallthru
        _
      %p327 = scmp.lt.s32.totalorder %s20, 2
      // Predicated region
      $region53: #{lenet_forward.1} parent=5 // pred_check
        %p328 = pneg %p327
      $region54: #{lenet_forward.1} parent=5 // pred_check_branch
        %330 = sbr.rel (%p328) target = $region56
      $region55: #{lenet_forward.1} parent=5 // pred_region
        // Predicated region
        $region57: #{lenet_forward.1} parent=55 // pred_check
          %p331 = pneg %p40
        $region58: #{lenet_forward.1} parent=55 // pred_check_branch
          %333 = sbr.rel (%p331) target = $region60
        $region59: #{lenet_forward.1} parent=55 // pred_region
          %p334 = scmp.lt.s32.totalorder %s20, 1
          %s335 = scalar_select %p334, %s20, 1
          %s336 = smul.addr %s335, 4
          %s337 = smul.addr %s336, 8
          %s338 = scalar_lea.vmem %s0, %s337
        $region60: #{lenet_forward.1} parent=55 // pred_fallthru
          _
      $region56: #{lenet_forward.1} parent=5 // pred_fallthru
        _
      %p339 = scmp.le.s32.totalorder 1, %s20
      %p340 = scmp.lt.s32.totalorder %s20, 3
      %p341 = pnand %p339, %p340
      %p342 = pneg %p341
      // Predicated region
      $region61: #{lenet_forward.1} parent=5 // pred_check
        _
      $region62: #{lenet_forward.1} parent=5 // pred_check_branch
        %344 = sbr.rel (%p341) target = $region64
      $region63: #{lenet_forward.1} parent=5 // pred_region
        %s345 = ssub.s32 %s20, 1
        %p346 = scmp.lt.s32.totalorder %s25, 1
        %s347 = scalar_select %p346, %s25, 1
        %s348 = smul.addr %s347, 4
        %s349 = smul.addr %s348, 8
        %s350 = scalar_lea.vmem %s0, %s349
        %p351 = pneg %p46
        %p352 = pneg %p43
        %p353 = pneg %p67
        %p354 = pneg %p64
        %p355 = pneg %p88
        %p356 = pneg %p85
        %p357 = pneg %p109
        %p358 = pneg %p106
        %p359 = pneg %p130
        %p360 = pneg %p127
        %p361 = pneg %p151
        %p362 = pneg %p148
        %p363 = pneg %p172
        %p364 = pneg %p169
        %p365 = pneg %p193
        %p366 = pneg %p190
        %p367 = pneg %p214
        %p368 = pneg %p211
        %p369 = pneg %p235
        %p370 = pneg %p232
        %p371 = pneg %p256
        %p372 = pneg %p253
        %p373 = pneg %p282
        %p374 = pneg %p279
        %s375 = sand.u32 %s269, 1
        %s376 = scalar_lea.sflag [#allocation3], %s375
        %s377 = sand.u32 %s269, 1
        %s378 = scalar_lea.vmem [#allocation2], %s377
        %p379 = scmp.lt.s32.totalorder %s25, 1
        %s380 = scalar_select %p379, %s25, 1
        %s381 = smul.addr %s380, 4
        %s382 = smul.addr %s381, 8
        %s383 = scalar_lea.vmem %s0, %s382
        %v384 = vld [vmem:[%s383] sm:$0xff]
        %v385 = vld [vmem:[%s383 + $0x8] sm:$0xff]
        %v386 = vld [vmem:[%s383 + $0x10] sm:$0xff]
        %v387 = vld [vmem:[%s383 + $0x18] sm:$0xff]
        %v388 = vld [vmem:[%s1] sm:$0xff]
        %v389 = vld [vmem:[%s1 + $0x8] sm:$0xff]
        %v390 = vld [vmem:[%s1 + $0x10] sm:$0xff]
        %v391 = vld [vmem:[%s1 + $0x18] sm:$0xff]
        %s392 = scalar_lea.vmem %s1, 32
        %v393 = vld [vmem:[%s392] sm:$0xff]
        %v394 = vld [vmem:[%s392 + $0x8] sm:$0xff]
        %v395 = vld [vmem:[%s392 + $0x10] sm:$0xff]
        %v396 = vld [vmem:[%s392 + $0x18] sm:$0xff]
        %vm401 = vcmask 1046528
        %v402 = vrot.slane %v384, 1
        %v403 = vrot.slane %v385, 1
        %v404 = vsel %vm401, %v402, %v403
        %v405 = vrot.slane %v386, 1
        %v406 = vsel %vm401, %v403, %v405
        %v407 = vrot.slane %v387, 1
        %v408 = vsel %vm401, %v405, %v407
        %vm409 = vcmask 261120
        %v410 = vsel %vm409, %v404, 0
        %v412 = vsel %vm409, %v406, 0
        %v414 = vsel %vm409, %v408, 0
        %v416 = vsel %vm409, %v407, 0
        %418 = vmatprep.subr.mxu0 0.0
        %419 = vmatpush1.msra.mxu0 %v393
        %420 = vmatprep.subr.mxu0 0.0
        %421 = vmatpush1.msra.mxu0 %v394
        %422 = vmatprep.subr.mxu0 0.0
        %423 = vmatpush1.msra.mxu0 %v395
        %424 = vmatprep.subr.mxu0 0.0
        %425 = vmatpush1.msra.mxu0 %v396
        %426 = vmatprep.subr.mxu0 0.0
        %427 = vmatpush1.msra.mxu0 0.0
        %428 = vmatprep.subr.mxu0 0.0
        %429 = vmatpush1.msra.mxu0 0.0
        %430 = vmatprep.subr.mxu0 0.0
        %431 = vmatpush1.msra.mxu0 0.0
        %432 = vmatprep.subr.mxu0 0.0
        %433 = vmatpush1.msra.mxu0 0.0
        %434 = vmatprep.subr.mxu0 0.0
        %435 = vmatpush1.msra.mxu0 0.0
        %436 = vmatprep.subr.mxu0 0.0
        %437 = vmatpush1.msra.mxu0 0.0
        %438 = vmatprep.subr.mxu0 0.0
        %439 = vmatpush1.msra.mxu0 0.0
        %440 = vmatprep.subr.mxu0 0.0
        %441 = vmatpush1.msra.mxu0 0.0
        %442 = vmatprep.subr.mxu0 0.0
        %443 = vmatpush1.msra.mxu0 0.0
        %444 = vmatprep.subr.mxu0 0.0
        %445 = vmatpush1.msra.mxu0 0.0
        %446 = vmatprep.subr.mxu0 0.0
        %447 = vmatpush1.msra.mxu0 0.0
        %448 = vmatprep.subr.mxu0 0.0
        %449 = vmatpush1.msra.mxu0 0.0
        %450 = vmatprep.subr.mxu0 0.0
        %451 = vmatpush1.msra.mxu0 0.0
        %452 = vmatprep.subr.mxu0 0.0
        %453 = vmatpush1.msra.mxu0 0.0
        %454 = vmatprep.subr.mxu0 0.0
        %455 = vmatpush1.msra.mxu0 0.0
        %456 = vmatprep.subr.mxu0 0.0
        %457 = vmatpush1.msra.mxu0 0.0
        %458 = vmatprep.subr.mxu0 0.0
        %459 = vmatpush1.msra.mxu0 0.0
        %460 = vmatprep.subr.mxu0 0.0
        %461 = vmatpush1.msra.mxu0 0.0
        %462 = vmatprep.subr.mxu0 0.0
        %463 = vmatpush1.msra.mxu0 0.0
        %464 = vmatprep.subr.mxu0 0.0
        %465 = vmatpush1.msra.mxu0 0.0
        %466 = vmatprep.subr.mxu0 0.0
        %467 = vmatpush1.msra.mxu0 0.0
        %468 = vmatprep.subr.mxu0 0.0
        %469 = vmatpush1.msra.mxu0 0.0
        %470 = vmatprep.subr.mxu0 0.0
        %471 = vmatpush1.msra.mxu0 0.0
        %472 = vmatprep.subr.mxu0 0.0
        %473 = vmatpush1.msra.mxu0 0.0
        %474 = vmatprep.subr.mxu0 0.0
        %475 = vmatpush1.msra.mxu0 0.0
        %476 = vmatprep.subr.mxu0 0.0
        %477 = vmatpush1.msra.mxu0 0.0
        %478 = vmatprep.subr.mxu0 0.0
        %479 = vmatpush1.msra.mxu0 0.0
        %480 = vmatprep.subr.mxu0 0.0
        %481 = vmatpush1.msra.mxu0 0.0
        %482 = vmatprep.mubr.f32.mxu0 0.0
        %483 = vmatmul.mubr.f32.gmra.mrb[0].mxu0 %v410
        %v484 = vpop.f32.mrb[0].mxu0
        %v485 = vadd.f32 0.0, %v484
        %v486 = vpop.f32.mrb[0].mxu0
        %487 = vmatprep.mubr.f32.mxu0 0.0
        %488 = vmatmul.mubr.f32.gmra.mrb[0].mxu0 %v412
        %v489 = vpop.f32.mrb[0].mxu0
        %v490 = vadd.f32 0.0, %v489
        %v491 = vpop.f32.mrb[0].mxu0
        %492 = vmatprep.mubr.f32.mxu0 0.0
        %493 = vmatmul.mubr.f32.gmra.mrb[0].mxu0 %v414
        %v494 = vpop.f32.mrb[0].mxu0
        %v495 = vadd.f32 0.0, %v494
        %v496 = vpop.f32.mrb[0].mxu0
        %497 = vmatprep.mubr.f32.mxu0 0.0
        %498 = vmatmul.mubr.f32.gmra.mrb[0].mxu0 %v416
        %v499 = vpop.f32.mrb[0].mxu0
        %v500 = vadd.f32 0.0, %v499
        %v501 = vpop.f32.mrb[0].mxu0
        %502 = vdwg.mxu0
        %v503 = vsel %vm409, %v384, 0
        %v505 = vsel %vm409, %v385, 0
        %v507 = vsel %vm409, %v386, 0
        %v509 = vsel %vm409, %v387, 0
        %511 = vmatprep.subr.mxu0 0.0
        %512 = vmatpush1.msra.mxu0 %v388
        %513 = vmatprep.subr.mxu0 0.0
        %514 = vmatpush1.msra.mxu0 %v389
        %515 = vmatprep.subr.mxu0 0.0
        %516 = vmatpush1.msra.mxu0 %v390
        %517 = vmatprep.subr.mxu0 0.0
        %518 = vmatpush1.msra.mxu0 %v391
        %519 = vmatprep.subr.mxu0 0.0
        %520 = vmatpush1.msra.mxu0 0.0
        %521 = vmatprep.subr.mxu0 0.0
        %522 = vmatpush1.msra.mxu0 0.0
        %523 = vmatprep.subr.mxu0 0.0
        %524 = vmatpush1.msra.mxu0 0.0
        %525 = vmatprep.subr.mxu0 0.0
        %526 = vmatpush1.msra.mxu0 0.0
        %527 = vmatprep.subr.mxu0 0.0
        %528 = vmatpush1.msra.mxu0 0.0
        %529 = vmatprep.subr.mxu0 0.0
        %530 = vmatpush1.msra.mxu0 0.0
        %531 = vmatprep.subr.mxu0 0.0
        %532 = vmatpush1.msra.mxu0 0.0
        %533 = vmatprep.subr.mxu0 0.0
        %534 = vmatpush1.msra.mxu0 0.0
        %535 = vmatprep.subr.mxu0 0.0
        %536 = vmatpush1.msra.mxu0 0.0
        %537 = vmatprep.subr.mxu0 0.0
        %538 = vmatpush1.msra.mxu0 0.0
        %539 = vmatprep.subr.mxu0 0.0
        %540 = vmatpush1.msra.mxu0 0.0
        %541 = vmatprep.subr.mxu0 0.0
        %542 = vmatpush1.msra.mxu0 0.0
        %543 = vmatprep.subr.mxu0 0.0
        %544 = vmatpush1.msra.mxu0 0.0
        %545 = vmatprep.subr.mxu0 0.0
        %546 = vmatpush1.msra.mxu0 0.0
        %547 = vmatprep.subr.mxu0 0.0
        %548 = vmatpush1.msra.mxu0 0.0
        %549 = vmatprep.subr.mxu0 0.0
        %550 = vmatpush1.msra.mxu0 0.0
        %551 = vmatprep.subr.mxu0 0.0
        %552 = vmatpush1.msra.mxu0 0.0
        %553 = vmatprep.subr.mxu0 0.0
        %554 = vmatpush1.msra.mxu0 0.0
        %555 = vmatprep.subr.mxu0 0.0
        %556 = vmatpush1.msra.mxu0 0.0
        %557 = vmatprep.subr.mxu0 0.0
        %558 = vmatpush1.msra.mxu0 0.0
        %559 = vmatprep.subr.mxu0 0.0
        %560 = vmatpush1.msra.mxu0 0.0
        %561 = vmatprep.subr.mxu0 0.0
        %562 = vmatpush1.msra.mxu0 0.0
        %563 = vmatprep.subr.mxu0 0.0
        %564 = vmatpush1.msra.mxu0 0.0
        %565 = vmatprep.subr.mxu0 0.0
        %566 = vmatpush1.msra.mxu0 0.0
        %567 = vmatprep.subr.mxu0 0.0
        %568 = vmatpush1.msra.mxu0 0.0
        %569 = vmatprep.subr.mxu0 0.0
        %570 = vmatpush1.msra.mxu0 0.0
        %571 = vmatprep.subr.mxu0 0.0
        %572 = vmatpush1.msra.mxu0 0.0
        %573 = vmatprep.subr.mxu0 0.0
        %574 = vmatpush1.msra.mxu0 0.0
        %575 = vmatprep.mubr.f32.mxu0 0.0
        %576 = vmatmul.mubr.f32.gmra.mrb[0].mxu0 %v503
        %v577 = vpop.f32.mrb[0].mxu0
        %v578 = vadd.f32 %v485, %v577
        %v579 = vpop.f32.mrb[0].mxu0
        %580 = vmatprep.mubr.f32.mxu0 0.0
        %581 = vmatmul.mubr.f32.gmra.mrb[0].mxu0 %v505
        %v582 = vpop.f32.mrb[0].mxu0
        %v583 = vadd.f32 %v490, %v582
        %v584 = vpop.f32.mrb[0].mxu0
        %585 = vmatprep.mubr.f32.mxu0 0.0
        %586 = vmatmul.mubr.f32.gmra.mrb[0].mxu0 %v507
        %v587 = vpop.f32.mrb[0].mxu0
        %v588 = vadd.f32 %v495, %v587
        %v589 = vpop.f32.mrb[0].mxu0
        %590 = vmatprep.mubr.f32.mxu0 0.0
        %591 = vmatmul.mubr.f32.gmra.mrb[0].mxu0 %v509
        %v592 = vpop.f32.mrb[0].mxu0
        %v593 = vadd.f32 %v500, %v592
        %v594 = vpop.f32.mrb[0].mxu0
        %595 = vdwg.mxu0
        %s596 = scalar_lea.vmem %s1, 64
        %v597 = vld [vmem:[%s596] sm:$0xff]
        %v598 = vld [vmem:[%s596 + $0x8] sm:$0xff]
        %v599 = vld [vmem:[%s596 + $0x10] sm:$0xff]
        %v600 = vld [vmem:[%s596 + $0x18] sm:$0xff]
        %vm601 = vcmask 1045504
        %v602 = vrot.slane %v384, 2
        %v603 = vrot.slane %v385, 2
        %v604 = vsel %vm601, %v602, %v603
        %v605 = vrot.slane %v386, 2
        %v606 = vsel %vm601, %v603, %v605
        %v607 = vrot.slane %v387, 2
        %v608 = vsel %vm601, %v605, %v607
        %v609 = vsel %vm409, %v604, 0
        %v611 = vsel %vm409, %v606, 0
        %v613 = vsel %vm409, %v608, 0
        %v615 = vsel %vm409, %v607, 0
        %617 = vmatprep.subr.mxu0 0.0
        %618 = vmatpush1.msra.mxu0 %v597
        %619 = vmatprep.subr.mxu0 0.0
        %620 = vmatpush1.msra.mxu0 %v598
        %621 = vmatprep.subr.mxu0 0.0
        %622 = vmatpush1.msra.mxu0 %v599
        %623 = vmatprep.subr.mxu0 0.0
        %624 = vmatpush1.msra.mxu0 %v600
        %625 = vmatprep.subr.mxu0 0.0
        %626 = vmatpush1.msra.mxu0 0.0
        %627 = vmatprep.subr.mxu0 0.0
        %628 = vmatpush1.msra.mxu0 0.0
        %629 = vmatprep.subr.mxu0 0.0
        %630 = vmatpush1.msra.mxu0 0.0
        %631 = vmatprep.subr.mxu0 0.0
        %632 = vmatpush1.msra.mxu0 0.0
        %633 = vmatprep.subr.mxu0 0.0
        %634 = vmatpush1.msra.mxu0 0.0
        %635 = vmatprep.subr.mxu0 0.0
        %636 = vmatpush1.msra.mxu0 0.0
        %637 = vmatprep.subr.mxu0 0.0
        %638 = vmatpush1.msra.mxu0 0.0
        %639 = vmatprep.subr.mxu0 0.0
        %640 = vmatpush1.msra.mxu0 0.0
        %641 = vmatprep.subr.mxu0 0.0
        %642 = vmatpush1.msra.mxu0 0.0
        %643 = vmatprep.subr.mxu0 0.0
        %644 = vmatpush1.msra.mxu0 0.0
        %645 = vmatprep.subr.mxu0 0.0
        %646 = vmatpush1.msra.mxu0 0.0
        %647 = vmatprep.subr.mxu0 0.0
        %648 = vmatpush1.msra.mxu0 0.0
        %649 = vmatprep.subr.mxu0 0.0
        %650 = vmatpush1.msra.mxu0 0.0
        %651 = vmatprep.subr.mxu0 0.0
        %652 = vmatpush1.msra.mxu0 0.0
        %653 = vmatprep.subr.mxu0 0.0
        %654 = vmatpush1.msra.mxu0 0.0
        %655 = vmatprep.subr.mxu0 0.0
        %656 = vmatpush1.msra.mxu0 0.0
        %657 = vmatprep.subr.mxu0 0.0
        %658 = vmatpush1.msra.mxu0 0.0
        %659 = vmatprep.subr.mxu0 0.0
        %660 = vmatpush1.msra.mxu0 0.0
        %661 = vmatprep.subr.mxu0 0.0
        %662 = vmatpush1.msra.mxu0 0.0
        %663 = vmatprep.subr.mxu0 0.0
        %664 = vmatpush1.msra.mxu0 0.0
        %665 = vmatprep.subr.mxu0 0.0
        %666 = vmatpush1.msra.mxu0 0.0
        %667 = vmatprep.subr.mxu0 0.0
        %668 = vmatpush1.msra.mxu0 0.0
        %669 = vmatprep.subr.mxu0 0.0
        %670 = vmatpush1.msra.mxu0 0.0
        %671 = vmatprep.subr.mxu0 0.0
        %672 = vmatpush1.msra.mxu0 0.0
        %673 = vmatprep.subr.mxu0 0.0
        %674 = vmatpush1.msra.mxu0 0.0
        %675 = vmatprep.subr.mxu0 0.0
        %676 = vmatpush1.msra.mxu0 0.0
        %677 = vmatprep.subr.mxu0 0.0
        %678 = vmatpush1.msra.mxu0 0.0
        %679 = vmatprep.subr.mxu0 0.0
        %680 = vmatpush1.msra.mxu0 0.0
        %681 = vmatprep.mubr.f32.mxu0 0.0
        %682 = vmatmul.mubr.f32.gmra.mrb[0].mxu0 %v609
        %v683 = vpop.f32.mrb[0].mxu0
        %v684 = vadd.f32 0.0, %v683
        %v685 = vpop.f32.mrb[0].mxu0
        %686 = vmatprep.mubr.f32.mxu0 0.0
        %687 = vmatmul.mubr.f32.gmra.mrb[0].mxu0 %v611
        %v688 = vpop.f32.mrb[0].mxu0
        %v689 = vadd.f32 0.0, %v688
        %v690 = vpop.f32.mrb[0].mxu0
        %691 = vmatprep.mubr.f32.mxu0 0.0
        %692 = vmatmul.mubr.f32.gmra.mrb[0].mxu0 %v613
        %v693 = vpop.f32.mrb[0].mxu0
        %v694 = vadd.f32 0.0, %v693
        %v695 = vpop.f32.mrb[0].mxu0
        %696 = vmatprep.mubr.f32.mxu0 0.0
        %697 = vmatmul.mubr.f32.gmra.mrb[0].mxu0 %v615
        %v698 = vpop.f32.mrb[0].mxu0
        %v699 = vadd.f32 0.0, %v698
        %v700 = vpop.f32.mrb[0].mxu0
        %701 = vdwg.mxu0
        %v702 = vadd.f32 %v578, %v684
        %v703 = vadd.f32 %v583, %v689
        %v704 = vadd.f32 %v588, %v694
        %v705 = vadd.f32 %v593, %v699
        %s706 = scalar_lea.vmem %s1, 96
        %v707 = vld [vmem:[%s706] sm:$0xff]
        %v708 = vld [vmem:[%s706 + $0x8] sm:$0xff]
        %v709 = vld [vmem:[%s706 + $0x10] sm:$0xff]
        %v710 = vld [vmem:[%s706 + $0x18] sm:$0xff]
        %vm711 = vcmask 1044480
        %v712 = vrot.slane %v384, 3
        %v713 = vrot.slane %v385, 3
        %v714 = vsel %vm711, %v712, %v713
        %v715 = vrot.slane %v386, 3
        %v716 = vsel %vm711, %v713, %v715
        %v717 = vrot.slane %v387, 3
        %v718 = vsel %vm711, %v715, %v717
        %v719 = vsel %vm409, %v714, 0
        %v721 = vsel %vm409, %v716, 0
        %v723 = vsel %vm409, %v718, 0
        %v725 = vsel %vm409, %v717, 0
        %727 = vmatprep.subr.mxu0 0.0
        %728 = vmatpush1.msra.mxu0 %v707
        %729 = vmatprep.subr.mxu0 0.0
        %730 = vmatpush1.msra.mxu0 %v708
        %731 = vmatprep.subr.mxu0 0.0
        %732 = vmatpush1.msra.mxu0 %v709
        %733 = vmatprep.subr.mxu0 0.0
        %734 = vmatpush1.msra.mxu0 %v710
        %735 = vmatprep.subr.mxu0 0.0
        %736 = vmatpush1.msra.mxu0 0.0
        %737 = vmatprep.subr.mxu0 0.0
        %738 = vmatpush1.msra.mxu0 0.0
        %739 = vmatprep.subr.mxu0 0.0
        %740 = vmatpush1.msra.mxu0 0.0
        %741 = vmatprep.subr.mxu0 0.0
        %742 = vmatpush1.msra.mxu0 0.0
        %743 = vmatprep.subr.mxu0 0.0
        %744 = vmatpush1.msra.mxu0 0.0
        %745 = vmatprep.subr.mxu0 0.0
        %746 = vmatpush1.msra.mxu0 0.0
        %747 = vmatprep.subr.mxu0 0.0
        %748 = vmatpush1.msra.mxu0 0.0
        %749 = vmatprep.subr.mxu0 0.0
        %750 = vmatpush1.msra.mxu0 0.0
        %751 = vmatprep.subr.mxu0 0.0
        %752 = vmatpush1.msra.mxu0 0.0
        %753 = vmatprep.subr.mxu0 0.0
        %754 = vmatpush1.msra.mxu0 0.0
        %755 = vmatprep.subr.mxu0 0.0
        %756 = vmatpush1.msra.mxu0 0.0
        %757 = vmatprep.subr.mxu0 0.0
        %758 = vmatpush1.msra.mxu0 0.0
        %759 = vmatprep.subr.mxu0 0.0
        %760 = vmatpush1.msra.mxu0 0.0
        %761 = vmatprep.subr.mxu0 0.0
        %762 = vmatpush1.msra.mxu0 0.0
        %763 = vmatprep.subr.mxu0 0.0
        %764 = vmatpush1.msra.mxu0 0.0
        %765 = vmatprep.subr.mxu0 0.0
        %766 = vmatpush1.msra.mxu0 0.0
        %767 = vmatprep.subr.mxu0 0.0
        %768 = vmatpush1.msra.mxu0 0.0
        %769 = vmatprep.subr.mxu0 0.0
        %770 = vmatpush1.msra.mxu0 0.0
        %771 = vmatprep.subr.mxu0 0.0
        %772 = vmatpush1.msra.mxu0 0.0
        %773 = vmatprep.subr.mxu0 0.0
        %774 = vmatpush1.msra.mxu0 0.0
        %775 = vmatprep.subr.mxu0 0.0
        %776 = vmatpush1.msra.mxu0 0.0
        %777 = vmatprep.subr.mxu0 0.0
        %778 = vmatpush1.msra.mxu0 0.0
        %779 = vmatprep.subr.mxu0 0.0
        %780 = vmatpush1.msra.mxu0 0.0
        %781 = vmatprep.subr.mxu0 0.0
        %782 = vmatpush1.msra.mxu0 0.0
        %783 = vmatprep.subr.mxu0 0.0
        %784 = vmatpush1.msra.mxu0 0.0
        %785 = vmatprep.subr.mxu0 0.0
        %786 = vmatpush1.msra.mxu0 0.0
        %787 = vmatprep.subr.mxu0 0.0
        %788 = vmatpush1.msra.mxu0 0.0
        %789 = vmatprep.subr.mxu0 0.0
        %790 = vmatpush1.msra.mxu0 0.0
        %791 = vmatprep.mubr.f32.mxu0 0.0
        %792 = vmatmul.mubr.f32.gmra.mrb[0].mxu0 %v719
        %v793 = vpop.f32.mrb[0].mxu0
        %v794 = vadd.f32 0.0, %v793
        %v795 = vpop.f32.mrb[0].mxu0
        %796 = vmatprep.mubr.f32.mxu0 0.0
        %797 = vmatmul.mubr.f32.gmra.mrb[0].mxu0 %v721
        %v798 = vpop.f32.mrb[0].mxu0
        %v799 = vadd.f32 0.0, %v798
        %v800 = vpop.f32.mrb[0].mxu0
        %801 = vmatprep.mubr.f32.mxu0 0.0
        %802 = vmatmul.mubr.f32.gmra.mrb[0].mxu0 %v723
        %v803 = vpop.f32.mrb[0].mxu0
        %v804 = vadd.f32 0.0, %v803
        %v805 = vpop.f32.mrb[0].mxu0
        %806 = vmatprep.mubr.f32.mxu0 0.0
        %807 = vmatmul.mubr.f32.gmra.mrb[0].mxu0 %v725
        %v808 = vpop.f32.mrb[0].mxu0
        %v809 = vadd.f32 0.0, %v808
        %v810 = vpop.f32.mrb[0].mxu0
        %811 = vdwg.mxu0
        %v812 = vadd.f32 %v702, %v794
        %v813 = vadd.f32 %v703, %v799
        %v814 = vadd.f32 %v704, %v804
        %v815 = vadd.f32 %v705, %v809
        %s816 = scalar_lea.vmem %s1, 128
        %v817 = vld [vmem:[%s816] sm:$0xff]
        %v818 = vld [vmem:[%s816 + $0x8] sm:$0xff]
        %v819 = vld [vmem:[%s816 + $0x10] sm:$0xff]
        %v820 = vld [vmem:[%s816 + $0x18] sm:$0xff]
        %vm821 = vcmask 1043456
        %v822 = vrot.slane %v384, 4
        %v823 = vrot.slane %v385, 4
        %v824 = vsel %vm821, %v822, %v823
        %v825 = vrot.slane %v386, 4
        %v826 = vsel %vm821, %v823, %v825
        %v827 = vrot.slane %v387, 4
        %v828 = vsel %vm821, %v825, %v827
        %v829 = vsel %vm409, %v824, 0
        %v831 = vsel %vm409, %v826, 0
        %v833 = vsel %vm409, %v828, 0
        %v835 = vsel %vm409, %v827, 0
        %837 = vmatprep.subr.mxu0 0.0
        %838 = vmatpush1.msra.mxu0 %v817
        %839 = vmatprep.subr.mxu0 0.0
        %840 = vmatpush1.msra.mxu0 %v818
        %841 = vmatprep.subr.mxu0 0.0
        %842 = vmatpush1.msra.mxu0 %v819
        %843 = vmatprep.subr.mxu0 0.0
        %844 = vmatpush1.msra.mxu0 %v820
        %845 = vmatprep.subr.mxu0 0.0
        %846 = vmatpush1.msra.mxu0 0.0
        %847 = vmatprep.subr.mxu0 0.0
        %848 = vmatpush1.msra.mxu0 0.0
        %849 = vmatprep.subr.mxu0 0.0
        %850 = vmatpush1.msra.mxu0 0.0
        %851 = vmatprep.subr.mxu0 0.0
        %852 = vmatpush1.msra.mxu0 0.0
        %853 = vmatprep.subr.mxu0 0.0
        %854 = vmatpush1.msra.mxu0 0.0
        %855 = vmatprep.subr.mxu0 0.0
        %856 = vmatpush1.msra.mxu0 0.0
        %857 = vmatprep.subr.mxu0 0.0
        %858 = vmatpush1.msra.mxu0 0.0
        %859 = vmatprep.subr.mxu0 0.0
        %860 = vmatpush1.msra.mxu0 0.0
        %861 = vmatprep.subr.mxu0 0.0
        %862 = vmatpush1.msra.mxu0 0.0
        %863 = vmatprep.subr.mxu0 0.0
        %864 = vmatpush1.msra.mxu0 0.0
        %865 = vmatprep.subr.mxu0 0.0
        %866 = vmatpush1.msra.mxu0 0.0
        %867 = vmatprep.subr.mxu0 0.0
        %868 = vmatpush1.msra.mxu0 0.0
        %869 = vmatprep.subr.mxu0 0.0
        %870 = vmatpush1.msra.mxu0 0.0
        %871 = vmatprep.subr.mxu0 0.0
        %872 = vmatpush1.msra.mxu0 0.0
        %873 = vmatprep.subr.mxu0 0.0
        %874 = vmatpush1.msra.mxu0 0.0
        %875 = vmatprep.subr.mxu0 0.0
        %876 = vmatpush1.msra.mxu0 0.0
        %877 = vmatprep.subr.mxu0 0.0
        %878 = vmatpush1.msra.mxu0 0.0
        %879 = vmatprep.subr.mxu0 0.0
        %880 = vmatpush1.msra.mxu0 0.0
        %881 = vmatprep.subr.mxu0 0.0
        %882 = vmatpush1.msra.mxu0 0.0
        %883 = vmatprep.subr.mxu0 0.0
        %884 = vmatpush1.msra.mxu0 0.0
        %885 = vmatprep.subr.mxu0 0.0
        %886 = vmatpush1.msra.mxu0 0.0
        %887 = vmatprep.subr.mxu0 0.0
        %888 = vmatpush1.msra.mxu0 0.0
        %889 = vmatprep.subr.mxu0 0.0
        %890 = vmatpush1.msra.mxu0 0.0
        %891 = vmatprep.subr.mxu0 0.0
        %892 = vmatpush1.msra.mxu0 0.0
        %893 = vmatprep.subr.mxu0 0.0
        %894 = vmatpush1.msra.mxu0 0.0
        %895 = vmatprep.subr.mxu0 0.0
        %896 = vmatpush1.msra.mxu0 0.0
        %897 = vmatprep.subr.mxu0 0.0
        %898 = vmatpush1.msra.mxu0 0.0
        %899 = vmatprep.subr.mxu0 0.0
        %900 = vmatpush1.msra.mxu0 0.0
        %901 = vmatprep.mubr.f32.mxu0 0.0
        %902 = vmatmul.mubr.f32.gmra.mrb[0].mxu0 %v829
        %v903 = vpop.f32.mrb[0].mxu0
        %v904 = vadd.f32 0.0, %v903
        %v905 = vpop.f32.mrb[0].mxu0
        %906 = vmatprep.mubr.f32.mxu0 0.0
        %907 = vmatmul.mubr.f32.gmra.mrb[0].mxu0 %v831
        %v908 = vpop.f32.mrb[0].mxu0
        %v909 = vadd.f32 0.0, %v908
        %v910 = vpop.f32.mrb[0].mxu0
        %911 = vmatprep.mubr.f32.mxu0 0.0
        %912 = vmatmul.mubr.f32.gmra.mrb[0].mxu0 %v833
        %v913 = vpop.f32.mrb[0].mxu0
        %v914 = vadd.f32 0.0, %v913
        %v915 = vpop.f32.mrb[0].mxu0
        %916 = vmatprep.mubr.f32.mxu0 0.0
        %917 = vmatmul.mubr.f32.gmra.mrb[0].mxu0 %v835
        %v918 = vpop.f32.mrb[0].mxu0
        %v919 = vadd.f32 0.0, %v918
        %v920 = vpop.f32.mrb[0].mxu0
        %921 = vdwg.mxu0
        %v922 = vadd.f32 %v812, %v904
        %v923 = vadd.f32 %v813, %v909
        %v924 = vadd.f32 %v814, %v914
        %v925 = vadd.f32 %v815, %v919
        %s926 = scalar_lea.vmem %s1, 160
        %v927 = vld [vmem:[%s926] sm:$0xff]
        %v928 = vld [vmem:[%s926 + $0x8] sm:$0xff]
        %v929 = vld [vmem:[%s926 + $0x10] sm:$0xff]
        %v930 = vld [vmem:[%s926 + $0x18] sm:$0xff]
        %s931 = scalar_lea.vmem %s1, 192
        %v932 = vld [vmem:[%s931] sm:$0xff]
        %v933 = vld [vmem:[%s931 + $0x8] sm:$0xff]
        %v934 = vld [vmem:[%s931 + $0x10] sm:$0xff]
        %v935 = vld [vmem:[%s931 + $0x18] sm:$0xff]
        %936 = vmatprep.subr.mxu0 0.0
        %937 = vmatpush1.msra.mxu0 %v932
        %938 = vmatprep.subr.mxu0 0.0
        %939 = vmatpush1.msra.mxu0 %v933
        %940 = vmatprep.subr.mxu0 0.0
        %941 = vmatpush1.msra.mxu0 %v934
        %942 = vmatprep.subr.mxu0 0.0
        %943 = vmatpush1.msra.mxu0 %v935
        %944 = vmatprep.subr.mxu0 0.0
        %945 = vmatpush1.msra.mxu0 0.0
        %946 = vmatprep.subr.mxu0 0.0
        %947 = vmatpush1.msra.mxu0 0.0
        %948 = vmatprep.subr.mxu0 0.0
        %949 = vmatpush1.msra.mxu0 0.0
        %950 = vmatprep.subr.mxu0 0.0
        %951 = vmatpush1.msra.mxu0 0.0
        %952 = vmatprep.subr.mxu0 0.0
        %953 = vmatpush1.msra.mxu0 0.0
        %954 = vmatprep.subr.mxu0 0.0
        %955 = vmatpush1.msra.mxu0 0.0
        %956 = vmatprep.subr.mxu0 0.0
        %957 = vmatpush1.msra.mxu0 0.0
        %958 = vmatprep.subr.mxu0 0.0
        %959 = vmatpush1.msra.mxu0 0.0
        %960 = vmatprep.subr.mxu0 0.0
        %961 = vmatpush1.msra.mxu0 0.0
        %962 = vmatprep.subr.mxu0 0.0
        %963 = vmatpush1.msra.mxu0 0.0
        %964 = vmatprep.subr.mxu0 0.0
        %965 = vmatpush1.msra.mxu0 0.0
        %966 = vmatprep.subr.mxu0 0.0
        %967 = vmatpush1.msra.mxu0 0.0
        %968 = vmatprep.subr.mxu0 0.0
        %969 = vmatpush1.msra.mxu0 0.0
        %970 = vmatprep.subr.mxu0 0.0
        %971 = vmatpush1.msra.mxu0 0.0
        %972 = vmatprep.subr.mxu0 0.0
        %973 = vmatpush1.msra.mxu0 0.0
        %974 = vmatprep.subr.mxu0 0.0
        %975 = vmatpush1.msra.mxu0 0.0
        %976 = vmatprep.subr.mxu0 0.0
        %977 = vmatpush1.msra.mxu0 0.0
        %978 = vmatprep.subr.mxu0 0.0
        %979 = vmatpush1.msra.mxu0 0.0
        %980 = vmatprep.subr.mxu0 0.0
        %981 = vmatpush1.msra.mxu0 0.0
        %982 = vmatprep.subr.mxu0 0.0
        %983 = vmatpush1.msra.mxu0 0.0
        %984 = vmatprep.subr.mxu0 0.0
        %985 = vmatpush1.msra.mxu0 0.0
        %986 = vmatprep.subr.mxu0 0.0
        %987 = vmatpush1.msra.mxu0 0.0
        %988 = vmatprep.subr.mxu0 0.0
        %989 = vmatpush1.msra.mxu0 0.0
        %990 = vmatprep.subr.mxu0 0.0
        %991 = vmatpush1.msra.mxu0 0.0
        %992 = vmatprep.subr.mxu0 0.0
        %993 = vmatpush1.msra.mxu0 0.0
        %994 = vmatprep.subr.mxu0 0.0
        %995 = vmatpush1.msra.mxu0 0.0
        %996 = vmatprep.subr.mxu0 0.0
        %997 = vmatpush1.msra.mxu0 0.0
        %998 = vmatprep.subr.mxu0 0.0
        %999 = vmatpush1.msra.mxu0 0.0
        %1000 = vmatprep.mubr.f32.mxu0 0.0
        %1001 = vmatmul.mubr.f32.gmra.mrb[0].mxu0 %v410
        %v1002 = vpop.f32.mrb[0].mxu0
        %v1003 = vadd.f32 0.0, %v1002
        %v1004 = vpop.f32.mrb[0].mxu0
        %1005 = vmatprep.mubr.f32.mxu0 0.0
        %1006 = vmatmul.mubr.f32.gmra.mrb[0].mxu0 %v412
        %v1007 = vpop.f32.mrb[0].mxu0
        %v1008 = vadd.f32 0.0, %v1007
        %v1009 = vpop.f32.mrb[0].mxu0
        %1010 = vmatprep.mubr.f32.mxu0 0.0
        %1011 = vmatmul.mubr.f32.gmra.mrb[0].mxu0 %v414
        %v1012 = vpop.f32.mrb[0].mxu0
        %v1013 = vadd.f32 0.0, %v1012
        %v1014 = vpop.f32.mrb[0].mxu0
        %1015 = vmatprep.mubr.f32.mxu0 0.0
        %1016 = vmatmul.mubr.f32.gmra.mrb[0].mxu0 %v416
        %v1017 = vpop.f32.mrb[0].mxu0
        %v1018 = vadd.f32 0.0, %v1017
        %v1019 = vpop.f32.mrb[0].mxu0
        %1020 = vdwg.mxu0
        %1021 = vmatprep.subr.mxu0 0.0
        %1022 = vmatpush1.msra.mxu0 %v927
        %1023 = vmatprep.subr.mxu0 0.0
        %1024 = vmatpush1.msra.mxu0 %v928
        %1025 = vmatprep.subr.mxu0 0.0
        %1026 = vmatpush1.msra.mxu0 %v929
        %1027 = vmatprep.subr.mxu0 0.0
        %1028 = vmatpush1.msra.mxu0 %v930
        %1029 = vmatprep.subr.mxu0 0.0
        %1030 = vmatpush1.msra.mxu0 0.0
        %1031 = vmatprep.subr.mxu0 0.0
        %1032 = vmatpush1.msra.mxu0 0.0
        %1033 = vmatprep.subr.mxu0 0.0
        %1034 = vmatpush1.msra.mxu0 0.0
        %1035 = vmatprep.subr.mxu0 0.0
        %1036 = vmatpush1.msra.mxu0 0.0
        %1037 = vmatprep.subr.mxu0 0.0
        %1038 = vmatpush1.msra.mxu0 0.0
        %1039 = vmatprep.subr.mxu0 0.0
        %1040 = vmatpush1.msra.mxu0 0.0
        %1041 = vmatprep.subr.mxu0 0.0
        %1042 = vmatpush1.msra.mxu0 0.0
        %1043 = vmatprep.subr.mxu0 0.0
        %1044 = vmatpush1.msra.mxu0 0.0
        %1045 = vmatprep.subr.mxu0 0.0
        %1046 = vmatpush1.msra.mxu0 0.0
        %1047 = vmatprep.subr.mxu0 0.0
        %1048 = vmatpush1.msra.mxu0 0.0
        %1049 = vmatprep.subr.mxu0 0.0
        %1050 = vmatpush1.msra.mxu0 0.0
        %1051 = vmatprep.subr.mxu0 0.0
        %1052 = vmatpush1.msra.mxu0 0.0
        %1053 = vmatprep.subr.mxu0 0.0
        %1054 = vmatpush1.msra.mxu0 0.0
        %1055 = vmatprep.subr.mxu0 0.0
        %1056 = vmatpush1.msra.mxu0 0.0
        %1057 = vmatprep.subr.mxu0 0.0
        %1058 = vmatpush1.msra.mxu0 0.0
        %1059 = vmatprep.subr.mxu0 0.0
        %1060 = vmatpush1.msra.mxu0 0.0
        %1061 = vmatprep.subr.mxu0 0.0
        %1062 = vmatpush1.msra.mxu0 0.0
        %1063 = vmatprep.subr.mxu0 0.0
        %1064 = vmatpush1.msra.mxu0 0.0
        %1065 = vmatprep.subr.mxu0 0.0
        %1066 = vmatpush1.msra.mxu0 0.0
        %1067 = vmatprep.subr.mxu0 0.0
        %1068 = vmatpush1.msra.mxu0 0.0
        %1069 = vmatprep.subr.mxu0 0.0
        %1070 = vmatpush1.msra.mxu0 0.0
        %1071 = vmatprep.subr.mxu0 0.0
        %1072 = vmatpush1.msra.mxu0 0.0
        %1073 = vmatprep.subr.mxu0 0.0
        %1074 = vmatpush1.msra.mxu0 0.0
        %1075 = vmatprep.subr.mxu0 0.0
        %1076 = vmatpush1.msra.mxu0 0.0
        %1077 = vmatprep.subr.mxu0 0.0
        %1078 = vmatpush1.msra.mxu0 0.0
        %1079 = vmatprep.subr.mxu0 0.0
        %1080 = vmatpush1.msra.mxu0 0.0
        %1081 = vmatprep.subr.mxu0 0.0
        %1082 = vmatpush1.msra.mxu0 0.0
        %1083 = vmatprep.subr.mxu0 0.0
        %1084 = vmatpush1.msra.mxu0 0.0
        %1085 = vmatprep.mubr.f32.mxu0 0.0
        %1086 = vmatmul.mubr.f32.gmra.mrb[0].mxu0 %v503
        %v1087 = vpop.f32.mrb[0].mxu0
        %v1088 = vadd.f32 %v1003, %v1087
        %v1089 = vpop.f32.mrb[0].mxu0
        %1090 = vmatprep.mubr.f32.mxu0 0.0
        %1091 = vmatmul.mubr.f32.gmra.mrb[0].mxu0 %v505
        %v1092 = vpop.f32.mrb[0].mxu0
        %v1093 = vadd.f32 %v1008, %v1092
        %v1094 = vpop.f32.mrb[0].mxu0
        %1095 = vmatprep.mubr.f32.mxu0 0.0
        %1096 = vmatmul.mubr.f32.gmra.mrb[0].mxu0 %v507
        %v1097 = vpop.f32.mrb[0].mxu0
        %v1098 = vadd.f32 %v1013, %v1097
        %v1099 = vpop.f32.mrb[0].mxu0
        %1100 = vmatprep.mubr.f32.mxu0 0.0
        %1101 = vmatmul.mubr.f32.gmra.mrb[0].mxu0 %v509
        %v1102 = vpop.f32.mrb[0].mxu0
        %v1103 = vadd.f32 %v1018, %v1102
        %v1104 = vpop.f32.mrb[0].mxu0
        %1105 = vdwg.mxu0
        %s1106 = scalar_lea.vmem %s1, 224
        %v1107 = vld [vmem:[%s1106] sm:$0xff]
        %v1108 = vld [vmem:[%s1106 + $0x8] sm:$0xff]
        %v1109 = vld [vmem:[%s1106 + $0x10] sm:$0xff]
        %v1110 = vld [vmem:[%s1106 + $0x18] sm:$0xff]
        %1111 = vmatprep.subr.mxu0 0.0
        %1112 = vmatpush1.msra.mxu0 %v1107
        %1113 = vmatprep.subr.mxu0 0.0
        %1114 = vmatpush1.msra.mxu0 %v1108
        %1115 = vmatprep.subr.mxu0 0.0
        %1116 = vmatpush1.msra.mxu0 %v1109
        %1117 = vmatprep.subr.mxu0 0.0
        %1118 = vmatpush1.msra.mxu0 %v1110
        %1119 = vmatprep.subr.mxu0 0.0
        %1120 = vmatpush1.msra.mxu0 0.0
        %1121 = vmatprep.subr.mxu0 0.0
        %1122 = vmatpush1.msra.mxu0 0.0
        %1123 = vmatprep.subr.mxu0 0.0
        %1124 = vmatpush1.msra.mxu0 0.0
        %1125 = vmatprep.subr.mxu0 0.0
        %1126 = vmatpush1.msra.mxu0 0.0
        %1127 = vmatprep.subr.mxu0 0.0
        %1128 = vmatpush1.msra.mxu0 0.0
        %1129 = vmatprep.subr.mxu0 0.0
        %1130 = vmatpush1.msra.mxu0 0.0
        %1131 = vmatprep.subr.mxu0 0.0
        %1132 = vmatpush1.msra.mxu0 0.0
        %1133 = vmatprep.subr.mxu0 0.0
        %1134 = vmatpush1.msra.mxu0 0.0
        %1135 = vmatprep.subr.mxu0 0.0
        %1136 = vmatpush1.msra.mxu0 0.0
        %1137 = vmatprep.subr.mxu0 0.0
        %1138 = vmatpush1.msra.mxu0 0.0
        %1139 = vmatprep.subr.mxu0 0.0
        %1140 = vmatpush1.msra.mxu0 0.0
        %1141 = vmatprep.subr.mxu0 0.0
        %1142 = vmatpush1.msra.mxu0 0.0
        %1143 = vmatprep.subr.mxu0 0.0
        %1144 = vmatpush1.msra.mxu0 0.0
        %1145 = vmatprep.subr.mxu0 0.0
        %1146 = vmatpush1.msra.mxu0 0.0
        %1147 = vmatprep.subr.mxu0 0.0
        %1148 = vmatpush1.msra.mxu0 0.0
        %1149 = vmatprep.subr.mxu0 0.0
        %1150 = vmatpush1.msra.mxu0 0.0
        %1151 = vmatprep.subr.mxu0 0.0
        %1152 = vmatpush1.msra.mxu0 0.0
        %1153 = vmatprep.subr.mxu0 0.0
        %1154 = vmatpush1.msra.mxu0 0.0
        %1155 = vmatprep.subr.mxu0 0.0
        %1156 = vmatpush1.msra.mxu0 0.0
        %1157 = vmatprep.subr.mxu0 0.0
        %1158 = vmatpush1.msra.mxu0 0.0
        %1159 = vmatprep.subr.mxu0 0.0
        %1160 = vmatpush1.msra.mxu0 0.0
        %1161 = vmatprep.subr.mxu0 0.0
        %1162 = vmatpush1.msra.mxu0 0.0
        %1163 = vmatprep.subr.mxu0 0.0
        %1164 = vmatpush1.msra.mxu0 0.0
        %1165 = vmatprep.subr.mxu0 0.0
        %1166 = vmatpush1.msra.mxu0 0.0
        %1167 = vmatprep.subr.mxu0 0.0
        %1168 = vmatpush1.msra.mxu0 0.0
        %1169 = vmatprep.subr.mxu0 0.0
        %1170 = vmatpush1.msra.mxu0 0.0
        %1171 = vmatprep.subr.mxu0 0.0
        %1172 = vmatpush1.msra.mxu0 0.0
        %1173 = vmatprep.subr.mxu0 0.0
        %1174 = vmatpush1.msra.mxu0 0.0
        %1175 = vmatprep.mubr.f32.mxu0 0.0
        %1176 = vmatmul.mubr.f32.gmra.mrb[0].mxu0 %v609
        %v1177 = vpop.f32.mrb[0].mxu0
        %v1178 = vadd.f32 0.0, %v1177
        %v1179 = vpop.f32.mrb[0].mxu0
        %1180 = vmatprep.mubr.f32.mxu0 0.0
        %1181 = vmatmul.mubr.f32.gmra.mrb[0].mxu0 %v611
        %v1182 = vpop.f32.mrb[0].mxu0
        %v1183 = vadd.f32 0.0, %v1182
        %v1184 = vpop.f32.mrb[0].mxu0
        %1185 = vmatprep.mubr.f32.mxu0 0.0
        %1186 = vmatmul.mubr.f32.gmra.mrb[0].mxu0 %v613
        %v1187 = vpop.f32.mrb[0].mxu0
        %v1188 = vadd.f32 0.0, %v1187
        %v1189 = vpop.f32.mrb[0].mxu0
        %1190 = vmatprep.mubr.f32.mxu0 0.0
        %1191 = vmatmul.mubr.f32.gmra.mrb[0].mxu0 %v615
        %v1192 = vpop.f32.mrb[0].mxu0
        %v1193 = vadd.f32 0.0, %v1192
        %v1194 = vpop.f32.mrb[0].mxu0
        %1195 = vdwg.mxu0
        %v1196 = vadd.f32 %v1088, %v1178
        %v1197 = vadd.f32 %v1093, %v1183
        %v1198 = vadd.f32 %v1098, %v1188
        %v1199 = vadd.f32 %v1103, %v1193
        %s1200 = scalar_lea.vmem %s1, 256
        %v1201 = vld [vmem:[%s1200] sm:$0xff]
        %v1202 = vld [vmem:[%s1200 + $0x8] sm:$0xff]
        %v1203 = vld [vmem:[%s1200 + $0x10] sm:$0xff]
        %v1204 = vld [vmem:[%s1200 + $0x18] sm:$0xff]
        %1205 = vmatprep.subr.mxu0 0.0
        %1206 = vmatpush1.msra.mxu0 %v1201
        %1207 = vmatprep.subr.mxu0 0.0
        %1208 = vmatpush1.msra.mxu0 %v1202
        %1209 = vmatprep.subr.mxu0 0.0
        %1210 = vmatpush1.msra.mxu0 %v1203
        %1211 = vmatprep.subr.mxu0 0.0
        %1212 = vmatpush1.msra.mxu0 %v1204
        %1213 = vmatprep.subr.mxu0 0.0
        %1214 = vmatpush1.msra.mxu0 0.0
        %1215 = vmatprep.subr.mxu0 0.0
        %1216 = vmatpush1.msra.mxu0 0.0
        %1217 = vmatprep.subr.mxu0 0.0
        %1218 = vmatpush1.msra.mxu0 0.0
        %1219 = vmatprep.subr.mxu0 0.0
        %1220 = vmatpush1.msra.mxu0 0.0
        %1221 = vmatprep.subr.mxu0 0.0
        %1222 = vmatpush1.msra.mxu0 0.0
        %1223 = vmatprep.subr.mxu0 0.0
        %1224 = vmatpush1.msra.mxu0 0.0
        %1225 = vmatprep.subr.mxu0 0.0
        %1226 = vmatpush1.msra.mxu0 0.0
        %1227 = vmatprep.subr.mxu0 0.0
        %1228 = vmatpush1.msra.mxu0 0.0
        %1229 = vmatprep.subr.mxu0 0.0
        %1230 = vmatpush1.msra.mxu0 0.0
        %1231 = vmatprep.subr.mxu0 0.0
        %1232 = vmatpush1.msra.mxu0 0.0
        %1233 = vmatprep.subr.mxu0 0.0
        %1234 = vmatpush1.msra.mxu0 0.0
        %1235 = vmatprep.subr.mxu0 0.0
        %1236 = vmatpush1.msra.mxu0 0.0
        %1237 = vmatprep.subr.mxu0 0.0
        %1238 = vmatpush1.msra.mxu0 0.0
        %1239 = vmatprep.subr.mxu0 0.0
        %1240 = vmatpush1.msra.mxu0 0.0
        %1241 = vmatprep.subr.mxu0 0.0
        %1242 = vmatpush1.msra.mxu0 0.0
        %1243 = vmatprep.subr.mxu0 0.0
        %1244 = vmatpush1.msra.mxu0 0.0
        %1245 = vmatprep.subr.mxu0 0.0
        %1246 = vmatpush1.msra.mxu0 0.0
        %1247 = vmatprep.subr.mxu0 0.0
        %1248 = vmatpush1.msra.mxu0 0.0
        %1249 = vmatprep.subr.mxu0 0.0
        %1250 = vmatpush1.msra.mxu0 0.0
        %1251 = vmatprep.subr.mxu0 0.0
        %1252 = vmatpush1.msra.mxu0 0.0
        %1253 = vmatprep.subr.mxu0 0.0
        %1254 = vmatpush1.msra.mxu0 0.0
        %1255 = vmatprep.subr.mxu0 0.0
        %1256 = vmatpush1.msra.mxu0 0.0
        %1257 = vmatprep.subr.mxu0 0.0
        %1258 = vmatpush1.msra.mxu0 0.0
        %1259 = vmatprep.subr.mxu0 0.0
        %1260 = vmatpush1.msra.mxu0 0.0
        %1261 = vmatprep.subr.mxu0 0.0
        %1262 = vmatpush1.msra.mxu0 0.0
        %1263 = vmatprep.subr.mxu0 0.0
        %1264 = vmatpush1.msra.mxu0 0.0
        %1265 = vmatprep.subr.mxu0 0.0
        %1266 = vmatpush1.msra.mxu0 0.0
        %1267 = vmatprep.subr.mxu0 0.0
        %1268 = vmatpush1.msra.mxu0 0.0
        %1269 = vmatprep.mubr.f32.mxu0 0.0
        %1270 = vmatmul.mubr.f32.gmra.mrb[0].mxu0 %v719
        %v1271 = vpop.f32.mrb[0].mxu0
        %v1272 = vadd.f32 0.0, %v1271
        %v1273 = vpop.f32.mrb[0].mxu0
        %1274 = vmatprep.mubr.f32.mxu0 0.0
        %1275 = vmatmul.mubr.f32.gmra.mrb[0].mxu0 %v721
        %v1276 = vpop.f32.mrb[0].mxu0
        %v1277 = vadd.f32 0.0, %v1276
        %v1278 = vpop.f32.mrb[0].mxu0
        %1279 = vmatprep.mubr.f32.mxu0 0.0
        %1280 = vmatmul.mubr.f32.gmra.mrb[0].mxu0 %v723
        %v1281 = vpop.f32.mrb[0].mxu0
        %v1282 = vadd.f32 0.0, %v1281
        %v1283 = vpop.f32.mrb[0].mxu0
        %1284 = vmatprep.mubr.f32.mxu0 0.0
        %1285 = vmatmul.mubr.f32.gmra.mrb[0].mxu0 %v725
        %v1286 = vpop.f32.mrb[0].mxu0
        %v1287 = vadd.f32 0.0, %v1286
        %v1288 = vpop.f32.mrb[0].mxu0
        %1289 = vdwg.mxu0
        %v1290 = vadd.f32 %v1196, %v1272
        %v1291 = vadd.f32 %v1197, %v1277
        %v1292 = vadd.f32 %v1198, %v1282
        %v1293 = vadd.f32 %v1199, %v1287
        %s1294 = scalar_lea.vmem %s1, 288
        %v1295 = vld [vmem:[%s1294] sm:$0xff]
        %v1296 = vld [vmem:[%s1294 + $0x8] sm:$0xff]
        %v1297 = vld [vmem:[%s1294 + $0x10] sm:$0xff]
        %v1298 = vld [vmem:[%s1294 + $0x18] sm:$0xff]
        %1299 = vmatprep.subr.mxu0 0.0
        %1300 = vmatpush1.msra.mxu0 %v1295
        %1301 = vmatprep.subr.mxu0 0.0
        %1302 = vmatpush1.msra.mxu0 %v1296
        %1303 = vmatprep.subr.mxu0 0.0
        %1304 = vmatpush1.msra.mxu0 %v1297
        %1305 = vmatprep.subr.mxu0 0.0
        %1306 = vmatpush1.msra.mxu0 %v1298
        %1307 = vmatprep.subr.mxu0 0.0
        %1308 = vmatpush1.msra.mxu0 0.0
        %1309 = vmatprep.subr.mxu0 0.0
        %1310 = vmatpush1.msra.mxu0 0.0
        %1311 = vmatprep.subr.mxu0 0.0
        %1312 = vmatpush1.msra.mxu0 0.0
        %1313 = vmatprep.subr.mxu0 0.0
        %1314 = vmatpush1.msra.mxu0 0.0
        %1315 = vmatprep.subr.mxu0 0.0
        %1316 = vmatpush1.msra.mxu0 0.0
        %1317 = vmatprep.subr.mxu0 0.0
        %1318 = vmatpush1.msra.mxu0 0.0
        %1319 = vmatprep.subr.mxu0 0.0
        %1320 = vmatpush1.msra.mxu0 0.0
        %1321 = vmatprep.subr.mxu0 0.0
        %1322 = vmatpush1.msra.mxu0 0.0
        %1323 = vmatprep.subr.mxu0 0.0
        %1324 = vmatpush1.msra.mxu0 0.0
        %1325 = vmatprep.subr.mxu0 0.0
        %1326 = vmatpush1.msra.mxu0 0.0
        %1327 = vmatprep.subr.mxu0 0.0
        %1328 = vmatpush1.msra.mxu0 0.0
        %1329 = vmatprep.subr.mxu0 0.0
        %1330 = vmatpush1.msra.mxu0 0.0
        %1331 = vmatprep.subr.mxu0 0.0
        %1332 = vmatpush1.msra.mxu0 0.0
        %1333 = vmatprep.subr.mxu0 0.0
        %1334 = vmatpush1.msra.mxu0 0.0
        %1335 = vmatprep.subr.mxu0 0.0
        %1336 = vmatpush1.msra.mxu0 0.0
        %1337 = vmatprep.subr.mxu0 0.0
        %1338 = vmatpush1.msra.mxu0 0.0
        %1339 = vmatprep.subr.mxu0 0.0
        %1340 = vmatpush1.msra.mxu0 0.0
        %1341 = vmatprep.subr.mxu0 0.0
        %1342 = vmatpush1.msra.mxu0 0.0
        %1343 = vmatprep.subr.mxu0 0.0
        %1344 = vmatpush1.msra.mxu0 0.0
        %1345 = vmatprep.subr.mxu0 0.0
        %1346 = vmatpush1.msra.mxu0 0.0
        %1347 = vmatprep.subr.mxu0 0.0
        %1348 = vmatpush1.msra.mxu0 0.0
        %1349 = vmatprep.subr.mxu0 0.0
        %1350 = vmatpush1.msra.mxu0 0.0
        %1351 = vmatprep.subr.mxu0 0.0
        %1352 = vmatpush1.msra.mxu0 0.0
        %1353 = vmatprep.subr.mxu0 0.0
        %1354 = vmatpush1.msra.mxu0 0.0
        %1355 = vmatprep.subr.mxu0 0.0
        %1356 = vmatpush1.msra.mxu0 0.0
        %1357 = vmatprep.subr.mxu0 0.0
        %1358 = vmatpush1.msra.mxu0 0.0
        %1359 = vmatprep.subr.mxu0 0.0
        %1360 = vmatpush1.msra.mxu0 0.0
        %1361 = vmatprep.subr.mxu0 0.0
        %1362 = vmatpush1.msra.mxu0 0.0
        %1363 = vmatprep.mubr.f32.mxu0 0.0
        %1364 = vmatmul.mubr.f32.gmra.mrb[0].mxu0 %v829
        %v1365 = vpop.f32.mrb[0].mxu0
        %v1366 = vadd.f32 0.0, %v1365
        %v1367 = vpop.f32.mrb[0].mxu0
        %1368 = vmatprep.mubr.f32.mxu0 0.0
        %1369 = vmatmul.mubr.f32.gmra.mrb[0].mxu0 %v831
        %v1370 = vpop.f32.mrb[0].mxu0
        %v1371 = vadd.f32 0.0, %v1370
        %v1372 = vpop.f32.mrb[0].mxu0
        %1373 = vmatprep.mubr.f32.mxu0 0.0
        %1374 = vmatmul.mubr.f32.gmra.mrb[0].mxu0 %v833
        %v1375 = vpop.f32.mrb[0].mxu0
        %v1376 = vadd.f32 0.0, %v1375
        %v1377 = vpop.f32.mrb[0].mxu0
        %1378 = vmatprep.mubr.f32.mxu0 0.0
        %1379 = vmatmul.mubr.f32.gmra.mrb[0].mxu0 %v835
        %v1380 = vpop.f32.mrb[0].mxu0
        %v1381 = vadd.f32 0.0, %v1380
        %v1382 = vpop.f32.mrb[0].mxu0
        %1383 = vdwg.mxu0
        %v1384 = vadd.f32 %v1290, %v1366
        %v1385 = vadd.f32 %v1291, %v1371
        %v1386 = vadd.f32 %v1292, %v1376
        %v1387 = vadd.f32 %v1293, %v1381
        %v1388 = vmax.f32 %v922, %v1384
        %v1389 = vmax.f32 %v923, %v1385
        %v1390 = vmax.f32 %v924, %v1386
        %v1391 = vmax.f32 %v925, %v1387
        %v1392 = vld [vmem:[%s2] sm:$0xff]
        %v1393 = vld [vmem:[%s2 + $0x8] sm:$0x3f]
        %vm1394 = vcmask 228352
        %v1396 = vsel %vm1394, %v1392, 0
        %v1399 = vsel %vm1394, %v1393, 0
        %v1402 = vsel %vm821, %v1391, 0
        %1404 = vmatprep.subr.mxu0 0.0
        %1405 = vmatpush1.msra.mxu0 %v1388
        %1406 = vmatprep.subr.mxu0 0.0
        %1407 = vmatpush1.msra.mxu0 %v1389
        %1408 = vmatprep.subr.mxu0 0.0
        %1409 = vmatpush1.msra.mxu0 %v1390
        %1410 = vmatprep.subr.mxu0 0.0
        %1411 = vmatpush1.msra.mxu0 %v1402
        %1412 = vmatprep.subr.mxu0 0.0
        %1413 = vmatpush1.msra.mxu0 0.0
        %1414 = vmatprep.subr.mxu0 0.0
        %1415 = vmatpush1.msra.mxu0 0.0
        %1416 = vmatprep.subr.mxu0 0.0
        %1417 = vmatpush1.msra.mxu0 0.0
        %1418 = vmatprep.subr.mxu0 0.0
        %1419 = vmatpush1.msra.mxu0 0.0
        %1420 = vmatprep.subr.mxu0 0.0
        %1421 = vmatpush1.msra.mxu0 0.0
        %1422 = vmatprep.subr.mxu0 0.0
        %1423 = vmatpush1.msra.mxu0 0.0
        %1424 = vmatprep.subr.mxu0 0.0
        %1425 = vmatpush1.msra.mxu0 0.0
        %1426 = vmatprep.subr.mxu0 0.0
        %1427 = vmatpush1.msra.mxu0 0.0
        %1428 = vmatprep.subr.mxu0 0.0
        %1429 = vmatpush1.msra.mxu0 0.0
        %1430 = vmatprep.subr.mxu0 0.0
        %1431 = vmatpush1.msra.mxu0 0.0
        %1432 = vmatprep.subr.mxu0 0.0
        %1433 = vmatpush1.msra.mxu0 0.0
        %1434 = vmatprep.subr.mxu0 0.0
        %1435 = vmatpush1.msra.mxu0 0.0
        %1436 = vmatprep.subr.mxu0 0.0
        %1437 = vmatpush1.msra.mxu0 0.0
        %1438 = vmatprep.subr.mxu0 0.0
        %1439 = vmatpush1.msra.mxu0 0.0
        %1440 = vmatprep.subr.mxu0 0.0
        %1441 = vmatpush1.msra.mxu0 0.0
        %1442 = vmatprep.subr.mxu0 0.0
        %1443 = vmatpush1.msra.mxu0 0.0
        %1444 = vmatprep.subr.mxu0 0.0
        %1445 = vmatpush1.msra.mxu0 0.0
        %1446 = vmatprep.subr.mxu0 0.0
        %1447 = vmatpush1.msra.mxu0 0.0
        %1448 = vmatprep.subr.mxu0 0.0
        %1449 = vmatpush1.msra.mxu0 0.0
        %1450 = vmatprep.subr.mxu0 0.0
        %1451 = vmatpush1.msra.mxu0 0.0
        %1452 = vmatprep.subr.mxu0 0.0
        %1453 = vmatpush1.msra.mxu0 0.0
        %1454 = vmatprep.subr.mxu0 0.0
        %1455 = vmatpush1.msra.mxu0 0.0
        %1456 = vmatprep.subr.mxu0 0.0
        %1457 = vmatpush1.msra.mxu0 0.0
        %1458 = vmatprep.subr.mxu0 0.0
        %1459 = vmatpush1.msra.mxu0 0.0
        %1460 = vmatprep.subr.mxu0 0.0
        %1461 = vmatpush1.msra.mxu0 0.0
        %1462 = vmatprep.subr.mxu0 0.0
        %1463 = vmatpush1.msra.mxu0 0.0
        %1464 = vmatprep.subr.mxu0 0.0
        %1465 = vmatpush1.msra.mxu0 0.0
        %1466 = vmatprep.subr.mxu0 0.0
        %1467 = vmatpush1.msra.mxu0 0.0
        %1468 = vmatprep.mubr.f32.mxu0 0.0
        %1469 = vmatmul.mubr.f32.gmra.mrb[0].mxu0 %v1396
        %v1470 = vpop.f32.mrb[0].mxu0
        %v1471 = vadd.f32 0.0, %v1470
        %v1472 = vpop.f32.mrb[0].mxu0
        %1473 = vmatprep.mubr.f32.mxu0 0.0
        %1474 = vmatmul.mubr.f32.gmra.mrb[0].mxu0 %v1399
        %v1475 = vpop.f32.mrb[0].mxu0
        %v1476 = vadd.f32 0.0, %v1475
        %v1477 = vpop.f32.mrb[0].mxu0
        %1478 = vdwg.mxu0
        %s1479 = scalar_lea.vmem %s2, 16
        %v1480 = vld [vmem:[%s1479] sm:$0xff]
        %v1481 = vld [vmem:[%s1479 + $0x8] sm:$0x3f]
        %v1483 = vsel %vm1394, %v1480, 0
        %v1486 = vsel %vm1394, %v1481, 0
        %1488 = vmatprep.subr.mxu0 0.0
        %1489 = vmatpush1.msra.mxu0 %v1388
        %1490 = vmatprep.subr.mxu0 0.0
        %1491 = vmatpush1.msra.mxu0 %v1389
        %1492 = vmatprep.subr.mxu0 0.0
        %1493 = vmatpush1.msra.mxu0 %v1390
        %1494 = vmatprep.subr.mxu0 0.0
        %1495 = vmatpush1.msra.mxu0 %v1402
        %1496 = vmatprep.subr.mxu0 0.0
        %1497 = vmatpush1.msra.mxu0 0.0
        %1498 = vmatprep.subr.mxu0 0.0
        %1499 = vmatpush1.msra.mxu0 0.0
        %1500 = vmatprep.subr.mxu0 0.0
        %1501 = vmatpush1.msra.mxu0 0.0
        %1502 = vmatprep.subr.mxu0 0.0
        %1503 = vmatpush1.msra.mxu0 0.0
        %1504 = vmatprep.subr.mxu0 0.0
        %1505 = vmatpush1.msra.mxu0 0.0
        %1506 = vmatprep.subr.mxu0 0.0
        %1507 = vmatpush1.msra.mxu0 0.0
        %1508 = vmatprep.subr.mxu0 0.0
        %1509 = vmatpush1.msra.mxu0 0.0
        %1510 = vmatprep.subr.mxu0 0.0
        %1511 = vmatpush1.msra.mxu0 0.0
        %1512 = vmatprep.subr.mxu0 0.0
        %1513 = vmatpush1.msra.mxu0 0.0
        %1514 = vmatprep.subr.mxu0 0.0
        %1515 = vmatpush1.msra.mxu0 0.0
        %1516 = vmatprep.subr.mxu0 0.0
        %1517 = vmatpush1.msra.mxu0 0.0
        %1518 = vmatprep.subr.mxu0 0.0
        %1519 = vmatpush1.msra.mxu0 0.0
        %1520 = vmatprep.subr.mxu0 0.0
        %1521 = vmatpush1.msra.mxu0 0.0
        %1522 = vmatprep.subr.mxu0 0.0
        %1523 = vmatpush1.msra.mxu0 0.0
        %1524 = vmatprep.subr.mxu0 0.0
        %1525 = vmatpush1.msra.mxu0 0.0
        %1526 = vmatprep.subr.mxu0 0.0
        %1527 = vmatpush1.msra.mxu0 0.0
        %1528 = vmatprep.subr.mxu0 0.0
        %1529 = vmatpush1.msra.mxu0 0.0
        %1530 = vmatprep.subr.mxu0 0.0
        %1531 = vmatpush1.msra.mxu0 0.0
        %1532 = vmatprep.subr.mxu0 0.0
        %1533 = vmatpush1.msra.mxu0 0.0
        %1534 = vmatprep.subr.mxu0 0.0
        %1535 = vmatpush1.msra.mxu0 0.0
        %1536 = vmatprep.subr.mxu0 0.0
        %1537 = vmatpush1.msra.mxu0 0.0
        %1538 = vmatprep.subr.mxu0 0.0
        %1539 = vmatpush1.msra.mxu0 0.0
        %1540 = vmatprep.subr.mxu0 0.0
        %1541 = vmatpush1.msra.mxu0 0.0
        %1542 = vmatprep.subr.mxu0 0.0
        %1543 = vmatpush1.msra.mxu0 0.0
        %1544 = vmatprep.subr.mxu0 0.0
        %1545 = vmatpush1.msra.mxu0 0.0
        %1546 = vmatprep.subr.mxu0 0.0
        %1547 = vmatpush1.msra.mxu0 0.0
        %1548 = vmatprep.subr.mxu0 0.0
        %1549 = vmatpush1.msra.mxu0 0.0
        %1550 = vmatprep.subr.mxu0 0.0
        %1551 = vmatpush1.msra.mxu0 0.0
        %1552 = vmatprep.mubr.f32.mxu0 0.0
        %1553 = vmatmul.mubr.f32.gmra.mrb[0].mxu0 %v1483
        %v1554 = vpop.f32.mrb[0].mxu0
        %v1555 = vadd.f32 0.0, %v1554
        %v1556 = vpop.f32.mrb[0].mxu0
        %1557 = vmatprep.mubr.f32.mxu0 0.0
        %1558 = vmatmul.mubr.f32.gmra.mrb[0].mxu0 %v1486
        %v1559 = vpop.f32.mrb[0].mxu0
        %v1560 = vadd.f32 0.0, %v1559
        %v1561 = vpop.f32.mrb[0].mxu0
        %1562 = vdwg.mxu0
        %v1563 = vmax.f32 %v1471, %v1555
        %v1564 = vmax.f32 %v1476, %v1560
        %v1565 = vld [vmem:[%s3] sm:$0x1]
        %v1567 = vlaneseq
        %v1568 = vshrl.u32 %v1567, 7
        %v1569 = vsub.s32 0, %v1568
        %v1570 = vrot.slane %v1565, %v1569
        %v1572 = vadd.f32 %v1563, %v1570
        %v1573 = vadd.f32 %v1564, %v1570
        %v1574 = vmax.f32 %v1572, 0.0
        %v1575 = vmax.f32 %v1573, 0.0
        %v1576 = vld [vmem:[%s4] sm:$0xff]
        %v1577 = vld [vmem:[%s4 + $0x8] sm:$0xff]
        %v1578 = vld [vmem:[%s4 + $0x10] sm:$0xff]
        %v1579 = vld [vmem:[%s4 + $0x18] sm:$0xff]
        %v1580 = vld [vmem:[%s4 + $0x20] sm:$0xff]
        %v1581 = vld [vmem:[%s4 + $0x28] sm:$0xff]
        %v1582 = vld [vmem:[%s4 + $0x30] sm:$0xff]
        %v1583 = vld [vmem:[%s4 + $0x38] sm:$0xff]
        %v1584 = vld [vmem:[%s4 + $0x40] sm:$0xff]
        %v1585 = vld [vmem:[%s4 + $0x48] sm:$0xff]
        %v1586 = vld [vmem:[%s4 + $0x50] sm:$0xf]
        %s1587 = scalar_lea.vmem %s4, 88
        %v1588 = vld [vmem:[%s1587] sm:$0xff]
        %v1589 = vld [vmem:[%s1587 + $0x8] sm:$0xff]
        %v1590 = vld [vmem:[%s1587 + $0x10] sm:$0xff]
        %v1591 = vld [vmem:[%s1587 + $0x18] sm:$0xff]
        %v1592 = vld [vmem:[%s1587 + $0x20] sm:$0xff]
        %v1593 = vld [vmem:[%s1587 + $0x28] sm:$0xff]
        %v1594 = vld [vmem:[%s1587 + $0x30] sm:$0xff]
        %v1595 = vld [vmem:[%s1587 + $0x38] sm:$0xff]
        %v1596 = vld [vmem:[%s1587 + $0x40] sm:$0xff]
        %v1597 = vld [vmem:[%s1587 + $0x48] sm:$0xff]
        %v1598 = vld [vmem:[%s1587 + $0x50] sm:$0xf]
        %v1601 = vrot.slane %v1574, 1
        %v1602 = vrot.slane %v1575, 1
        %v1603 = vsel %vm401, %v1601, %v1602
        %vm1604 = vcmask 687104
        %v1605 = vsel %vm1604, %v1603, 0
        %v1607 = vsel %vm1604, %v1602, 0
        %v1610 = vsel %vm821, %v1598, 0
        %1612 = vmatprep.subr.mxu0 0.0
        %1613 = vmatpush1.msra.mxu0 %v1588
        %1614 = vmatprep.subr.mxu0 0.0
        %1615 = vmatpush1.msra.mxu0 %v1589
        %1616 = vmatprep.subr.mxu0 0.0
        %1617 = vmatpush1.msra.mxu0 %v1590
        %1618 = vmatprep.subr.mxu0 0.0
        %1619 = vmatpush1.msra.mxu0 %v1591
        %1620 = vmatprep.subr.mxu0 0.0
        %1621 = vmatpush1.msra.mxu0 %v1592
        %1622 = vmatprep.subr.mxu0 0.0
        %1623 = vmatpush1.msra.mxu0 %v1593
        %1624 = vmatprep.subr.mxu0 0.0
        %1625 = vmatpush1.msra.mxu0 %v1594
        %1626 = vmatprep.subr.mxu0 0.0
        %1627 = vmatpush1.msra.mxu0 %v1595
        %1628 = vmatprep.subr.mxu0 0.0
        %1629 = vmatpush1.msra.mxu0 %v1596
        %1630 = vmatprep.subr.mxu0 0.0
        %1631 = vmatpush1.msra.mxu0 %v1597
        %1632 = vmatprep.subr.mxu0 0.0
        %1633 = vmatpush1.msra.mxu0 %v1610
        %1634 = vmatprep.subr.mxu0 0.0
        %1635 = vmatpush1.msra.mxu0 0.0
        %1636 = vmatprep.subr.mxu0 0.0
        %1637 = vmatpush1.msra.mxu0 0.0
        %1638 = vmatprep.subr.mxu0 0.0
        %1639 = vmatpush1.msra.mxu0 0.0
        %1640 = vmatprep.subr.mxu0 0.0
        %1641 = vmatpush1.msra.mxu0 0.0
        %1642 = vmatprep.subr.mxu0 0.0
        %1643 = vmatpush1.msra.mxu0 0.0
        %1644 = vmatprep.subr.mxu0 0.0
        %1645 = vmatpush1.msra.mxu0 0.0
        %1646 = vmatprep.subr.mxu0 0.0
        %1647 = vmatpush1.msra.mxu0 0.0
        %1648 = vmatprep.subr.mxu0 0.0
        %1649 = vmatpush1.msra.mxu0 0.0
        %1650 = vmatprep.subr.mxu0 0.0
        %1651 = vmatpush1.msra.mxu0 0.0
        %1652 = vmatprep.subr.mxu0 0.0
        %1653 = vmatpush1.msra.mxu0 0.0
        %1654 = vmatprep.subr.mxu0 0.0
        %1655 = vmatpush1.msra.mxu0 0.0
        %1656 = vmatprep.subr.mxu0 0.0
        %1657 = vmatpush1.msra.mxu0 0.0
        %1658 = vmatprep.subr.mxu0 0.0
        %1659 = vmatpush1.msra.mxu0 0.0
        %1660 = vmatprep.subr.mxu0 0.0
        %1661 = vmatpush1.msra.mxu0 0.0
        %1662 = vmatprep.subr.mxu0 0.0
        %1663 = vmatpush1.msra.mxu0 0.0
        %1664 = vmatprep.subr.mxu0 0.0
        %1665 = vmatpush1.msra.mxu0 0.0
        %1666 = vmatprep.subr.mxu0 0.0
        %1667 = vmatpush1.msra.mxu0 0.0
        %1668 = vmatprep.subr.mxu0 0.0
        %1669 = vmatpush1.msra.mxu0 0.0
        %1670 = vmatprep.subr.mxu0 0.0
        %1671 = vmatpush1.msra.mxu0 0.0
        %1672 = vmatprep.subr.mxu0 0.0
        %1673 = vmatpush1.msra.mxu0 0.0
        %1674 = vmatprep.subr.mxu0 0.0
        %1675 = vmatpush1.msra.mxu0 0.0
        %1676 = vmatprep.mubr.f32.mxu0 0.0
        %1677 = vmatmul.mubr.f32.gmra.mrb[0].mxu0 %v1605
        %v1678 = vpop.f32.mrb[0].mxu0
        %v1679 = vadd.f32 0.0, %v1678
        %v1680 = vpop.f32.mrb[0].mxu0
        %1681 = vmatprep.mubr.f32.mxu0 0.0
        %1682 = vmatmul.mubr.f32.gmra.mrb[0].mxu0 %v1607
        %v1683 = vpop.f32.mrb[0].mxu0
        %v1684 = vadd.f32 0.0, %v1683
        %v1685 = vpop.f32.mrb[0].mxu0
        %1686 = vdwg.mxu0
        %v1687 = vsel %vm1604, %v1574, 0
        %v1689 = vsel %vm1604, %v1575, 0
        %v1692 = vsel %vm821, %v1586, 0
        %1694 = vmatprep.subr.mxu0 0.0
        %1695 = vmatpush1.msra.mxu0 %v1576
        %1696 = vmatprep.subr.mxu0 0.0
        %1697 = vmatpush1.msra.mxu0 %v1577
        %1698 = vmatprep.subr.mxu0 0.0
        %1699 = vmatpush1.msra.mxu0 %v1578
        %1700 = vmatprep.subr.mxu0 0.0
        %1701 = vmatpush1.msra.mxu0 %v1579
        %1702 = vmatprep.subr.mxu0 0.0
        %1703 = vmatpush1.msra.mxu0 %v1580
        %1704 = vmatprep.subr.mxu0 0.0
        %1705 = vmatpush1.msra.mxu0 %v1581
        %1706 = vmatprep.subr.mxu0 0.0
        %1707 = vmatpush1.msra.mxu0 %v1582
        %1708 = vmatprep.subr.mxu0 0.0
        %1709 = vmatpush1.msra.mxu0 %v1583
        %1710 = vmatprep.subr.mxu0 0.0
        %1711 = vmatpush1.msra.mxu0 %v1584
        %1712 = vmatprep.subr.mxu0 0.0
        %1713 = vmatpush1.msra.mxu0 %v1585
        %1714 = vmatprep.subr.mxu0 0.0
        %1715 = vmatpush1.msra.mxu0 %v1692
        %1716 = vmatprep.subr.mxu0 0.0
        %1717 = vmatpush1.msra.mxu0 0.0
        %1718 = vmatprep.subr.mxu0 0.0
        %1719 = vmatpush1.msra.mxu0 0.0
        %1720 = vmatprep.subr.mxu0 0.0
        %1721 = vmatpush1.msra.mxu0 0.0
        %1722 = vmatprep.subr.mxu0 0.0
        %1723 = vmatpush1.msra.mxu0 0.0
        %1724 = vmatprep.subr.mxu0 0.0
        %1725 = vmatpush1.msra.mxu0 0.0
        %1726 = vmatprep.subr.mxu0 0.0
        %1727 = vmatpush1.msra.mxu0 0.0
        %1728 = vmatprep.subr.mxu0 0.0
        %1729 = vmatpush1.msra.mxu0 0.0
        %1730 = vmatprep.subr.mxu0 0.0
        %1731 = vmatpush1.msra.mxu0 0.0
        %1732 = vmatprep.subr.mxu0 0.0
        %1733 = vmatpush1.msra.mxu0 0.0
        %1734 = vmatprep.subr.mxu0 0.0
        %1735 = vmatpush1.msra.mxu0 0.0
        %1736 = vmatprep.subr.mxu0 0.0
        %1737 = vmatpush1.msra.mxu0 0.0
        %1738 = vmatprep.subr.mxu0 0.0
        %1739 = vmatpush1.msra.mxu0 0.0
        %1740 = vmatprep.subr.mxu0 0.0
        %1741 = vmatpush1.msra.mxu0 0.0
        %1742 = vmatprep.subr.mxu0 0.0
        %1743 = vmatpush1.msra.mxu0 0.0
        %1744 = vmatprep.subr.mxu0 0.0
        %1745 = vmatpush1.msra.mxu0 0.0
        %1746 = vmatprep.subr.mxu0 0.0
        %1747 = vmatpush1.msra.mxu0 0.0
        %1748 = vmatprep.subr.mxu0 0.0
        %1749 = vmatpush1.msra.mxu0 0.0
        %1750 = vmatprep.subr.mxu0 0.0
        %1751 = vmatpush1.msra.mxu0 0.0
        %1752 = vmatprep.subr.mxu0 0.0
        %1753 = vmatpush1.msra.mxu0 0.0
        %1754 = vmatprep.subr.mxu0 0.0
        %1755 = vmatpush1.msra.mxu0 0.0
        %1756 = vmatprep.subr.mxu0 0.0
        %1757 = vmatpush1.msra.mxu0 0.0
        %1758 = vmatprep.mubr.f32.mxu0 0.0
        %1759 = vmatmul.mubr.f32.gmra.mrb[0].mxu0 %v1687
        %v1760 = vpop.f32.mrb[0].mxu0
        %v1761 = vadd.f32 %v1679, %v1760
        %v1762 = vpop.f32.mrb[0].mxu0
        %1763 = vmatprep.mubr.f32.mxu0 0.0
        %1764 = vmatmul.mubr.f32.gmra.mrb[0].mxu0 %v1689
        %v1765 = vpop.f32.mrb[0].mxu0
        %v1766 = vadd.f32 %v1684, %v1765
        %v1767 = vpop.f32.mrb[0].mxu0
        %1768 = vdwg.mxu0
        %s1769 = scalar_lea.vmem %s4, 176
        %v1770 = vld [vmem:[%s1769] sm:$0xff]
        %v1771 = vld [vmem:[%s1769 + $0x8] sm:$0xff]
        %v1772 = vld [vmem:[%s1769 + $0x10] sm:$0xff]
        %v1773 = vld [vmem:[%s1769 + $0x18] sm:$0xff]
        %v1774 = vld [vmem:[%s1769 + $0x20] sm:$0xff]
        %v1775 = vld [vmem:[%s1769 + $0x28] sm:$0xff]
        %v1776 = vld [vmem:[%s1769 + $0x30] sm:$0xff]
        %v1777 = vld [vmem:[%s1769 + $0x38] sm:$0xff]
        %v1778 = vld [vmem:[%s1769 + $0x40] sm:$0xff]
        %v1779 = vld [vmem:[%s1769 + $0x48] sm:$0xff]
        %v1780 = vld [vmem:[%s1769 + $0x50] sm:$0xf]
        %v1781 = vrot.slane %v1574, 2
        %v1782 = vrot.slane %v1575, 2
        %v1783 = vsel %vm601, %v1781, %v1782
        %v1784 = vsel %vm1604, %v1783, 0
        %v1786 = vsel %vm1604, %v1782, 0
        %v1789 = vsel %vm821, %v1780, 0
        %1791 = vmatprep.subr.mxu0 0.0
        %1792 = vmatpush1.msra.mxu0 %v1770
        %1793 = vmatprep.subr.mxu0 0.0
        %1794 = vmatpush1.msra.mxu0 %v1771
        %1795 = vmatprep.subr.mxu0 0.0
        %1796 = vmatpush1.msra.mxu0 %v1772
        %1797 = vmatprep.subr.mxu0 0.0
        %1798 = vmatpush1.msra.mxu0 %v1773
        %1799 = vmatprep.subr.mxu0 0.0
        %1800 = vmatpush1.msra.mxu0 %v1774
        %1801 = vmatprep.subr.mxu0 0.0
        %1802 = vmatpush1.msra.mxu0 %v1775
        %1803 = vmatprep.subr.mxu0 0.0
        %1804 = vmatpush1.msra.mxu0 %v1776
        %1805 = vmatprep.subr.mxu0 0.0
        %1806 = vmatpush1.msra.mxu0 %v1777
        %1807 = vmatprep.subr.mxu0 0.0
        %1808 = vmatpush1.msra.mxu0 %v1778
        %1809 = vmatprep.subr.mxu0 0.0
        %1810 = vmatpush1.msra.mxu0 %v1779
        %1811 = vmatprep.subr.mxu0 0.0
        %1812 = vmatpush1.msra.mxu0 %v1789
        %1813 = vmatprep.subr.mxu0 0.0
        %1814 = vmatpush1.msra.mxu0 0.0
        %1815 = vmatprep.subr.mxu0 0.0
        %1816 = vmatpush1.msra.mxu0 0.0
        %1817 = vmatprep.subr.mxu0 0.0
        %1818 = vmatpush1.msra.mxu0 0.0
        %1819 = vmatprep.subr.mxu0 0.0
        %1820 = vmatpush1.msra.mxu0 0.0
        %1821 = vmatprep.subr.mxu0 0.0
        %1822 = vmatpush1.msra.mxu0 0.0
        %1823 = vmatprep.subr.mxu0 0.0
        %1824 = vmatpush1.msra.mxu0 0.0
        %1825 = vmatprep.subr.mxu0 0.0
        %1826 = vmatpush1.msra.mxu0 0.0
        %1827 = vmatprep.subr.mxu0 0.0
        %1828 = vmatpush1.msra.mxu0 0.0
        %1829 = vmatprep.subr.mxu0 0.0
        %1830 = vmatpush1.msra.mxu0 0.0
        %1831 = vmatprep.subr.mxu0 0.0
        %1832 = vmatpush1.msra.mxu0 0.0
        %1833 = vmatprep.subr.mxu0 0.0
        %1834 = vmatpush1.msra.mxu0 0.0
        %1835 = vmatprep.subr.mxu0 0.0
        %1836 = vmatpush1.msra.mxu0 0.0
        %1837 = vmatprep.subr.mxu0 0.0
        %1838 = vmatpush1.msra.mxu0 0.0
        %1839 = vmatprep.subr.mxu0 0.0
        %1840 = vmatpush1.msra.mxu0 0.0
        %1841 = vmatprep.subr.mxu0 0.0
        %1842 = vmatpush1.msra.mxu0 0.0
        %1843 = vmatprep.subr.mxu0 0.0
        %1844 = vmatpush1.msra.mxu0 0.0
        %1845 = vmatprep.subr.mxu0 0.0
        %1846 = vmatpush1.msra.mxu0 0.0
        %1847 = vmatprep.subr.mxu0 0.0
        %1848 = vmatpush1.msra.mxu0 0.0
        %1849 = vmatprep.subr.mxu0 0.0
        %1850 = vmatpush1.msra.mxu0 0.0
        %1851 = vmatprep.subr.mxu0 0.0
        %1852 = vmatpush1.msra.mxu0 0.0
        %1853 = vmatprep.subr.mxu0 0.0
        %1854 = vmatpush1.msra.mxu0 0.0
        %1855 = vmatprep.mubr.f32.mxu0 0.0
        %1856 = vmatmul.mubr.f32.gmra.mrb[0].mxu0 %v1784
        %v1857 = vpop.f32.mrb[0].mxu0
        %v1858 = vadd.f32 0.0, %v1857
        %v1859 = vpop.f32.mrb[0].mxu0
        %1860 = vmatprep.mubr.f32.mxu0 0.0
        %1861 = vmatmul.mubr.f32.gmra.mrb[0].mxu0 %v1786
        %v1862 = vpop.f32.mrb[0].mxu0
        %v1863 = vadd.f32 0.0, %v1862
        %v1864 = vpop.f32.mrb[0].mxu0
        %1865 = vdwg.mxu0
        %v1866 = vadd.f32 %v1761, %v1858
        %v1867 = vadd.f32 %v1766, %v1863
        %s1868 = scalar_lea.vmem %s4, 264
        %v1869 = vld [vmem:[%s1868] sm:$0xff]
        %v1870 = vld [vmem:[%s1868 + $0x8] sm:$0xff]
        %v1871 = vld [vmem:[%s1868 + $0x10] sm:$0xff]
        %v1872 = vld [vmem:[%s1868 + $0x18] sm:$0xff]
        %v1873 = vld [vmem:[%s1868 + $0x20] sm:$0xff]
        %v1874 = vld [vmem:[%s1868 + $0x28] sm:$0xff]
        %v1875 = vld [vmem:[%s1868 + $0x30] sm:$0xff]
        %v1876 = vld [vmem:[%s1868 + $0x38] sm:$0xff]
        %v1877 = vld [vmem:[%s1868 + $0x40] sm:$0xff]
        %v1878 = vld [vmem:[%s1868 + $0x48] sm:$0xff]
        %v1879 = vld [vmem:[%s1868 + $0x50] sm:$0xf]
        %v1880 = vrot.slane %v1574, 3
        %v1881 = vrot.slane %v1575, 3
        %v1882 = vsel %vm711, %v1880, %v1881
        %v1883 = vsel %vm1604, %v1882, 0
        %v1885 = vsel %vm1604, %v1881, 0
        %v1888 = vsel %vm821, %v1879, 0
        %1890 = vmatprep.subr.mxu0 0.0
        %1891 = vmatpush1.msra.mxu0 %v1869
        %1892 = vmatprep.subr.mxu0 0.0
        %1893 = vmatpush1.msra.mxu0 %v1870
        %1894 = vmatprep.subr.mxu0 0.0
        %1895 = vmatpush1.msra.mxu0 %v1871
        %1896 = vmatprep.subr.mxu0 0.0
        %1897 = vmatpush1.msra.mxu0 %v1872
        %1898 = vmatprep.subr.mxu0 0.0
        %1899 = vmatpush1.msra.mxu0 %v1873
        %1900 = vmatprep.subr.mxu0 0.0
        %1901 = vmatpush1.msra.mxu0 %v1874
        %1902 = vmatprep.subr.mxu0 0.0
        %1903 = vmatpush1.msra.mxu0 %v1875
        %1904 = vmatprep.subr.mxu0 0.0
        %1905 = vmatpush1.msra.mxu0 %v1876
        %1906 = vmatprep.subr.mxu0 0.0
        %1907 = vmatpush1.msra.mxu0 %v1877
        %1908 = vmatprep.subr.mxu0 0.0
        %1909 = vmatpush1.msra.mxu0 %v1878
        %1910 = vmatprep.subr.mxu0 0.0
        %1911 = vmatpush1.msra.mxu0 %v1888
        %1912 = vmatprep.subr.mxu0 0.0
        %1913 = vmatpush1.msra.mxu0 0.0
        %1914 = vmatprep.subr.mxu0 0.0
        %1915 = vmatpush1.msra.mxu0 0.0
        %1916 = vmatprep.subr.mxu0 0.0
        %1917 = vmatpush1.msra.mxu0 0.0
        %1918 = vmatprep.subr.mxu0 0.0
        %1919 = vmatpush1.msra.mxu0 0.0
        %1920 = vmatprep.subr.mxu0 0.0
        %1921 = vmatpush1.msra.mxu0 0.0
        %1922 = vmatprep.subr.mxu0 0.0
        %1923 = vmatpush1.msra.mxu0 0.0
        %1924 = vmatprep.subr.mxu0 0.0
        %1925 = vmatpush1.msra.mxu0 0.0
        %1926 = vmatprep.subr.mxu0 0.0
        %1927 = vmatpush1.msra.mxu0 0.0
        %1928 = vmatprep.subr.mxu0 0.0
        %1929 = vmatpush1.msra.mxu0 0.0
        %1930 = vmatprep.subr.mxu0 0.0
        %1931 = vmatpush1.msra.mxu0 0.0
        %1932 = vmatprep.subr.mxu0 0.0
        %1933 = vmatpush1.msra.mxu0 0.0
        %1934 = vmatprep.subr.mxu0 0.0
        %1935 = vmatpush1.msra.mxu0 0.0
        %1936 = vmatprep.subr.mxu0 0.0
        %1937 = vmatpush1.msra.mxu0 0.0
        %1938 = vmatprep.subr.mxu0 0.0
        %1939 = vmatpush1.msra.mxu0 0.0
        %1940 = vmatprep.subr.mxu0 0.0
        %1941 = vmatpush1.msra.mxu0 0.0
        %1942 = vmatprep.subr.mxu0 0.0
        %1943 = vmatpush1.msra.mxu0 0.0
        %1944 = vmatprep.subr.mxu0 0.0
        %1945 = vmatpush1.msra.mxu0 0.0
        %1946 = vmatprep.subr.mxu0 0.0
        %1947 = vmatpush1.msra.mxu0 0.0
        %1948 = vmatprep.subr.mxu0 0.0
        %1949 = vmatpush1.msra.mxu0 0.0
        %1950 = vmatprep.subr.mxu0 0.0
        %1951 = vmatpush1.msra.mxu0 0.0
        %1952 = vmatprep.subr.mxu0 0.0
        %1953 = vmatpush1.msra.mxu0 0.0
        %1954 = vmatprep.mubr.f32.mxu0 0.0
        %1955 = vmatmul.mubr.f32.gmra.mrb[0].mxu0 %v1883
        %v1956 = vpop.f32.mrb[0].mxu0
        %v1957 = vadd.f32 0.0, %v1956
        %v1958 = vpop.f32.mrb[0].mxu0
        %1959 = vmatprep.mubr.f32.mxu0 0.0
        %1960 = vmatmul.mubr.f32.gmra.mrb[0].mxu0 %v1885
        %v1961 = vpop.f32.mrb[0].mxu0
        %v1962 = vadd.f32 0.0, %v1961
        %v1963 = vpop.f32.mrb[0].mxu0
        %1964 = vdwg.mxu0
        %v1965 = vadd.f32 %v1866, %v1957
        %v1966 = vadd.f32 %v1867, %v1962
        %s1967 = scalar_lea.vmem %s4, 352
        %v1968 = vld [vmem:[%s1967] sm:$0xff]
        %v1969 = vld [vmem:[%s1967 + $0x8] sm:$0xff]
        %v1970 = vld [vmem:[%s1967 + $0x10] sm:$0xff]
        %v1971 = vld [vmem:[%s1967 + $0x18] sm:$0xff]
        %v1972 = vld [vmem:[%s1967 + $0x20] sm:$0xff]
        %v1973 = vld [vmem:[%s1967 + $0x28] sm:$0xff]
        %v1974 = vld [vmem:[%s1967 + $0x30] sm:$0xff]
        %v1975 = vld [vmem:[%s1967 + $0x38] sm:$0xff]
        %v1976 = vld [vmem:[%s1967 + $0x40] sm:$0xff]
        %v1977 = vld [vmem:[%s1967 + $0x48] sm:$0xff]
        %v1978 = vld [vmem:[%s1967 + $0x50] sm:$0xf]
        %v1979 = vrot.slane %v1574, 4
        %v1980 = vrot.slane %v1575, 4
        %v1981 = vsel %vm821, %v1979, %v1980
        %v1982 = vsel %vm1604, %v1981, 0
        %v1984 = vsel %vm1604, %v1980, 0
        %v1987 = vsel %vm821, %v1978, 0
        %1989 = vmatprep.subr.mxu0 0.0
        %1990 = vmatpush1.msra.mxu0 %v1968
        %1991 = vmatprep.subr.mxu0 0.0
        %1992 = vmatpush1.msra.mxu0 %v1969
        %1993 = vmatprep.subr.mxu0 0.0
        %1994 = vmatpush1.msra.mxu0 %v1970
        %1995 = vmatprep.subr.mxu0 0.0
        %1996 = vmatpush1.msra.mxu0 %v1971
        %1997 = vmatprep.subr.mxu0 0.0
        %1998 = vmatpush1.msra.mxu0 %v1972
        %1999 = vmatprep.subr.mxu0 0.0
        %2000 = vmatpush1.msra.mxu0 %v1973
        %2001 = vmatprep.subr.mxu0 0.0
        %2002 = vmatpush1.msra.mxu0 %v1974
        %2003 = vmatprep.subr.mxu0 0.0
        %2004 = vmatpush1.msra.mxu0 %v1975
        %2005 = vmatprep.subr.mxu0 0.0
        %2006 = vmatpush1.msra.mxu0 %v1976
        %2007 = vmatprep.subr.mxu0 0.0
        %2008 = vmatpush1.msra.mxu0 %v1977
        %2009 = vmatprep.subr.mxu0 0.0
        %2010 = vmatpush1.msra.mxu0 %v1987
        %2011 = vmatprep.subr.mxu0 0.0
        %2012 = vmatpush1.msra.mxu0 0.0
        %2013 = vmatprep.subr.mxu0 0.0
        %2014 = vmatpush1.msra.mxu0 0.0
        %2015 = vmatprep.subr.mxu0 0.0
        %2016 = vmatpush1.msra.mxu0 0.0
        %2017 = vmatprep.subr.mxu0 0.0
        %2018 = vmatpush1.msra.mxu0 0.0
        %2019 = vmatprep.subr.mxu0 0.0
        %2020 = vmatpush1.msra.mxu0 0.0
        %2021 = vmatprep.subr.mxu0 0.0
        %2022 = vmatpush1.msra.mxu0 0.0
        %2023 = vmatprep.subr.mxu0 0.0
        %2024 = vmatpush1.msra.mxu0 0.0
        %2025 = vmatprep.subr.mxu0 0.0
        %2026 = vmatpush1.msra.mxu0 0.0
        %2027 = vmatprep.subr.mxu0 0.0
        %2028 = vmatpush1.msra.mxu0 0.0
        %2029 = vmatprep.subr.mxu0 0.0
        %2030 = vmatpush1.msra.mxu0 0.0
        %2031 = vmatprep.subr.mxu0 0.0
        %2032 = vmatpush1.msra.mxu0 0.0
        %2033 = vmatprep.subr.mxu0 0.0
        %2034 = vmatpush1.msra.mxu0 0.0
        %2035 = vmatprep.subr.mxu0 0.0
        %2036 = vmatpush1.msra.mxu0 0.0
        %2037 = vmatprep.subr.mxu0 0.0
        %2038 = vmatpush1.msra.mxu0 0.0
        %2039 = vmatprep.subr.mxu0 0.0
        %2040 = vmatpush1.msra.mxu0 0.0
        %2041 = vmatprep.subr.mxu0 0.0
        %2042 = vmatpush1.msra.mxu0 0.0
        %2043 = vmatprep.subr.mxu0 0.0
        %2044 = vmatpush1.msra.mxu0 0.0
        %2045 = vmatprep.subr.mxu0 0.0
        %2046 = vmatpush1.msra.mxu0 0.0
        %2047 = vmatprep.subr.mxu0 0.0
        %2048 = vmatpush1.msra.mxu0 0.0
        %2049 = vmatprep.subr.mxu0 0.0
        %2050 = vmatpush1.msra.mxu0 0.0
        %2051 = vmatprep.subr.mxu0 0.0
        %2052 = vmatpush1.msra.mxu0 0.0
        %2053 = vmatprep.mubr.f32.mxu0 0.0
        %2054 = vmatmul.mubr.f32.gmra.mrb[0].mxu0 %v1982
        %v2055 = vpop.f32.mrb[0].mxu0
        %v2056 = vadd.f32 0.0, %v2055
        %v2057 = vpop.f32.mrb[0].mxu0
        %2058 = vmatprep.mubr.f32.mxu0 0.0
        %2059 = vmatmul.mubr.f32.gmra.mrb[0].mxu0 %v1984
        %v2060 = vpop.f32.mrb[0].mxu0
        %v2061 = vadd.f32 0.0, %v2060
        %v2062 = vpop.f32.mrb[0].mxu0
        %2063 = vdwg.mxu0
        %v2064 = vadd.f32 %v1965, %v2056
        %v2065 = vadd.f32 %v1966, %v2061
        %s2066 = scalar_lea.vmem %s4, 440
        %v2067 = vld [vmem:[%s2066] sm:$0xff]
        %v2068 = vld [vmem:[%s2066 + $0x8] sm:$0xff]
        %v2069 = vld [vmem:[%s2066 + $0x10] sm:$0xff]
        %v2070 = vld [vmem:[%s2066 + $0x18] sm:$0xff]
        %v2071 = vld [vmem:[%s2066 + $0x20] sm:$0xff]
        %v2072 = vld [vmem:[%s2066 + $0x28] sm:$0xff]
        %v2073 = vld [vmem:[%s2066 + $0x30] sm:$0xff]
        %v2074 = vld [vmem:[%s2066 + $0x38] sm:$0xff]
        %v2075 = vld [vmem:[%s2066 + $0x40] sm:$0xff]
        %v2076 = vld [vmem:[%s2066 + $0x48] sm:$0xff]
        %v2077 = vld [vmem:[%s2066 + $0x50] sm:$0xf]
        %s2078 = scalar_lea.vmem %s4, 528
        %v2079 = vld [vmem:[%s2078] sm:$0xff]
        %v2080 = vld [vmem:[%s2078 + $0x8] sm:$0xff]
        %v2081 = vld [vmem:[%s2078 + $0x10] sm:$0xff]
        %v2082 = vld [vmem:[%s2078 + $0x18] sm:$0xff]
        %v2083 = vld [vmem:[%s2078 + $0x20] sm:$0xff]
        %v2084 = vld [vmem:[%s2078 + $0x28] sm:$0xff]
        %v2085 = vld [vmem:[%s2078 + $0x30] sm:$0xff]
        %v2086 = vld [vmem:[%s2078 + $0x38] sm:$0xff]
        %v2087 = vld [vmem:[%s2078 + $0x40] sm:$0xff]
        %v2088 = vld [vmem:[%s2078 + $0x48] sm:$0xff]
        %v2089 = vld [vmem:[%s2078 + $0x50] sm:$0xf]
        %v2091 = vsel %vm821, %v2089, 0
        %2093 = vmatprep.subr.mxu0 0.0
        %2094 = vmatpush1.msra.mxu0 %v2079
        %2095 = vmatprep.subr.mxu0 0.0
        %2096 = vmatpush1.msra.mxu0 %v2080
        %2097 = vmatprep.subr.mxu0 0.0
        %2098 = vmatpush1.msra.mxu0 %v2081
        %2099 = vmatprep.subr.mxu0 0.0
        %2100 = vmatpush1.msra.mxu0 %v2082
        %2101 = vmatprep.subr.mxu0 0.0
        %2102 = vmatpush1.msra.mxu0 %v2083
        %2103 = vmatprep.subr.mxu0 0.0
        %2104 = vmatpush1.msra.mxu0 %v2084
        %2105 = vmatprep.subr.mxu0 0.0
        %2106 = vmatpush1.msra.mxu0 %v2085
        %2107 = vmatprep.subr.mxu0 0.0
        %2108 = vmatpush1.msra.mxu0 %v2086
        %2109 = vmatprep.subr.mxu0 0.0
        %2110 = vmatpush1.msra.mxu0 %v2087
        %2111 = vmatprep.subr.mxu0 0.0
        %2112 = vmatpush1.msra.mxu0 %v2088
        %2113 = vmatprep.subr.mxu0 0.0
        %2114 = vmatpush1.msra.mxu0 %v2091
        %2115 = vmatprep.subr.mxu0 0.0
        %2116 = vmatpush1.msra.mxu0 0.0
        %2117 = vmatprep.subr.mxu0 0.0
        %2118 = vmatpush1.msra.mxu0 0.0
        %2119 = vmatprep.subr.mxu0 0.0
        %2120 = vmatpush1.msra.mxu0 0.0
        %2121 = vmatprep.subr.mxu0 0.0
        %2122 = vmatpush1.msra.mxu0 0.0
        %2123 = vmatprep.subr.mxu0 0.0
        %2124 = vmatpush1.msra.mxu0 0.0
        %2125 = vmatprep.subr.mxu0 0.0
        %2126 = vmatpush1.msra.mxu0 0.0
        %2127 = vmatprep.subr.mxu0 0.0
        %2128 = vmatpush1.msra.mxu0 0.0
        %2129 = vmatprep.subr.mxu0 0.0
        %2130 = vmatpush1.msra.mxu0 0.0
        %2131 = vmatprep.subr.mxu0 0.0
        %2132 = vmatpush1.msra.mxu0 0.0
        %2133 = vmatprep.subr.mxu0 0.0
        %2134 = vmatpush1.msra.mxu0 0.0
        %2135 = vmatprep.subr.mxu0 0.0
        %2136 = vmatpush1.msra.mxu0 0.0
        %2137 = vmatprep.subr.mxu0 0.0
        %2138 = vmatpush1.msra.mxu0 0.0
        %2139 = vmatprep.subr.mxu0 0.0
        %2140 = vmatpush1.msra.mxu0 0.0
        %2141 = vmatprep.subr.mxu0 0.0
        %2142 = vmatpush1.msra.mxu0 0.0
        %2143 = vmatprep.subr.mxu0 0.0
        %2144 = vmatpush1.msra.mxu0 0.0
        %2145 = vmatprep.subr.mxu0 0.0
        %2146 = vmatpush1.msra.mxu0 0.0
        %2147 = vmatprep.subr.mxu0 0.0
        %2148 = vmatpush1.msra.mxu0 0.0
        %2149 = vmatprep.subr.mxu0 0.0
        %2150 = vmatpush1.msra.mxu0 0.0
        %2151 = vmatprep.subr.mxu0 0.0
        %2152 = vmatpush1.msra.mxu0 0.0
        %2153 = vmatprep.subr.mxu0 0.0
        %2154 = vmatpush1.msra.mxu0 0.0
        %2155 = vmatprep.subr.mxu0 0.0
        %2156 = vmatpush1.msra.mxu0 0.0
        %2157 = vmatprep.mubr.f32.mxu0 0.0
        %2158 = vmatmul.mubr.f32.gmra.mrb[0].mxu0 %v1605
        %v2159 = vpop.f32.mrb[0].mxu0
        %v2160 = vadd.f32 0.0, %v2159
        %v2161 = vpop.f32.mrb[0].mxu0
        %2162 = vmatprep.mubr.f32.mxu0 0.0
        %2163 = vmatmul.mubr.f32.gmra.mrb[0].mxu0 %v1607
        %v2164 = vpop.f32.mrb[0].mxu0
        %v2165 = vadd.f32 0.0, %v2164
        %v2166 = vpop.f32.mrb[0].mxu0
        %2167 = vdwg.mxu0
        %v2169 = vsel %vm821, %v2077, 0
        %2171 = vmatprep.subr.mxu0 0.0
        %2172 = vmatpush1.msra.mxu0 %v2067
        %2173 = vmatprep.subr.mxu0 0.0
        %2174 = vmatpush1.msra.mxu0 %v2068
        %2175 = vmatprep.subr.mxu0 0.0
        %2176 = vmatpush1.msra.mxu0 %v2069
        %2177 = vmatprep.subr.mxu0 0.0
        %2178 = vmatpush1.msra.mxu0 %v2070
        %2179 = vmatprep.subr.mxu0 0.0
        %2180 = vmatpush1.msra.mxu0 %v2071
        %2181 = vmatprep.subr.mxu0 0.0
        %2182 = vmatpush1.msra.mxu0 %v2072
        %2183 = vmatprep.subr.mxu0 0.0
        %2184 = vmatpush1.msra.mxu0 %v2073
        %2185 = vmatprep.subr.mxu0 0.0
        %2186 = vmatpush1.msra.mxu0 %v2074
        %2187 = vmatprep.subr.mxu0 0.0
        %2188 = vmatpush1.msra.mxu0 %v2075
        %2189 = vmatprep.subr.mxu0 0.0
        %2190 = vmatpush1.msra.mxu0 %v2076
        %2191 = vmatprep.subr.mxu0 0.0
        %2192 = vmatpush1.msra.mxu0 %v2169
        %2193 = vmatprep.subr.mxu0 0.0
        %2194 = vmatpush1.msra.mxu0 0.0
        %2195 = vmatprep.subr.mxu0 0.0
        %2196 = vmatpush1.msra.mxu0 0.0
        %2197 = vmatprep.subr.mxu0 0.0
        %2198 = vmatpush1.msra.mxu0 0.0
        %2199 = vmatprep.subr.mxu0 0.0
        %2200 = vmatpush1.msra.mxu0 0.0
        %2201 = vmatprep.subr.mxu0 0.0
        %2202 = vmatpush1.msra.mxu0 0.0
        %2203 = vmatprep.subr.mxu0 0.0
        %2204 = vmatpush1.msra.mxu0 0.0
        %2205 = vmatprep.subr.mxu0 0.0
        %2206 = vmatpush1.msra.mxu0 0.0
        %2207 = vmatprep.subr.mxu0 0.0
        %2208 = vmatpush1.msra.mxu0 0.0
        %2209 = vmatprep.subr.mxu0 0.0
        %2210 = vmatpush1.msra.mxu0 0.0
        %2211 = vmatprep.subr.mxu0 0.0
        %2212 = vmatpush1.msra.mxu0 0.0
        %2213 = vmatprep.subr.mxu0 0.0
        %2214 = vmatpush1.msra.mxu0 0.0
        %2215 = vmatprep.subr.mxu0 0.0
        %2216 = vmatpush1.msra.mxu0 0.0
        %2217 = vmatprep.subr.mxu0 0.0
        %2218 = vmatpush1.msra.mxu0 0.0
        %2219 = vmatprep.subr.mxu0 0.0
        %2220 = vmatpush1.msra.mxu0 0.0
        %2221 = vmatprep.subr.mxu0 0.0
        %2222 = vmatpush1.msra.mxu0 0.0
        %2223 = vmatprep.subr.mxu0 0.0
        %2224 = vmatpush1.msra.mxu0 0.0
        %2225 = vmatprep.subr.mxu0 0.0
        %2226 = vmatpush1.msra.mxu0 0.0
        %2227 = vmatprep.subr.mxu0 0.0
        %2228 = vmatpush1.msra.mxu0 0.0
        %2229 = vmatprep.subr.mxu0 0.0
        %2230 = vmatpush1.msra.mxu0 0.0
        %2231 = vmatprep.subr.mxu0 0.0
        %2232 = vmatpush1.msra.mxu0 0.0
        %2233 = vmatprep.subr.mxu0 0.0
        %2234 = vmatpush1.msra.mxu0 0.0
        %2235 = vmatprep.mubr.f32.mxu0 0.0
        %2236 = vmatmul.mubr.f32.gmra.mrb[0].mxu0 %v1687
        %v2237 = vpop.f32.mrb[0].mxu0
        %v2238 = vadd.f32 %v2160, %v2237
        %v2239 = vpop.f32.mrb[0].mxu0
        %2240 = vmatprep.mubr.f32.mxu0 0.0
        %2241 = vmatmul.mubr.f32.gmra.mrb[0].mxu0 %v1689
        %v2242 = vpop.f32.mrb[0].mxu0
        %v2243 = vadd.f32 %v2165, %v2242
        %v2244 = vpop.f32.mrb[0].mxu0
        %2245 = vdwg.mxu0
        %s2246 = scalar_lea.vmem %s4, 616
        %v2247 = vld [vmem:[%s2246] sm:$0xff]
        %v2248 = vld [vmem:[%s2246 + $0x8] sm:$0xff]
        %v2249 = vld [vmem:[%s2246 + $0x10] sm:$0xff]
        %v2250 = vld [vmem:[%s2246 + $0x18] sm:$0xff]
        %v2251 = vld [vmem:[%s2246 + $0x20] sm:$0xff]
        %v2252 = vld [vmem:[%s2246 + $0x28] sm:$0xff]
        %v2253 = vld [vmem:[%s2246 + $0x30] sm:$0xff]
        %v2254 = vld [vmem:[%s2246 + $0x38] sm:$0xff]
        %v2255 = vld [vmem:[%s2246 + $0x40] sm:$0xff]
        %v2256 = vld [vmem:[%s2246 + $0x48] sm:$0xff]
        %v2257 = vld [vmem:[%s2246 + $0x50] sm:$0xf]
        %v2259 = vsel %vm821, %v2257, 0
        %2261 = vmatprep.subr.mxu0 0.0
        %2262 = vmatpush1.msra.mxu0 %v2247
        %2263 = vmatprep.subr.mxu0 0.0
        %2264 = vmatpush1.msra.mxu0 %v2248
        %2265 = vmatprep.subr.mxu0 0.0
        %2266 = vmatpush1.msra.mxu0 %v2249
        %2267 = vmatprep.subr.mxu0 0.0
        %2268 = vmatpush1.msra.mxu0 %v2250
        %2269 = vmatprep.subr.mxu0 0.0
        %2270 = vmatpush1.msra.mxu0 %v2251
        %2271 = vmatprep.subr.mxu0 0.0
        %2272 = vmatpush1.msra.mxu0 %v2252
        %2273 = vmatprep.subr.mxu0 0.0
        %2274 = vmatpush1.msra.mxu0 %v2253
        %2275 = vmatprep.subr.mxu0 0.0
        %2276 = vmatpush1.msra.mxu0 %v2254
        %2277 = vmatprep.subr.mxu0 0.0
        %2278 = vmatpush1.msra.mxu0 %v2255
        %2279 = vmatprep.subr.mxu0 0.0
        %2280 = vmatpush1.msra.mxu0 %v2256
        %2281 = vmatprep.subr.mxu0 0.0
        %2282 = vmatpush1.msra.mxu0 %v2259
        %2283 = vmatprep.subr.mxu0 0.0
        %2284 = vmatpush1.msra.mxu0 0.0
        %2285 = vmatprep.subr.mxu0 0.0
        %2286 = vmatpush1.msra.mxu0 0.0
        %2287 = vmatprep.subr.mxu0 0.0
        %2288 = vmatpush1.msra.mxu0 0.0
        %2289 = vmatprep.subr.mxu0 0.0
        %2290 = vmatpush1.msra.mxu0 0.0
        %2291 = vmatprep.subr.mxu0 0.0
        %2292 = vmatpush1.msra.mxu0 0.0
        %2293 = vmatprep.subr.mxu0 0.0
        %2294 = vmatpush1.msra.mxu0 0.0
        %2295 = vmatprep.subr.mxu0 0.0
        %2296 = vmatpush1.msra.mxu0 0.0
        %2297 = vmatprep.subr.mxu0 0.0
        %2298 = vmatpush1.msra.mxu0 0.0
        %2299 = vmatprep.subr.mxu0 0.0
        %2300 = vmatpush1.msra.mxu0 0.0
        %2301 = vmatprep.subr.mxu0 0.0
        %2302 = vmatpush1.msra.mxu0 0.0
        %2303 = vmatprep.subr.mxu0 0.0
        %2304 = vmatpush1.msra.mxu0 0.0
        %2305 = vmatprep.subr.mxu0 0.0
        %2306 = vmatpush1.msra.mxu0 0.0
        %2307 = vmatprep.subr.mxu0 0.0
        %2308 = vmatpush1.msra.mxu0 0.0
        %2309 = vmatprep.subr.mxu0 0.0
        %2310 = vmatpush1.msra.mxu0 0.0
        %2311 = vmatprep.subr.mxu0 0.0
        %2312 = vmatpush1.msra.mxu0 0.0
        %2313 = vmatprep.subr.mxu0 0.0
        %2314 = vmatpush1.msra.mxu0 0.0
        %2315 = vmatprep.subr.mxu0 0.0
        %2316 = vmatpush1.msra.mxu0 0.0
        %2317 = vmatprep.subr.mxu0 0.0
        %2318 = vmatpush1.msra.mxu0 0.0
        %2319 = vmatprep.subr.mxu0 0.0
        %2320 = vmatpush1.msra.mxu0 0.0
        %2321 = vmatprep.subr.mxu0 0.0
        %2322 = vmatpush1.msra.mxu0 0.0
        %2323 = vmatprep.subr.mxu0 0.0
        %2324 = vmatpush1.msra.mxu0 0.0
        %2325 = vmatprep.mubr.f32.mxu0 0.0
        %2326 = vmatmul.mubr.f32.gmra.mrb[0].mxu0 %v1784
        %v2327 = vpop.f32.mrb[0].mxu0
        %v2328 = vadd.f32 0.0, %v2327
        %v2329 = vpop.f32.mrb[0].mxu0
        %2330 = vmatprep.mubr.f32.mxu0 0.0
        %2331 = vmatmul.mubr.f32.gmra.mrb[0].mxu0 %v1786
        %v2332 = vpop.f32.mrb[0].mxu0
        %v2333 = vadd.f32 0.0, %v2332
        %v2334 = vpop.f32.mrb[0].mxu0
        %2335 = vdwg.mxu0
        %v2336 = vadd.f32 %v2238, %v2328
        %v2337 = vadd.f32 %v2243, %v2333
        %s2338 = scalar_lea.vmem %s4, 704
        %v2339 = vld [vmem:[%s2338] sm:$0xff]
        %v2340 = vld [vmem:[%s2338 + $0x8] sm:$0xff]
        %v2341 = vld [vmem:[%s2338 + $0x10] sm:$0xff]
        %v2342 = vld [vmem:[%s2338 + $0x18] sm:$0xff]
        %v2343 = vld [vmem:[%s2338 + $0x20] sm:$0xff]
        %v2344 = vld [vmem:[%s2338 + $0x28] sm:$0xff]
        %v2345 = vld [vmem:[%s2338 + $0x30] sm:$0xff]
        %v2346 = vld [vmem:[%s2338 + $0x38] sm:$0xff]
        %v2347 = vld [vmem:[%s2338 + $0x40] sm:$0xff]
        %v2348 = vld [vmem:[%s2338 + $0x48] sm:$0xff]
        %v2349 = vld [vmem:[%s2338 + $0x50] sm:$0xf]
        %v2351 = vsel %vm821, %v2349, 0
        %2353 = vmatprep.subr.mxu0 0.0
        %2354 = vmatpush1.msra.mxu0 %v2339
        %2355 = vmatprep.subr.mxu0 0.0
        %2356 = vmatpush1.msra.mxu0 %v2340
        %2357 = vmatprep.subr.mxu0 0.0
        %2358 = vmatpush1.msra.mxu0 %v2341
        %2359 = vmatprep.subr.mxu0 0.0
        %2360 = vmatpush1.msra.mxu0 %v2342
        %2361 = vmatprep.subr.mxu0 0.0
        %2362 = vmatpush1.msra.mxu0 %v2343
        %2363 = vmatprep.subr.mxu0 0.0
        %2364 = vmatpush1.msra.mxu0 %v2344
        %2365 = vmatprep.subr.mxu0 0.0
        %2366 = vmatpush1.msra.mxu0 %v2345
        %2367 = vmatprep.subr.mxu0 0.0
        %2368 = vmatpush1.msra.mxu0 %v2346
        %2369 = vmatprep.subr.mxu0 0.0
        %2370 = vmatpush1.msra.mxu0 %v2347
        %2371 = vmatprep.subr.mxu0 0.0
        %2372 = vmatpush1.msra.mxu0 %v2348
        %2373 = vmatprep.subr.mxu0 0.0
        %2374 = vmatpush1.msra.mxu0 %v2351
        %2375 = vmatprep.subr.mxu0 0.0
        %2376 = vmatpush1.msra.mxu0 0.0
        %2377 = vmatprep.subr.mxu0 0.0
        %2378 = vmatpush1.msra.mxu0 0.0
        %2379 = vmatprep.subr.mxu0 0.0
        %2380 = vmatpush1.msra.mxu0 0.0
        %2381 = vmatprep.subr.mxu0 0.0
        %2382 = vmatpush1.msra.mxu0 0.0
        %2383 = vmatprep.subr.mxu0 0.0
        %2384 = vmatpush1.msra.mxu0 0.0
        %2385 = vmatprep.subr.mxu0 0.0
        %2386 = vmatpush1.msra.mxu0 0.0
        %2387 = vmatprep.subr.mxu0 0.0
        %2388 = vmatpush1.msra.mxu0 0.0
        %2389 = vmatprep.subr.mxu0 0.0
        %2390 = vmatpush1.msra.mxu0 0.0
        %2391 = vmatprep.subr.mxu0 0.0
        %2392 = vmatpush1.msra.mxu0 0.0
        %2393 = vmatprep.subr.mxu0 0.0
        %2394 = vmatpush1.msra.mxu0 0.0
        %2395 = vmatprep.subr.mxu0 0.0
        %2396 = vmatpush1.msra.mxu0 0.0
        %2397 = vmatprep.subr.mxu0 0.0
        %2398 = vmatpush1.msra.mxu0 0.0
        %2399 = vmatprep.subr.mxu0 0.0
        %2400 = vmatpush1.msra.mxu0 0.0
        %2401 = vmatprep.subr.mxu0 0.0
        %2402 = vmatpush1.msra.mxu0 0.0
        %2403 = vmatprep.subr.mxu0 0.0
        %2404 = vmatpush1.msra.mxu0 0.0
        %2405 = vmatprep.subr.mxu0 0.0
        %2406 = vmatpush1.msra.mxu0 0.0
        %2407 = vmatprep.subr.mxu0 0.0
        %2408 = vmatpush1.msra.mxu0 0.0
        %2409 = vmatprep.subr.mxu0 0.0
        %2410 = vmatpush1.msra.mxu0 0.0
        %2411 = vmatprep.subr.mxu0 0.0
        %2412 = vmatpush1.msra.mxu0 0.0
        %2413 = vmatprep.subr.mxu0 0.0
        %2414 = vmatpush1.msra.mxu0 0.0
        %2415 = vmatprep.subr.mxu0 0.0
        %2416 = vmatpush1.msra.mxu0 0.0
        %2417 = vmatprep.mubr.f32.mxu0 0.0
        %2418 = vmatmul.mubr.f32.gmra.mrb[0].mxu0 %v1883
        %v2419 = vpop.f32.mrb[0].mxu0
        %v2420 = vadd.f32 0.0, %v2419
        %v2421 = vpop.f32.mrb[0].mxu0
        %2422 = vmatprep.mubr.f32.mxu0 0.0
        %2423 = vmatmul.mubr.f32.gmra.mrb[0].mxu0 %v1885
        %v2424 = vpop.f32.mrb[0].mxu0
        %v2425 = vadd.f32 0.0, %v2424
        %v2426 = vpop.f32.mrb[0].mxu0
        %2427 = vdwg.mxu0
        %v2428 = vadd.f32 %v2336, %v2420
        %v2429 = vadd.f32 %v2337, %v2425
        %s2430 = scalar_lea.vmem %s4, 792
        %v2431 = vld [vmem:[%s2430] sm:$0xff]
        %v2432 = vld [vmem:[%s2430 + $0x8] sm:$0xff]
        %v2433 = vld [vmem:[%s2430 + $0x10] sm:$0xff]
        %v2434 = vld [vmem:[%s2430 + $0x18] sm:$0xff]
        %v2435 = vld [vmem:[%s2430 + $0x20] sm:$0xff]
        %v2436 = vld [vmem:[%s2430 + $0x28] sm:$0xff]
        %v2437 = vld [vmem:[%s2430 + $0x30] sm:$0xff]
        %v2438 = vld [vmem:[%s2430 + $0x38] sm:$0xff]
        %v2439 = vld [vmem:[%s2430 + $0x40] sm:$0xff]
        %v2440 = vld [vmem:[%s2430 + $0x48] sm:$0xff]
        %v2441 = vld [vmem:[%s2430 + $0x50] sm:$0xf]
        %v2443 = vsel %vm821, %v2441, 0
        %2445 = vmatprep.subr.mxu0 0.0
        %2446 = vmatpush1.msra.mxu0 %v2431
        %2447 = vmatprep.subr.mxu0 0.0
        %2448 = vmatpush1.msra.mxu0 %v2432
        %2449 = vmatprep.subr.mxu0 0.0
        %2450 = vmatpush1.msra.mxu0 %v2433
        %2451 = vmatprep.subr.mxu0 0.0
        %2452 = vmatpush1.msra.mxu0 %v2434
        %2453 = vmatprep.subr.mxu0 0.0
        %2454 = vmatpush1.msra.mxu0 %v2435
        %2455 = vmatprep.subr.mxu0 0.0
        %2456 = vmatpush1.msra.mxu0 %v2436
        %2457 = vmatprep.subr.mxu0 0.0
        %2458 = vmatpush1.msra.mxu0 %v2437
        %2459 = vmatprep.subr.mxu0 0.0
        %2460 = vmatpush1.msra.mxu0 %v2438
        %2461 = vmatprep.subr.mxu0 0.0
        %2462 = vmatpush1.msra.mxu0 %v2439
        %2463 = vmatprep.subr.mxu0 0.0
        %2464 = vmatpush1.msra.mxu0 %v2440
        %2465 = vmatprep.subr.mxu0 0.0
        %2466 = vmatpush1.msra.mxu0 %v2443
        %2467 = vmatprep.subr.mxu0 0.0
        %2468 = vmatpush1.msra.mxu0 0.0
        %2469 = vmatprep.subr.mxu0 0.0
        %2470 = vmatpush1.msra.mxu0 0.0
        %2471 = vmatprep.subr.mxu0 0.0
        %2472 = vmatpush1.msra.mxu0 0.0
        %2473 = vmatprep.subr.mxu0 0.0
        %2474 = vmatpush1.msra.mxu0 0.0
        %2475 = vmatprep.subr.mxu0 0.0
        %2476 = vmatpush1.msra.mxu0 0.0
        %2477 = vmatprep.subr.mxu0 0.0
        %2478 = vmatpush1.msra.mxu0 0.0
        %2479 = vmatprep.subr.mxu0 0.0
        %2480 = vmatpush1.msra.mxu0 0.0
        %2481 = vmatprep.subr.mxu0 0.0
        %2482 = vmatpush1.msra.mxu0 0.0
        %2483 = vmatprep.subr.mxu0 0.0
        %2484 = vmatpush1.msra.mxu0 0.0
        %2485 = vmatprep.subr.mxu0 0.0
        %2486 = vmatpush1.msra.mxu0 0.0
        %2487 = vmatprep.subr.mxu0 0.0
        %2488 = vmatpush1.msra.mxu0 0.0
        %2489 = vmatprep.subr.mxu0 0.0
        %2490 = vmatpush1.msra.mxu0 0.0
        %2491 = vmatprep.subr.mxu0 0.0
        %2492 = vmatpush1.msra.mxu0 0.0
        %2493 = vmatprep.subr.mxu0 0.0
        %2494 = vmatpush1.msra.mxu0 0.0
        %2495 = vmatprep.subr.mxu0 0.0
        %2496 = vmatpush1.msra.mxu0 0.0
        %2497 = vmatprep.subr.mxu0 0.0
        %2498 = vmatpush1.msra.mxu0 0.0
        %2499 = vmatprep.subr.mxu0 0.0
        %2500 = vmatpush1.msra.mxu0 0.0
        %2501 = vmatprep.subr.mxu0 0.0
        %2502 = vmatpush1.msra.mxu0 0.0
        %2503 = vmatprep.subr.mxu0 0.0
        %2504 = vmatpush1.msra.mxu0 0.0
        %2505 = vmatprep.subr.mxu0 0.0
        %2506 = vmatpush1.msra.mxu0 0.0
        %2507 = vmatprep.subr.mxu0 0.0
        %2508 = vmatpush1.msra.mxu0 0.0
        %2509 = vmatprep.mubr.f32.mxu0 0.0
        %2510 = vmatmul.mubr.f32.gmra.mrb[0].mxu0 %v1982
        %v2511 = vpop.f32.mrb[0].mxu0
        %v2512 = vadd.f32 0.0, %v2511
        %v2513 = vpop.f32.mrb[0].mxu0
        %2514 = vmatprep.mubr.f32.mxu0 0.0
        %2515 = vmatmul.mubr.f32.gmra.mrb[0].mxu0 %v1984
        %v2516 = vpop.f32.mrb[0].mxu0
        %v2517 = vadd.f32 0.0, %v2516
        %v2518 = vpop.f32.mrb[0].mxu0
        %2519 = vdwg.mxu0
        %v2520 = vadd.f32 %v2428, %v2512
        %v2521 = vadd.f32 %v2429, %v2517
        %v2522 = vmax.f32 %v2064, %v2520
        %v2523 = vmax.f32 %v2065, %v2521
        %v2524 = vld [vmem:[%s5] sm:$0x1f]
        %vm2525 = vcmask 80896
        %v2527 = vsel %vm2525, %v2524, 0
        %vm2529 = vcmask 1041408
        %v2531 = vsel %vm2529, %v2523, 0
        %2533 = vmatprep.subr.mxu0 0.0
        %2534 = vmatpush1.msra.mxu0 %v2522
        %2535 = vmatprep.subr.mxu0 0.0
        %2536 = vmatpush1.msra.mxu0 %v2531
        %2537 = vmatprep.subr.mxu0 0.0
        %2538 = vmatpush1.msra.mxu0 0.0
        %2539 = vmatprep.subr.mxu0 0.0
        %2540 = vmatpush1.msra.mxu0 0.0
        %2541 = vmatprep.subr.mxu0 0.0
        %2542 = vmatpush1.msra.mxu0 0.0
        %2543 = vmatprep.subr.mxu0 0.0
        %2544 = vmatpush1.msra.mxu0 0.0
        %2545 = vmatprep.subr.mxu0 0.0
        %2546 = vmatpush1.msra.mxu0 0.0
        %2547 = vmatprep.subr.mxu0 0.0
        %2548 = vmatpush1.msra.mxu0 0.0
        %2549 = vmatprep.subr.mxu0 0.0
        %2550 = vmatpush1.msra.mxu0 0.0
        %2551 = vmatprep.subr.mxu0 0.0
        %2552 = vmatpush1.msra.mxu0 0.0
        %2553 = vmatprep.subr.mxu0 0.0
        %2554 = vmatpush1.msra.mxu0 0.0
        %2555 = vmatprep.subr.mxu0 0.0
        %2556 = vmatpush1.msra.mxu0 0.0
        %2557 = vmatprep.subr.mxu0 0.0
        %2558 = vmatpush1.msra.mxu0 0.0
        %2559 = vmatprep.subr.mxu0 0.0
        %2560 = vmatpush1.msra.mxu0 0.0
        %2561 = vmatprep.subr.mxu0 0.0
        %2562 = vmatpush1.msra.mxu0 0.0
        %2563 = vmatprep.subr.mxu0 0.0
        %2564 = vmatpush1.msra.mxu0 0.0
        %2565 = vmatprep.subr.mxu0 0.0
        %2566 = vmatpush1.msra.mxu0 0.0
        %2567 = vmatprep.subr.mxu0 0.0
        %2568 = vmatpush1.msra.mxu0 0.0
        %2569 = vmatprep.subr.mxu0 0.0
        %2570 = vmatpush1.msra.mxu0 0.0
        %2571 = vmatprep.subr.mxu0 0.0
        %2572 = vmatpush1.msra.mxu0 0.0
        %2573 = vmatprep.subr.mxu0 0.0
        %2574 = vmatpush1.msra.mxu0 0.0
        %2575 = vmatprep.subr.mxu0 0.0
        %2576 = vmatpush1.msra.mxu0 0.0
        %2577 = vmatprep.subr.mxu0 0.0
        %2578 = vmatpush1.msra.mxu0 0.0
        %2579 = vmatprep.subr.mxu0 0.0
        %2580 = vmatpush1.msra.mxu0 0.0
        %2581 = vmatprep.subr.mxu0 0.0
        %2582 = vmatpush1.msra.mxu0 0.0
        %2583 = vmatprep.subr.mxu0 0.0
        %2584 = vmatpush1.msra.mxu0 0.0
        %2585 = vmatprep.subr.mxu0 0.0
        %2586 = vmatpush1.msra.mxu0 0.0
        %2587 = vmatprep.subr.mxu0 0.0
        %2588 = vmatpush1.msra.mxu0 0.0
        %2589 = vmatprep.subr.mxu0 0.0
        %2590 = vmatpush1.msra.mxu0 0.0
        %2591 = vmatprep.subr.mxu0 0.0
        %2592 = vmatpush1.msra.mxu0 0.0
        %2593 = vmatprep.subr.mxu0 0.0
        %2594 = vmatpush1.msra.mxu0 0.0
        %2595 = vmatprep.subr.mxu0 0.0
        %2596 = vmatpush1.msra.mxu0 0.0
        %2597 = vmatprep.mubr.f32.mxu0 0.0
        %2598 = vmatmul.mubr.f32.gmra.mrb[0].mxu0 %v2527
        %v2599 = vpop.f32.mrb[0].mxu0
        %v2600 = vadd.f32 0.0, %v2599
        %v2601 = vpop.f32.mrb[0].mxu0
        %2602 = vdwg.mxu0
        %s2603 = scalar_lea.vmem %s5, 8
        %v2604 = vld [vmem:[%s2603] sm:$0x1f]
        %v2606 = vsel %vm2525, %v2604, 0
        %2608 = vmatprep.subr.mxu0 0.0
        %2609 = vmatpush1.msra.mxu0 %v2522
        %2610 = vmatprep.subr.mxu0 0.0
        %2611 = vmatpush1.msra.mxu0 %v2531
        %2612 = vmatprep.subr.mxu0 0.0
        %2613 = vmatpush1.msra.mxu0 0.0
        %2614 = vmatprep.subr.mxu0 0.0
        %2615 = vmatpush1.msra.mxu0 0.0
        %2616 = vmatprep.subr.mxu0 0.0
        %2617 = vmatpush1.msra.mxu0 0.0
        %2618 = vmatprep.subr.mxu0 0.0
        %2619 = vmatpush1.msra.mxu0 0.0
        %2620 = vmatprep.subr.mxu0 0.0
        %2621 = vmatpush1.msra.mxu0 0.0
        %2622 = vmatprep.subr.mxu0 0.0
        %2623 = vmatpush1.msra.mxu0 0.0
        %2624 = vmatprep.subr.mxu0 0.0
        %2625 = vmatpush1.msra.mxu0 0.0
        %2626 = vmatprep.subr.mxu0 0.0
        %2627 = vmatpush1.msra.mxu0 0.0
        %2628 = vmatprep.subr.mxu0 0.0
        %2629 = vmatpush1.msra.mxu0 0.0
        %2630 = vmatprep.subr.mxu0 0.0
        %2631 = vmatpush1.msra.mxu0 0.0
        %2632 = vmatprep.subr.mxu0 0.0
        %2633 = vmatpush1.msra.mxu0 0.0
        %2634 = vmatprep.subr.mxu0 0.0
        %2635 = vmatpush1.msra.mxu0 0.0
        %2636 = vmatprep.subr.mxu0 0.0
        %2637 = vmatpush1.msra.mxu0 0.0
        %2638 = vmatprep.subr.mxu0 0.0
        %2639 = vmatpush1.msra.mxu0 0.0
        %2640 = vmatprep.subr.mxu0 0.0
        %2641 = vmatpush1.msra.mxu0 0.0
        %2642 = vmatprep.subr.mxu0 0.0
        %2643 = vmatpush1.msra.mxu0 0.0
        %2644 = vmatprep.subr.mxu0 0.0
        %2645 = vmatpush1.msra.mxu0 0.0
        %2646 = vmatprep.subr.mxu0 0.0
        %2647 = vmatpush1.msra.mxu0 0.0
        %2648 = vmatprep.subr.mxu0 0.0
        %2649 = vmatpush1.msra.mxu0 0.0
        %2650 = vmatprep.subr.mxu0 0.0
        %2651 = vmatpush1.msra.mxu0 0.0
        %2652 = vmatprep.subr.mxu0 0.0
        %2653 = vmatpush1.msra.mxu0 0.0
        %2654 = vmatprep.subr.mxu0 0.0
        %2655 = vmatpush1.msra.mxu0 0.0
        %2656 = vmatprep.subr.mxu0 0.0
        %2657 = vmatpush1.msra.mxu0 0.0
        %2658 = vmatprep.subr.mxu0 0.0
        %2659 = vmatpush1.msra.mxu0 0.0
        %2660 = vmatprep.subr.mxu0 0.0
        %2661 = vmatpush1.msra.mxu0 0.0
        %2662 = vmatprep.subr.mxu0 0.0
        %2663 = vmatpush1.msra.mxu0 0.0
        %2664 = vmatprep.subr.mxu0 0.0
        %2665 = vmatpush1.msra.mxu0 0.0
        %2666 = vmatprep.subr.mxu0 0.0
        %2667 = vmatpush1.msra.mxu0 0.0
        %2668 = vmatprep.subr.mxu0 0.0
        %2669 = vmatpush1.msra.mxu0 0.0
        %2670 = vmatprep.subr.mxu0 0.0
        %2671 = vmatpush1.msra.mxu0 0.0
        %2672 = vmatprep.mubr.f32.mxu0 0.0
        %2673 = vmatmul.mubr.f32.gmra.mrb[0].mxu0 %v2606
        %v2674 = vpop.f32.mrb[0].mxu0
        %v2675 = vadd.f32 0.0, %v2674
        %v2676 = vpop.f32.mrb[0].mxu0
        %2677 = vdwg.mxu0
        %v2678 = vmax.f32 %v2600, %v2675
        %v2679 = vld [vmem:[%s6] sm:$0x1]
        %v2681 = vlaneseq
        %v2682 = vshrl.u32 %v2681, 7
        %v2683 = vsub.s32 0, %v2682
        %v2684 = vrot.slane %v2679, %v2683
        %v2686 = vadd.f32 %v2678, %v2684
        %v2687 = vmax.f32 %v2686, 0.0
        %v2688 = vld [vmem:[%s7] sm:$0xff]
        %v2689 = vld [vmem:[%s7 + $0x8] sm:$0xff]
        %v2690 = vld [vmem:[%s7 + $0x10] sm:$0xff]
        %v2691 = vld [vmem:[%s7 + $0x18] sm:$0xff]
        %v2692 = vld [vmem:[%s7 + $0x20] sm:$0xff]
        %v2693 = vld [vmem:[%s7 + $0x28] sm:$0xff]
        %v2694 = vld [vmem:[%s7 + $0x30] sm:$0xff]
        %v2695 = vld [vmem:[%s7 + $0x38] sm:$0xff]
        %v2696 = vld [vmem:[%s7 + $0x40] sm:$0xff]
        %v2697 = vld [vmem:[%s7 + $0x48] sm:$0xff]
        %s2698 = scalar_lea.vmem %s7, 80
        %v2699 = vld [vmem:[%s2698] sm:$0xff]
        %v2700 = vld [vmem:[%s2698 + $0x8] sm:$0xff]
        %v2701 = vld [vmem:[%s2698 + $0x10] sm:$0xff]
        %v2702 = vld [vmem:[%s2698 + $0x18] sm:$0xff]
        %v2703 = vld [vmem:[%s2698 + $0x20] sm:$0xff]
        %v2704 = vld [vmem:[%s2698 + $0x28] sm:$0xff]
        %v2705 = vld [vmem:[%s2698 + $0x30] sm:$0xff]
        %v2706 = vld [vmem:[%s2698 + $0x38] sm:$0xff]
        %v2707 = vld [vmem:[%s2698 + $0x40] sm:$0xff]
        %v2708 = vld [vmem:[%s2698 + $0x48] sm:$0xff]
        %v2710 = vrot.slane %v2687, 1
        %vm2711 = vcmask 654336
        %v2712 = vsel %vm2711, %v2710, 0
        %2714 = vmatprep.subr.mxu0 0.0
        %2715 = vmatpush1.msra.mxu0 %v2699
        %2716 = vmatprep.subr.mxu0 0.0
        %2717 = vmatpush1.msra.mxu0 %v2700
        %2718 = vmatprep.subr.mxu0 0.0
        %2719 = vmatpush1.msra.mxu0 %v2701
        %2720 = vmatprep.subr.mxu0 0.0
        %2721 = vmatpush1.msra.mxu0 %v2702
        %2722 = vmatprep.subr.mxu0 0.0
        %2723 = vmatpush1.msra.mxu0 %v2703
        %2724 = vmatprep.subr.mxu0 0.0
        %2725 = vmatpush1.msra.mxu0 %v2704
        %2726 = vmatprep.subr.mxu0 0.0
        %2727 = vmatpush1.msra.mxu0 %v2705
        %2728 = vmatprep.subr.mxu0 0.0
        %2729 = vmatpush1.msra.mxu0 %v2706
        %2730 = vmatprep.subr.mxu0 0.0
        %2731 = vmatpush1.msra.mxu0 %v2707
        %2732 = vmatprep.subr.mxu0 0.0
        %2733 = vmatpush1.msra.mxu0 %v2708
        %2734 = vmatprep.subr.mxu0 0.0
        %2735 = vmatpush1.msra.mxu0 0.0
        %2736 = vmatprep.subr.mxu0 0.0
        %2737 = vmatpush1.msra.mxu0 0.0
        %2738 = vmatprep.subr.mxu0 0.0
        %2739 = vmatpush1.msra.mxu0 0.0
        %2740 = vmatprep.subr.mxu0 0.0
        %2741 = vmatpush1.msra.mxu0 0.0
        %2742 = vmatprep.subr.mxu0 0.0
        %2743 = vmatpush1.msra.mxu0 0.0
        %2744 = vmatprep.subr.mxu0 0.0
        %2745 = vmatpush1.msra.mxu0 0.0
        %2746 = vmatprep.subr.mxu0 0.0
        %2747 = vmatpush1.msra.mxu0 0.0
        %2748 = vmatprep.subr.mxu0 0.0
        %2749 = vmatpush1.msra.mxu0 0.0
        %2750 = vmatprep.subr.mxu0 0.0
        %2751 = vmatpush1.msra.mxu0 0.0
        %2752 = vmatprep.subr.mxu0 0.0
        %2753 = vmatpush1.msra.mxu0 0.0
        %2754 = vmatprep.subr.mxu0 0.0
        %2755 = vmatpush1.msra.mxu0 0.0
        %2756 = vmatprep.subr.mxu0 0.0
        %2757 = vmatpush1.msra.mxu0 0.0
        %2758 = vmatprep.subr.mxu0 0.0
        %2759 = vmatpush1.msra.mxu0 0.0
        %2760 = vmatprep.subr.mxu0 0.0
        %2761 = vmatpush1.msra.mxu0 0.0
        %2762 = vmatprep.subr.mxu0 0.0
        %2763 = vmatpush1.msra.mxu0 0.0
        %2764 = vmatprep.subr.mxu0 0.0
        %2765 = vmatpush1.msra.mxu0 0.0
        %2766 = vmatprep.subr.mxu0 0.0
        %2767 = vmatpush1.msra.mxu0 0.0
        %2768 = vmatprep.subr.mxu0 0.0
        %2769 = vmatpush1.msra.mxu0 0.0
        %2770 = vmatprep.subr.mxu0 0.0
        %2771 = vmatpush1.msra.mxu0 0.0
        %2772 = vmatprep.subr.mxu0 0.0
        %2773 = vmatpush1.msra.mxu0 0.0
        %2774 = vmatprep.subr.mxu0 0.0
        %2775 = vmatpush1.msra.mxu0 0.0
        %2776 = vmatprep.subr.mxu0 0.0
        %2777 = vmatpush1.msra.mxu0 0.0
        %2778 = vmatprep.mubr.f32.mxu0 0.0
        %2779 = vmatmul.mubr.f32.gmra.mrb[0].mxu0 %v2712
        %v2780 = vpop.f32.mrb[0].mxu0
        %v2781 = vadd.f32 0.0, %v2780
        %v2782 = vpop.f32.mrb[0].mxu0
        %2783 = vdwg.mxu0
        %v2784 = vsel %vm2711, %v2687, 0
        %2786 = vmatprep.subr.mxu0 0.0
        %2787 = vmatpush1.msra.mxu0 %v2688
        %2788 = vmatprep.subr.mxu0 0.0
        %2789 = vmatpush1.msra.mxu0 %v2689
        %2790 = vmatprep.subr.mxu0 0.0
        %2791 = vmatpush1.msra.mxu0 %v2690
        %2792 = vmatprep.subr.mxu0 0.0
        %2793 = vmatpush1.msra.mxu0 %v2691
        %2794 = vmatprep.subr.mxu0 0.0
        %2795 = vmatpush1.msra.mxu0 %v2692
        %2796 = vmatprep.subr.mxu0 0.0
        %2797 = vmatpush1.msra.mxu0 %v2693
        %2798 = vmatprep.subr.mxu0 0.0
        %2799 = vmatpush1.msra.mxu0 %v2694
        %2800 = vmatprep.subr.mxu0 0.0
        %2801 = vmatpush1.msra.mxu0 %v2695
        %2802 = vmatprep.subr.mxu0 0.0
        %2803 = vmatpush1.msra.mxu0 %v2696
        %2804 = vmatprep.subr.mxu0 0.0
        %2805 = vmatpush1.msra.mxu0 %v2697
        %2806 = vmatprep.subr.mxu0 0.0
        %2807 = vmatpush1.msra.mxu0 0.0
        %2808 = vmatprep.subr.mxu0 0.0
        %2809 = vmatpush1.msra.mxu0 0.0
        %2810 = vmatprep.subr.mxu0 0.0
        %2811 = vmatpush1.msra.mxu0 0.0
        %2812 = vmatprep.subr.mxu0 0.0
        %2813 = vmatpush1.msra.mxu0 0.0
        %2814 = vmatprep.subr.mxu0 0.0
        %2815 = vmatpush1.msra.mxu0 0.0
        %2816 = vmatprep.subr.mxu0 0.0
        %2817 = vmatpush1.msra.mxu0 0.0
        %2818 = vmatprep.subr.mxu0 0.0
        %2819 = vmatpush1.msra.mxu0 0.0
        %2820 = vmatprep.subr.mxu0 0.0
        %2821 = vmatpush1.msra.mxu0 0.0
        %2822 = vmatprep.subr.mxu0 0.0
        %2823 = vmatpush1.msra.mxu0 0.0
        %2824 = vmatprep.subr.mxu0 0.0
        %2825 = vmatpush1.msra.mxu0 0.0
        %2826 = vmatprep.subr.mxu0 0.0
        %2827 = vmatpush1.msra.mxu0 0.0
        %2828 = vmatprep.subr.mxu0 0.0
        %2829 = vmatpush1.msra.mxu0 0.0
        %2830 = vmatprep.subr.mxu0 0.0
        %2831 = vmatpush1.msra.mxu0 0.0
        %2832 = vmatprep.subr.mxu0 0.0
        %2833 = vmatpush1.msra.mxu0 0.0
        %2834 = vmatprep.subr.mxu0 0.0
        %2835 = vmatpush1.msra.mxu0 0.0
        %2836 = vmatprep.subr.mxu0 0.0
        %2837 = vmatpush1.msra.mxu0 0.0
        %2838 = vmatprep.subr.mxu0 0.0
        %2839 = vmatpush1.msra.mxu0 0.0
        %2840 = vmatprep.subr.mxu0 0.0
        %2841 = vmatpush1.msra.mxu0 0.0
        %2842 = vmatprep.subr.mxu0 0.0
        %2843 = vmatpush1.msra.mxu0 0.0
        %2844 = vmatprep.subr.mxu0 0.0
        %2845 = vmatpush1.msra.mxu0 0.0
        %2846 = vmatprep.subr.mxu0 0.0
        %2847 = vmatpush1.msra.mxu0 0.0
        %2848 = vmatprep.subr.mxu0 0.0
        %2849 = vmatpush1.msra.mxu0 0.0
        %2850 = vmatprep.mubr.f32.mxu0 0.0
        %2851 = vmatmul.mubr.f32.gmra.mrb[0].mxu0 %v2784
        %v2852 = vpop.f32.mrb[0].mxu0
        %v2853 = vadd.f32 %v2781, %v2852
        %v2854 = vpop.f32.mrb[0].mxu0
        %2855 = vdwg.mxu0
        %s2856 = scalar_lea.vmem %s7, 160
        %v2857 = vld [vmem:[%s2856] sm:$0xff]
        %v2858 = vld [vmem:[%s2856 + $0x8] sm:$0xff]
        %v2859 = vld [vmem:[%s2856 + $0x10] sm:$0xff]
        %v2860 = vld [vmem:[%s2856 + $0x18] sm:$0xff]
        %v2861 = vld [vmem:[%s2856 + $0x20] sm:$0xff]
        %v2862 = vld [vmem:[%s2856 + $0x28] sm:$0xff]
        %v2863 = vld [vmem:[%s2856 + $0x30] sm:$0xff]
        %v2864 = vld [vmem:[%s2856 + $0x38] sm:$0xff]
        %v2865 = vld [vmem:[%s2856 + $0x40] sm:$0xff]
        %v2866 = vld [vmem:[%s2856 + $0x48] sm:$0xff]
        %v2867 = vrot.slane %v2687, 2
        %v2868 = vsel %vm2711, %v2867, 0
        %2870 = vmatprep.subr.mxu0 0.0
        %2871 = vmatpush1.msra.mxu0 %v2857
        %2872 = vmatprep.subr.mxu0 0.0
        %2873 = vmatpush1.msra.mxu0 %v2858
        %2874 = vmatprep.subr.mxu0 0.0
        %2875 = vmatpush1.msra.mxu0 %v2859
        %2876 = vmatprep.subr.mxu0 0.0
        %2877 = vmatpush1.msra.mxu0 %v2860
        %2878 = vmatprep.subr.mxu0 0.0
        %2879 = vmatpush1.msra.mxu0 %v2861
        %2880 = vmatprep.subr.mxu0 0.0
        %2881 = vmatpush1.msra.mxu0 %v2862
        %2882 = vmatprep.subr.mxu0 0.0
        %2883 = vmatpush1.msra.mxu0 %v2863
        %2884 = vmatprep.subr.mxu0 0.0
        %2885 = vmatpush1.msra.mxu0 %v2864
        %2886 = vmatprep.subr.mxu0 0.0
        %2887 = vmatpush1.msra.mxu0 %v2865
        %2888 = vmatprep.subr.mxu0 0.0
        %2889 = vmatpush1.msra.mxu0 %v2866
        %2890 = vmatprep.subr.mxu0 0.0
        %2891 = vmatpush1.msra.mxu0 0.0
        %2892 = vmatprep.subr.mxu0 0.0
        %2893 = vmatpush1.msra.mxu0 0.0
        %2894 = vmatprep.subr.mxu0 0.0
        %2895 = vmatpush1.msra.mxu0 0.0
        %2896 = vmatprep.subr.mxu0 0.0
        %2897 = vmatpush1.msra.mxu0 0.0
        %2898 = vmatprep.subr.mxu0 0.0
        %2899 = vmatpush1.msra.mxu0 0.0
        %2900 = vmatprep.subr.mxu0 0.0
        %2901 = vmatpush1.msra.mxu0 0.0
        %2902 = vmatprep.subr.mxu0 0.0
        %2903 = vmatpush1.msra.mxu0 0.0
        %2904 = vmatprep.subr.mxu0 0.0
        %2905 = vmatpush1.msra.mxu0 0.0
        %2906 = vmatprep.subr.mxu0 0.0
        %2907 = vmatpush1.msra.mxu0 0.0
        %2908 = vmatprep.subr.mxu0 0.0
        %2909 = vmatpush1.msra.mxu0 0.0
        %2910 = vmatprep.subr.mxu0 0.0
        %2911 = vmatpush1.msra.mxu0 0.0
        %2912 = vmatprep.subr.mxu0 0.0
        %2913 = vmatpush1.msra.mxu0 0.0
        %2914 = vmatprep.subr.mxu0 0.0
        %2915 = vmatpush1.msra.mxu0 0.0
        %2916 = vmatprep.subr.mxu0 0.0
        %2917 = vmatpush1.msra.mxu0 0.0
        %2918 = vmatprep.subr.mxu0 0.0
        %2919 = vmatpush1.msra.mxu0 0.0
        %2920 = vmatprep.subr.mxu0 0.0
        %2921 = vmatpush1.msra.mxu0 0.0
        %2922 = vmatprep.subr.mxu0 0.0
        %2923 = vmatpush1.msra.mxu0 0.0
        %2924 = vmatprep.subr.mxu0 0.0
        %2925 = vmatpush1.msra.mxu0 0.0
        %2926 = vmatprep.subr.mxu0 0.0
        %2927 = vmatpush1.msra.mxu0 0.0
        %2928 = vmatprep.subr.mxu0 0.0
        %2929 = vmatpush1.msra.mxu0 0.0
        %2930 = vmatprep.subr.mxu0 0.0
        %2931 = vmatpush1.msra.mxu0 0.0
        %2932 = vmatprep.subr.mxu0 0.0
        %2933 = vmatpush1.msra.mxu0 0.0
        %2934 = vmatprep.mubr.f32.mxu0 0.0
        %2935 = vmatmul.mubr.f32.gmra.mrb[0].mxu0 %v2868
        %v2936 = vpop.f32.mrb[0].mxu0
        %v2937 = vadd.f32 0.0, %v2936
        %v2938 = vpop.f32.mrb[0].mxu0
        %2939 = vdwg.mxu0
        %v2940 = vadd.f32 %v2853, %v2937
        %s2941 = scalar_lea.vmem %s7, 240
        %v2942 = vld [vmem:[%s2941] sm:$0xff]
        %v2943 = vld [vmem:[%s2941 + $0x8] sm:$0xff]
        %v2944 = vld [vmem:[%s2941 + $0x10] sm:$0xff]
        %v2945 = vld [vmem:[%s2941 + $0x18] sm:$0xff]
        %v2946 = vld [vmem:[%s2941 + $0x20] sm:$0xff]
        %v2947 = vld [vmem:[%s2941 + $0x28] sm:$0xff]
        %v2948 = vld [vmem:[%s2941 + $0x30] sm:$0xff]
        %v2949 = vld [vmem:[%s2941 + $0x38] sm:$0xff]
        %v2950 = vld [vmem:[%s2941 + $0x40] sm:$0xff]
        %v2951 = vld [vmem:[%s2941 + $0x48] sm:$0xff]
        %v2952 = vrot.slane %v2687, 3
        %v2953 = vsel %vm2711, %v2952, 0
        %2955 = vmatprep.subr.mxu0 0.0
        %2956 = vmatpush1.msra.mxu0 %v2942
        %2957 = vmatprep.subr.mxu0 0.0
        %2958 = vmatpush1.msra.mxu0 %v2943
        %2959 = vmatprep.subr.mxu0 0.0
        %2960 = vmatpush1.msra.mxu0 %v2944
        %2961 = vmatprep.subr.mxu0 0.0
        %2962 = vmatpush1.msra.mxu0 %v2945
        %2963 = vmatprep.subr.mxu0 0.0
        %2964 = vmatpush1.msra.mxu0 %v2946
        %2965 = vmatprep.subr.mxu0 0.0
        %2966 = vmatpush1.msra.mxu0 %v2947
        %2967 = vmatprep.subr.mxu0 0.0
        %2968 = vmatpush1.msra.mxu0 %v2948
        %2969 = vmatprep.subr.mxu0 0.0
        %2970 = vmatpush1.msra.mxu0 %v2949
        %2971 = vmatprep.subr.mxu0 0.0
        %2972 = vmatpush1.msra.mxu0 %v2950
        %2973 = vmatprep.subr.mxu0 0.0
        %2974 = vmatpush1.msra.mxu0 %v2951
        %2975 = vmatprep.subr.mxu0 0.0
        %2976 = vmatpush1.msra.mxu0 0.0
        %2977 = vmatprep.subr.mxu0 0.0
        %2978 = vmatpush1.msra.mxu0 0.0
        %2979 = vmatprep.subr.mxu0 0.0
        %2980 = vmatpush1.msra.mxu0 0.0
        %2981 = vmatprep.subr.mxu0 0.0
        %2982 = vmatpush1.msra.mxu0 0.0
        %2983 = vmatprep.subr.mxu0 0.0
        %2984 = vmatpush1.msra.mxu0 0.0
        %2985 = vmatprep.subr.mxu0 0.0
        %2986 = vmatpush1.msra.mxu0 0.0
        %2987 = vmatprep.subr.mxu0 0.0
        %2988 = vmatpush1.msra.mxu0 0.0
        %2989 = vmatprep.subr.mxu0 0.0
        %2990 = vmatpush1.msra.mxu0 0.0
        %2991 = vmatprep.subr.mxu0 0.0
        %2992 = vmatpush1.msra.mxu0 0.0
        %2993 = vmatprep.subr.mxu0 0.0
        %2994 = vmatpush1.msra.mxu0 0.0
        %2995 = vmatprep.subr.mxu0 0.0
        %2996 = vmatpush1.msra.mxu0 0.0
        %2997 = vmatprep.subr.mxu0 0.0
        %2998 = vmatpush1.msra.mxu0 0.0
        %2999 = vmatprep.subr.mxu0 0.0
        %3000 = vmatpush1.msra.mxu0 0.0
        %3001 = vmatprep.subr.mxu0 0.0
        %3002 = vmatpush1.msra.mxu0 0.0
        %3003 = vmatprep.subr.mxu0 0.0
        %3004 = vmatpush1.msra.mxu0 0.0
        %3005 = vmatprep.subr.mxu0 0.0
        %3006 = vmatpush1.msra.mxu0 0.0
        %3007 = vmatprep.subr.mxu0 0.0
        %3008 = vmatpush1.msra.mxu0 0.0
        %3009 = vmatprep.subr.mxu0 0.0
        %3010 = vmatpush1.msra.mxu0 0.0
        %3011 = vmatprep.subr.mxu0 0.0
        %3012 = vmatpush1.msra.mxu0 0.0
        %3013 = vmatprep.subr.mxu0 0.0
        %3014 = vmatpush1.msra.mxu0 0.0
        %3015 = vmatprep.subr.mxu0 0.0
        %3016 = vmatpush1.msra.mxu0 0.0
        %3017 = vmatprep.subr.mxu0 0.0
        %3018 = vmatpush1.msra.mxu0 0.0
        %3019 = vmatprep.mubr.f32.mxu0 0.0
        %3020 = vmatmul.mubr.f32.gmra.mrb[0].mxu0 %v2953
        %v3021 = vpop.f32.mrb[0].mxu0
        %v3022 = vadd.f32 0.0, %v3021
        %v3023 = vpop.f32.mrb[0].mxu0
        %3024 = vdwg.mxu0
        %v3025 = vadd.f32 %v2940, %v3022
        %s3026 = scalar_lea.vmem %s7, 320
        %v3027 = vld [vmem:[%s3026] sm:$0xff]
        %v3028 = vld [vmem:[%s3026 + $0x8] sm:$0xff]
        %v3029 = vld [vmem:[%s3026 + $0x10] sm:$0xff]
        %v3030 = vld [vmem:[%s3026 + $0x18] sm:$0xff]
        %v3031 = vld [vmem:[%s3026 + $0x20] sm:$0xff]
        %v3032 = vld [vmem:[%s3026 + $0x28] sm:$0xff]
        %v3033 = vld [vmem:[%s3026 + $0x30] sm:$0xff]
        %v3034 = vld [vmem:[%s3026 + $0x38] sm:$0xff]
        %v3035 = vld [vmem:[%s3026 + $0x40] sm:$0xff]
        %v3036 = vld [vmem:[%s3026 + $0x48] sm:$0xff]
        %v3037 = vrot.slane %v2687, 4
        %v3038 = vsel %vm2711, %v3037, 0
        %3040 = vmatprep.subr.mxu0 0.0
        %3041 = vmatpush1.msra.mxu0 %v3027
        %3042 = vmatprep.subr.mxu0 0.0
        %3043 = vmatpush1.msra.mxu0 %v3028
        %3044 = vmatprep.subr.mxu0 0.0
        %3045 = vmatpush1.msra.mxu0 %v3029
        %3046 = vmatprep.subr.mxu0 0.0
        %3047 = vmatpush1.msra.mxu0 %v3030
        %3048 = vmatprep.subr.mxu0 0.0
        %3049 = vmatpush1.msra.mxu0 %v3031
        %3050 = vmatprep.subr.mxu0 0.0
        %3051 = vmatpush1.msra.mxu0 %v3032
        %3052 = vmatprep.subr.mxu0 0.0
        %3053 = vmatpush1.msra.mxu0 %v3033
        %3054 = vmatprep.subr.mxu0 0.0
        %3055 = vmatpush1.msra.mxu0 %v3034
        %3056 = vmatprep.subr.mxu0 0.0
        %3057 = vmatpush1.msra.mxu0 %v3035
        %3058 = vmatprep.subr.mxu0 0.0
        %3059 = vmatpush1.msra.mxu0 %v3036
        %3060 = vmatprep.subr.mxu0 0.0
        %3061 = vmatpush1.msra.mxu0 0.0
        %3062 = vmatprep.subr.mxu0 0.0
        %3063 = vmatpush1.msra.mxu0 0.0
        %3064 = vmatprep.subr.mxu0 0.0
        %3065 = vmatpush1.msra.mxu0 0.0
        %3066 = vmatprep.subr.mxu0 0.0
        %3067 = vmatpush1.msra.mxu0 0.0
        %3068 = vmatprep.subr.mxu0 0.0
        %3069 = vmatpush1.msra.mxu0 0.0
        %3070 = vmatprep.subr.mxu0 0.0
        %3071 = vmatpush1.msra.mxu0 0.0
        %3072 = vmatprep.subr.mxu0 0.0
        %3073 = vmatpush1.msra.mxu0 0.0
        %3074 = vmatprep.subr.mxu0 0.0
        %3075 = vmatpush1.msra.mxu0 0.0
        %3076 = vmatprep.subr.mxu0 0.0
        %3077 = vmatpush1.msra.mxu0 0.0
        %3078 = vmatprep.subr.mxu0 0.0
        %3079 = vmatpush1.msra.mxu0 0.0
        %3080 = vmatprep.subr.mxu0 0.0
        %3081 = vmatpush1.msra.mxu0 0.0
        %3082 = vmatprep.subr.mxu0 0.0
        %3083 = vmatpush1.msra.mxu0 0.0
        %3084 = vmatprep.subr.mxu0 0.0
        %3085 = vmatpush1.msra.mxu0 0.0
        %3086 = vmatprep.subr.mxu0 0.0
        %3087 = vmatpush1.msra.mxu0 0.0
        %3088 = vmatprep.subr.mxu0 0.0
        %3089 = vmatpush1.msra.mxu0 0.0
        %3090 = vmatprep.subr.mxu0 0.0
        %3091 = vmatpush1.msra.mxu0 0.0
        %3092 = vmatprep.subr.mxu0 0.0
        %3093 = vmatpush1.msra.mxu0 0.0
        %3094 = vmatprep.subr.mxu0 0.0
        %3095 = vmatpush1.msra.mxu0 0.0
        %3096 = vmatprep.subr.mxu0 0.0
        %3097 = vmatpush1.msra.mxu0 0.0
        %3098 = vmatprep.subr.mxu0 0.0
        %3099 = vmatpush1.msra.mxu0 0.0
        %3100 = vmatprep.subr.mxu0 0.0
        %3101 = vmatpush1.msra.mxu0 0.0
        %3102 = vmatprep.subr.mxu0 0.0
        %3103 = vmatpush1.msra.mxu0 0.0
        %3104 = vmatprep.mubr.f32.mxu0 0.0
        %3105 = vmatmul.mubr.f32.gmra.mrb[0].mxu0 %v3038
        %v3106 = vpop.f32.mrb[0].mxu0
        %v3107 = vadd.f32 0.0, %v3106
        %v3108 = vpop.f32.mrb[0].mxu0
        %3109 = vdwg.mxu0
        %v3110 = vadd.f32 %v3025, %v3107
        %v3111 = vld [vmem:[%s8] sm:$0x1]
        %v3112 = vadd.f32 %v3110, %v3111
        %v3113 = vmax.f32 %v3112, 0.0
        %v3114 = vld [vmem:[%s9] sm:$0xff]
        %v3115 = vld [vmem:[%s9 + $0x8] sm:$0xff]
        %v3116 = vld [vmem:[%s9 + $0x10] sm:$0xff]
        %v3117 = vld [vmem:[%s9 + $0x18] sm:$0xff]
        %v3118 = vld [vmem:[%s9 + $0x20] sm:$0xff]
        %v3119 = vld [vmem:[%s9 + $0x28] sm:$0xff]
        %v3120 = vld [vmem:[%s9 + $0x30] sm:$0xff]
        %v3121 = vld [vmem:[%s9 + $0x38] sm:$0xff]
        %v3122 = vld [vmem:[%s9 + $0x40] sm:$0xff]
        %v3123 = vld [vmem:[%s9 + $0x48] sm:$0xff]
        %v3124 = vld [vmem:[%s9 + $0x50] sm:$0xff]
        %v3125 = vld [vmem:[%s9 + $0x58] sm:$0xff]
        %v3126 = vld [vmem:[%s9 + $0x60] sm:$0xff]
        %v3127 = vld [vmem:[%s9 + $0x68] sm:$0xff]
        %v3128 = vld [vmem:[%s9 + $0x70] sm:$0xff]
        %v3129 = vld [vmem:[%s9 + $0x78] sm:$0xff]
        %v3130 = vld [vmem:[%s10] sm:$0x1]
        %3131 = vmatprep.subr.mxu0 0.0
        %3132 = vmatpush1.msra.mxu0 %v3114
        %3133 = vmatprep.subr.mxu0 0.0
        %3134 = vmatpush1.msra.mxu0 %v3115
        %3135 = vmatprep.subr.mxu0 0.0
        %3136 = vmatpush1.msra.mxu0 %v3116
        %3137 = vmatprep.subr.mxu0 0.0
        %3138 = vmatpush1.msra.mxu0 %v3117
        %3139 = vmatprep.subr.mxu0 0.0
        %3140 = vmatpush1.msra.mxu0 %v3118
        %3141 = vmatprep.subr.mxu0 0.0
        %3142 = vmatpush1.msra.mxu0 %v3119
        %3143 = vmatprep.subr.mxu0 0.0
        %3144 = vmatpush1.msra.mxu0 %v3120
        %3145 = vmatprep.subr.mxu0 0.0
        %3146 = vmatpush1.msra.mxu0 %v3121
        %3147 = vmatprep.subr.mxu0 0.0
        %3148 = vmatpush1.msra.mxu0 %v3122
        %3149 = vmatprep.subr.mxu0 0.0
        %3150 = vmatpush1.msra.mxu0 %v3123
        %3151 = vmatprep.subr.mxu0 0.0
        %3152 = vmatpush1.msra.mxu0 %v3124
        %3153 = vmatprep.subr.mxu0 0.0
        %3154 = vmatpush1.msra.mxu0 %v3125
        %3155 = vmatprep.subr.mxu0 0.0
        %3156 = vmatpush1.msra.mxu0 %v3126
        %3157 = vmatprep.subr.mxu0 0.0
        %3158 = vmatpush1.msra.mxu0 %v3127
        %3159 = vmatprep.subr.mxu0 0.0
        %3160 = vmatpush1.msra.mxu0 %v3128
        %3161 = vmatprep.subr.mxu0 0.0
        %3162 = vmatpush1.msra.mxu0 %v3129
        %3163 = vmatprep.subr.mxu0 0.0
        %3164 = vmatpush1.msra.mxu0 0.0
        %3165 = vmatprep.subr.mxu0 0.0
        %3166 = vmatpush1.msra.mxu0 0.0
        %3167 = vmatprep.subr.mxu0 0.0
        %3168 = vmatpush1.msra.mxu0 0.0
        %3169 = vmatprep.subr.mxu0 0.0
        %3170 = vmatpush1.msra.mxu0 0.0
        %3171 = vmatprep.subr.mxu0 0.0
        %3172 = vmatpush1.msra.mxu0 0.0
        %3173 = vmatprep.subr.mxu0 0.0
        %3174 = vmatpush1.msra.mxu0 0.0
        %3175 = vmatprep.subr.mxu0 0.0
        %3176 = vmatpush1.msra.mxu0 0.0
        %3177 = vmatprep.subr.mxu0 0.0
        %3178 = vmatpush1.msra.mxu0 0.0
        %3179 = vmatprep.subr.mxu0 0.0
        %3180 = vmatpush1.msra.mxu0 0.0
        %3181 = vmatprep.subr.mxu0 0.0
        %3182 = vmatpush1.msra.mxu0 0.0
        %3183 = vmatprep.subr.mxu0 0.0
        %3184 = vmatpush1.msra.mxu0 0.0
        %3185 = vmatprep.subr.mxu0 0.0
        %3186 = vmatpush1.msra.mxu0 0.0
        %3187 = vmatprep.subr.mxu0 0.0
        %3188 = vmatpush1.msra.mxu0 0.0
        %3189 = vmatprep.subr.mxu0 0.0
        %3190 = vmatpush1.msra.mxu0 0.0
        %3191 = vmatprep.subr.mxu0 0.0
        %3192 = vmatpush1.msra.mxu0 0.0
        %3193 = vmatprep.subr.mxu0 0.0
        %3194 = vmatpush1.msra.mxu0 0.0
        %3195 = vmatprep.mubr.f32.mxu0 0.0
        %3196 = vmatmul.mubr.f32.gmra.mrb[0].mxu0 %v3113
        %v3197 = vpop.f32.mrb[0].mxu0
        %v3198 = vadd.f32 %v3130, %v3197
        %v3199 = vpop.f32.mrb[0].mxu0
        %3200 = vdwg.mxu0
        %3201 = vst [vmem:[%s378] sm:$0x1] %v3198
        %s3202 = sand.u32 %s269, 1
        %s3203 = scalar_lea.sflag [#allocation3], %s3202
        %s3204 = sand.u32 %s269, 1
        %s3205 = scalar_lea.vmem [#allocation2], %s3204
        // Predicated region
        $region65: #{lenet_forward.1} parent=63 // pred_check
          %p3206 = pneg %p279
        $region66: #{lenet_forward.1} parent=63 // pred_check_branch
          %3208 = sbr.rel (%p3206) target = $region68
        $region67: #{lenet_forward.1} parent=63 // pred_region
          %s3210 = ssub.s32 16, 16
          %3211 = vsyncadd %s3203, %s3210
          %s3212 = smul.addr %s25, 16
          %s3213 = scalar_lea.hbm %s11, %s3212
          %s3215 = sshll.u32 %s3205, 4
          %s3216 = int_to_ptr.vmem [resolvable:$true] %s3215
          %3218 = dma.vmem_to_hbm [thread:$0]  %s3216, 16, %s3213, %s3203
        $region68: #{lenet_forward.1} parent=63 // pred_fallthru
          _
      $region64: #{lenet_forward.1} parent=5 // pred_fallthru
        _
      %p3219 = scmp.le.s32.totalorder 2, %s20
      // Predicated region
      $region69: #{lenet_forward.1} parent=5 // pred_check
        %p3220 = pneg %p3219
      $region70: #{lenet_forward.1} parent=5 // pred_check_branch
        %3222 = sbr.rel (%p3220) target = $region72
      $region71: #{lenet_forward.1} parent=5 // pred_region
        %s3223 = ssub.s32 %s20, 2
        // Predicated region
        $region73: #{lenet_forward.1} parent=71 // pred_check
          %p3224 = pneg %p285
        $region74: #{lenet_forward.1} parent=71 // pred_check_branch
          %3226 = sbr.rel (%p3224) target = $region76
        $region75: #{lenet_forward.1} parent=71 // pred_region
          %s3227 = sand.u32 %s270, 1
          %s3228 = scalar_lea.sflag [#allocation3], %s3227
          %s3229 = sand.u32 %s270, 1
          %s3230 = scalar_lea.vmem [#allocation2], %s3229
          %3231 = dma.done %s3228, 16
        $region76: #{lenet_forward.1} parent=71 // pred_fallthru
          _
      $region72: #{lenet_forward.1} parent=5 // pred_fallthru
        _
    $region6: #{lenet_forward.1} parent=1 // loop_footer
      %s24 = sadd.s32 1, %s20
    $region7: #{lenet_forward.1} parent=1 // loop_footer_branch
      %19 = sbr.rel target = $region3
    $region8: #{lenet_forward.1} parent=1 // loop_exit
      _
    %3232 = vsyncpa [#allocation3], 1
    %s3233 = scalar_lea.sflag [#allocation3], 1
    %3234 = vsyncpa %s3233, 1

</llo_original>
